<compile_context>
chip_gen: v7x
topology: tpu7x:2x2x1
jax: 0.10.0
libtpu: 0.0.40
codegen_flags: <defaults>
</compile_context>

<pallas_src>
import functools

import jax
import jax.numpy as jnp
from jax.experimental import pallas as pl
from jax.experimental.pallas import tpu as pltpu


# ----------------------------------------------------------------------------- helpers
def _round_up(x, m):
    return ((x + m - 1) // m) * m


def _pad2(x, rows, cols):
    return jnp.pad(x, ((0, rows - x.shape[0]), (0, cols - x.shape[1])))


def _row_tile(n_pad, target=512):
    """Row tile: 512 when possible; always keep the row grid >= 2 (v7x has 2 TCs)."""
    if n_pad // target >= 2:
        return target
    return max(n_pad // 2, 128)          # n_pad is a multiple of 512, so this divides it


def _k_tile(n_pad, target=1024):
    """Reduction tile (lane axis of the A_hat block)."""
    return target if n_pad % target == 0 else 512


# Per-buffer cap so resident Y (x2 double buffers) + 2x A tiles + acc/out always stays
# well under the v5e 16 MiB default scoped-VMEM budget (no vmem_limit override needed).
_Y_RESIDENT_MAX_BYTES = 4 * 1024 * 1024


# ------------------------------------------------------------------- dense GEMM (X @ W)
def _matmul_kernel(x_ref, w_ref, o_ref):
    o_ref[...] = jnp.dot(
        x_ref[...], w_ref[...], preferred_element_type=jnp.float32
    ).astype(o_ref.dtype)


def dense_matmul(x, w, out_dtype=jnp.bfloat16):
    """(M, K) @ (K, N) with W fully VMEM-resident; grid over row tiles only."""
    m, k = x.shape
    _, n = w.shape
    tm = _row_tile(m)
    return pl.pallas_call(
        _matmul_kernel,
        out_shape=jax.ShapeDtypeStruct((m, n), out_dtype),
        grid_spec=pltpu.PrefetchScalarGridSpec(
            num_scalar_prefetch=0,
            grid=(m // tm,),
            in_specs=[
                pl.BlockSpec((tm, k), lambda i: (i, 0)),
                pl.BlockSpec((k, n), lambda i: (0, 0)),      # weights resident
            ],
            out_specs=pl.BlockSpec((tm, n), lambda i: (i, 0)),
        ),
        compiler_params=pltpu.CompilerParams(dimension_semantics=("parallel",)),
        cost_estimate=pl.CostEstimate(
            flops=2 * m * k * n,
            transcendentals=0,
            bytes_accessed=int(
                (m * k + k * n) * 2 + m * n * jnp.dtype(out_dtype).itemsize
            ),
        ),
    )(x, w)


# ----------------------------------------------- aggregation: A_hat @ Y + b (+ epilogue)
def _spmm_kernel(a_ref, y_ref, b_ref, o_ref, acc_ref, *, tk, y_resident, epilogue,
                 n_valid_cols):
    k = pl.program_id(1)

    @pl.when(k == 0)
    def _():
        acc_ref[...] = jnp.zeros_like(acc_ref)

    if y_resident:
        # Y lives in VMEM for the whole kernel; take the (tk, F) slice for this k-step.
        y = y_ref[pl.ds(pl.multiple_of(k * tk, tk), tk), :]
    else:
        y = y_ref[...]

    # bf16 x bf16 -> f32 accumulation on the MXU.
    acc_ref[...] += jnp.dot(a_ref[...], y, preferred_element_type=jnp.float32)

    @pl.when(k == pl.num_programs(1) - 1)
    def _():
        z = acc_ref[...] + b_ref[...]                      # bias add once per row tile
        if epilogue == "relu":
            z = jnp.maximum(z, 0.0)
        elif epilogue == "log_softmax":
            # mask padded class columns; exp(-inf) == 0 so one select suffices
            col = jax.lax.broadcasted_iota(jnp.int32, z.shape, 1)
            valid = col < n_valid_cols
            zm = jnp.where(valid, z, -jnp.inf)
            m = jnp.max(zm, axis=1, keepdims=True)
            lse = m + jnp.log(jnp.sum(jnp.exp(zm - m), axis=1, keepdims=True))
            z = jnp.where(valid, z - lse, 0.0)
        o_ref[...] = z.astype(o_ref.dtype)


def spmm_bias_act(a, y, b, *, epilogue, out_dtype, n_valid_cols=None):
    """Tiled A_hat @ Y + b with fused epilogue ('relu' | 'log_softmax' | 'none')."""
    n_pad = a.shape[0]
    f_pad = y.shape[1]
    tm = _row_tile(n_pad)           # row tile (parallel axis)
    tk = _k_tile(n_pad)             # reduction tile (arbitrary axis)
    grid = (n_pad // tm, n_pad // tk)

    y_bytes = n_pad * f_pad * y.dtype.itemsize
    y_resident = y_bytes <= _Y_RESIDENT_MAX_BYTES
    if y_resident:
        # Constant index map -> DMA'd once, reused across the whole grid.
        y_spec = pl.BlockSpec((n_pad, f_pad), lambda i, k: (0, 0))
        y_traffic = y_bytes
    else:
        y_spec = pl.BlockSpec((tk, f_pad), lambda i, k: (k, 0))
        y_traffic = grid[0] * y_bytes

    kernel = functools.partial(
        _spmm_kernel,
        tk=tk,
        y_resident=y_resident,
        epilogue=epilogue,
        n_valid_cols=f_pad if n_valid_cols is None else n_valid_cols,
    )
    bytes_accessed = int(
        n_pad * n_pad * 2                                   # A (bf16), read once
        + y_traffic
        + n_pad * f_pad * jnp.dtype(out_dtype).itemsize
    )
    return pl.pallas_call(
        kernel,
        out_shape=jax.ShapeDtypeStruct((n_pad, f_pad), out_dtype),
        grid_spec=pltpu.PrefetchScalarGridSpec(
            num_scalar_prefetch=0,
            grid=grid,
            in_specs=[
                pl.BlockSpec((tm, tk), lambda i, k: (i, k)),    # A_hat block (streams)
                y_spec,                                         # Y resident or streamed
                pl.BlockSpec((1, f_pad), lambda i, k: (0, 0)),  # bias (resident)
            ],
            out_specs=pl.BlockSpec((tm, f_pad), lambda i, k: (i, 0)),
            scratch_shapes=[pltpu.VMEM((tm, f_pad), jnp.float32)],
        ),
        compiler_params=pltpu.CompilerParams(
            dimension_semantics=("parallel", "arbitrary")
        ),
        cost_estimate=pl.CostEstimate(
            flops=2 * n_pad * n_pad * f_pad,
            transcendentals=n_pad * f_pad if epilogue == "log_softmax" else 0,
            bytes_accessed=bytes_accessed,
        ),
    )(a, y, b)


# -------------------------------------------------------------------- input preparation
def prepare_gcn_inputs(a_hat, x, w1, b1, w2, b2):
    """Pad + cast once (outside the jitted forward) so the O(N^2) A_hat convert is not
    re-paid on every forward call."""
    n, f = x.shape
    h = w1.shape[1]
    c = w2.shape[1]

    n_pad = _round_up(n, 512)       # pad UP to the tile size instead of shrinking tiles
    f_pad = _round_up(f, 128)
    h_pad = _round_up(h, 128)
    c_pad = _round_up(c, 128)

    a_p = _pad2(a_hat, n_pad, n_pad).astype(jnp.bfloat16)
    x_p = _pad2(x, n_pad, f_pad).astype(jnp.bfloat16)
    w1_p = _pad2(w1, f_pad, h_pad).astype(jnp.bfloat16)
    w2_p = _pad2(w2, h_pad, c_pad).astype(jnp.bfloat16)
    b1_p = jnp.pad(b1, (0, h_pad - h)).reshape(1, h_pad).astype(jnp.float32)
    b2_p = jnp.pad(b2, (0, c_pad - c)).reshape(1, c_pad).astype(jnp.float32)
    return a_p, x_p, w1_p, b1_p, w2_p, b2_p


# ----------------------------------------------------------------------------- forward
def gcn_forward(a_p, x_p, w1_p, b1_p, w2_p, b2_p, *, n, c):
    # ---- layer 1: relu(A_hat @ (X @ W1) + b1) ----
    xw = dense_matmul(x_p, w1_p)                                     # (N_pad, H_pad) bf16
    hid = spmm_bias_act(a_p, xw, b1_p, epilogue="relu", out_dtype=jnp.bfloat16)

    # TODO(synk): training-mode dropout (pltpu.prng_*) not implemented; eval-mode identity.

    # ---- layer 2: log_softmax(A_hat @ (H @ W2) + b2) ----
    hw = dense_matmul(hid, w2_p)                                     # (N_pad, C_pad) bf16
    logp = spmm_bias_act(
        a_p, hw, b2_p, epilogue="log_softmax", out_dtype=jnp.float32, n_valid_cols=c
    )
    return logp[:n, :c]


# ------------------------------------------------------------------------ plain-JAX glue
def normalized_adj(edge_index, num_nodes):
    """Dense GCN normalization: D^{-1/2} (A + I) D^{-1/2}."""
    src, dst = edge_index
    a = jnp.zeros((num_nodes, num_nodes), jnp.float32)
    a = a.at[src, dst].set(1.0)   # duplicate edges deduplicated (clean-graph assumption)
    a = a + jnp.eye(num_nodes, dtype=jnp.float32)       # add self loops
    deg = jnp.sum(a, axis=1)
    dinv = jnp.where(deg > 0, jax.lax.rsqrt(deg), 0.0)  # guard isolated nodes
    return a * dinv[:, None] * dinv[None, :]


def glorot(key, shape):
    """Glorot-uniform init matching PyG GCNConv.reset_parameters()."""
    limit = (6.0 / (shape[0] + shape[1])) ** 0.5
    return jax.random.uniform(key, shape, jnp.float32, -limit, limit)


if __name__ == "__main__":
    # small, deterministic problem: N nodes, F input features, H hidden, C classes
    N, F, H, C = 16, 8, 32, 4

    key = jax.random.PRNGKey(0)
    kx, kw1, kw2 = jax.random.split(key, 3)

    # node features (data.x)
    x = jax.random.normal(kx, (N, F), jnp.float32)

    # edge_index: undirected ring graph, shape (2, 2N)
    s = jnp.arange(N, dtype=jnp.int32)
    d = (s + 1) % N
    edge_index = jnp.stack([jnp.concatenate([s, d]), jnp.concatenate([d, s])], axis=0)
    a_hat = normalized_adj(edge_index, N)

    # deterministic parameters (conv1: F->H, conv2: H->C; biases zero like PyG)
    w1 = glorot(kw1, (F, H))
    b1 = jnp.zeros((H,), jnp.float32)
    w2 = glorot(kw2, (H, C))
    b2 = jnp.zeros((C,), jnp.float32)

    # pad + cast once (hoisted out of the forward), then jit the forward
    prepared = prepare_gcn_inputs(a_hat, x, w1, b1, w2, b2)
    fwd = jax.jit(functools.partial(gcn_forward, n=N, c=C))

    out = jax.block_until_ready(fwd(*prepared))
    assert out.shape == (N, C)
    assert bool(jnp.all(jnp.isfinite(out)))
    # rows of log_softmax should sum (in prob space) to ~1
    assert bool(jnp.all(jnp.abs(jnp.sum(jnp.exp(out), axis=1) - 1.0) < 1e-2))

    # pure-JAX f32 reference of the same forward (bf16 MXU operands -> loose tolerance)
    def ref_forward(a, xx, ww1, bb1, ww2, bb2):
        h1 = jnp.maximum(a @ (xx @ ww1) + bb1, 0.0)
        z = a @ (h1 @ ww2) + bb2
        return jax.nn.log_softmax(z, axis=1)

    ref = ref_forward(a_hat, x, w1, b1, w2, b2)
    err = float(jnp.max(jnp.abs(out - ref)))
    assert err < 1e-1, f"max abs error vs f32 reference too large: {err}"

    print("KERNEL_OK")
</pallas_src>

<mosaic_0001>
module attributes {stable_mosaic.version = 11 : i64} {
  func.func @_matmul_kernel(%arg0: i32, %arg1: memref<256x128xbf16, #tpu.memory_space<vmem>>, %arg2: memref<128x128xbf16, #tpu.memory_space<vmem>>, %arg3: memref<256x128xbf16, #tpu.memory_space<vmem>>) attributes {dimension_semantics = [#tpu.dimension_semantics<parallel>], iteration_bounds = array<i64: 2>, scalar_prefetch = 0 : i64, scratch_operands = 0 : i64, tpu.core_type = #tpu.core_type<tc>, window_params = [{transform_indices = @transform_0, window_bounds = array<i64: 256, 128>}, {pipeline_mode = #tpu.pipeline_mode<synchronous>, transform_indices = @transform_1, window_bounds = array<i64: 128, 128>}, {transform_indices = @transform_2, window_bounds = array<i64: 256, 128>}]} {
    %c0 = arith.constant 0 : index
    %c0_0 = arith.constant 0 : index
    %0 = vector.load %arg1[%c0, %c0_0] : memref<256x128xbf16, #tpu.memory_space<vmem>>, vector<256x128xbf16>
    %c0_1 = arith.constant 0 : index
    %c0_2 = arith.constant 0 : index
    %1 = vector.load %arg2[%c0_1, %c0_2] : memref<128x128xbf16, #tpu.memory_space<vmem>>, vector<128x128xbf16>
    %cst = arith.constant dense<0.000000e+00> : vector<256x128xf32>
    %2 = tpu.matmul %0, %1, %cst {dimension_numbers = #tpu.dot_dimension_numbers<[1], [0], [0], [1], [0, 0, 1, 1], [], []>} : vector<256x128xbf16>, vector<128x128xbf16>, vector<256x128xf32> -> vector<256x128xf32>
    %3 = arith.truncf %2 : vector<256x128xf32> to vector<256x128xbf16>
    %c0_3 = arith.constant 0 : index
    %c0_4 = arith.constant 0 : index
    %4 = vector.load %arg3[%c0_3, %c0_4] : memref<256x128xbf16, #tpu.memory_space<vmem>>, vector<256x128xbf16>
    tpu.vector_store %arg3[%c0_3, %c0_4], %3 {strides = array<i32>} : memref<256x128xbf16, #tpu.memory_space<vmem>>, vector<256x128xbf16>,
    return
  }
  func.func @transform_0(%arg0: i32) -> (i32, i32) {
    %c0_i32 = arith.constant 0 : i32
    %c0_i32_0 = arith.constant 0 : i32
    return %arg0, %c0_i32 : i32, i32
  }
  func.func @transform_1(%arg0: i32) -> (i32, i32) {
    %c0_i32 = arith.constant 0 : i32
    %c0_i32_0 = arith.constant 0 : i32
    %c0_i32_1 = arith.constant 0 : i32
    return %c0_i32, %c0_i32_0 : i32, i32
  }
  func.func @transform_2(%arg0: i32) -> (i32, i32) {
    %c0_i32 = arith.constant 0 : i32
    %c0_i32_0 = arith.constant 0 : i32
    return %arg0, %c0_i32 : i32, i32
  }
}

module attributes {stable_mosaic.version = 11 : i64} {
  func.func @_spmm_kernel(%arg0: i32, %arg1: i32, %arg2: memref<256x512xbf16, #tpu.memory_space<vmem>>, %arg3: memref<512x128xbf16, #tpu.memory_space<vmem>>, %arg4: memref<1x128xf32, #tpu.memory_space<vmem>>, %arg5: memref<256x128xf32, #tpu.memory_space<vmem>>, %arg6: memref<256x128xf32, #tpu.memory_space<vmem>>) attributes {dimension_semantics = [#tpu.dimension_semantics<parallel>, #tpu.dimension_semantics<arbitrary>], iteration_bounds = array<i64: 2, 1>, scalar_prefetch = 0 : i64, scratch_operands = 1 : i64, tpu.core_type = #tpu.core_type<tc>, window_params = [{transform_indices = @transform_0, window_bounds = array<i64: 256, 512>}, {pipeline_mode = #tpu.pipeline_mode<synchronous>, transform_indices = @transform_1, window_bounds = array<i64: 512, 128>}, {pipeline_mode = #tpu.pipeline_mode<synchronous>, transform_indices = @transform_2, window_bounds = array<i64: 1, 128>}, {transform_indices = @transform_3, window_bounds = array<i64: 256, 128>}]} {
    %c0_i32 = arith.constant 0 : i32
    %0 = arith.cmpi eq, %arg1, %c0_i32 : i32
    %1 = arith.extui %0 : i1 to i32
    %c0_i32_0 = arith.constant 0 : i32
    %2 = arith.cmpi ne, %1, %c0_i32_0 : i32
    scf.if %2 {
      %cst_9 = arith.constant 0.000000e+00 : f32
      %15 = vector.broadcast %cst_9 : f32 to vector<256x128xf32>
      %c0_10 = arith.constant 0 : index
      %c0_11 = arith.constant 0 : index
      %16 = vector.load %arg6[%c0_10, %c0_11] : memref<256x128xf32, #tpu.memory_space<vmem>>, vector<256x128xf32>
      tpu.vector_store %arg6[%c0_10, %c0_11], %15 {strides = array<i32>} : memref<256x128xf32, #tpu.memory_space<vmem>>, vector<256x128xf32>,
    } else {
    }
    %c512_i32 = arith.constant 512 : i32
    %3 = arith.muli %arg1, %c512_i32 : i32
    %4 = tpu.assume_multiple %3, 512 : i32
    %5 = arith.index_cast %4 : i32 to index
    %c0 = arith.constant 0 : index
    %6 = vector.load %arg3[%5, %c0] : memref<512x128xbf16, #tpu.memory_space<vmem>>, vector<512x128xbf16>
    %c0_1 = arith.constant 0 : index
    %c0_2 = arith.constant 0 : index
    %7 = vector.load %arg6[%c0_1, %c0_2] : memref<256x128xf32, #tpu.memory_space<vmem>>, vector<256x128xf32>
    %c0_3 = arith.constant 0 : index
    %c0_4 = arith.constant 0 : index
    %8 = vector.load %arg2[%c0_3, %c0_4] : memref<256x512xbf16, #tpu.memory_space<vmem>>, vector<256x512xbf16>
    %cst = arith.constant dense<0.000000e+00> : vector<256x128xf32>
    %9 = tpu.matmul %8, %6, %cst {dimension_numbers = #tpu.dot_dimension_numbers<[1], [0], [0], [1], [0, 0, 1, 1], [], []>} : vector<256x512xbf16>, vector<512x128xbf16>, vector<256x128xf32> -> vector<256x128xf32>
    %10 = arith.addf %7, %9 : vector<256x128xf32>
    %c0_5 = arith.constant 0 : index
    %c0_6 = arith.constant 0 : index
    %11 = vector.load %arg6[%c0_5, %c0_6] : memref<256x128xf32, #tpu.memory_space<vmem>>, vector<256x128xf32>
    tpu.vector_store %arg6[%c0_5, %c0_6], %10 {strides = array<i32>} : memref<256x128xf32, #tpu.memory_space<vmem>>, vector<256x128xf32>,
    %c0_i32_7 = arith.constant 0 : i32
    %12 = arith.cmpi eq, %arg1, %c0_i32_7 : i32
    %13 = arith.extui %12 : i1 to i32
    %c0_i32_8 = arith.constant 0 : i32
    %14 = arith.cmpi ne, %13, %c0_i32_8 : i32
    scf.if %14 {
      %c0_9 = arith.constant 0 : index
      %c0_10 = arith.constant 0 : index
      %15 = vector.load %arg6[%c0_9, %c0_10] : memref<256x128xf32, #tpu.memory_space<vmem>>, vector<256x128xf32>
      %c0_11 = arith.constant 0 : index
      %c0_12 = arith.constant 0 : index
      %16 = vector.load %arg4[%c0_11, %c0_12] : memref<1x128xf32, #tpu.memory_space<vmem>>, vector<1x128xf32>
      %17 = vector.broadcast %16 : vector<1x128xf32> to vector<256x128xf32>
      %18 = arith.addf %15, %17 : vector<256x128xf32>
      %19 = tpu.iota {dimensions = array<i32: 1>} : vector<256x128xi32>
      %c4_i32 = arith.constant 4 : i32
      %20 = vector.broadcast %c4_i32 : i32 to vector<256x128xi32>
      %21 = arith.cmpi slt, %19, %20 : vector<256x128xi32>
      %cst_13 = arith.constant 0xFF800000 : f32
      %22 = vector.broadcast %cst_13 : f32 to vector<256x128xf32>
      %23 = arith.select %21, %18, %22 : vector<256x128xi1>, vector<256x128xf32>
      %cst_14 = arith.constant dense<0xFF800000> : vector<256xf32>
      %24 = vector.multi_reduction <maximumf>, %23, %cst_14 [1] : vector<256x128xf32> to vector<256xf32>
      %25 = vector.shape_cast %24 : vector<256xf32> to vector<256x1xf32>
      %26 = vector.broadcast %25 : vector<256x1xf32> to vector<256x128xf32>
      %27 = arith.subf %23, %26 : vector<256x128xf32>
      %28 = math.exp %27 : vector<256x128xf32>
      %cst_15 = arith.constant dense<0.000000e+00> : vector<256xf32>
      %29 = vector.multi_reduction <add>, %28, %cst_15 [1] : vector<256x128xf32> to vector<256xf32>
      %30 = vector.shape_cast %29 : vector<256xf32> to vector<256x1xf32>
      %31 = math.log %30 : vector<256x1xf32>
      %32 = arith.addf %25, %31 : vector<256x1xf32>
      %33 = vector.broadcast %32 : vector<256x1xf32> to vector<256x128xf32>
      %34 = arith.subf %18, %33 : vector<256x128xf32>
      %cst_16 = arith.constant 0.000000e+00 : f32
      %35 = vector.broadcast %cst_16 : f32 to vector<256x128xf32>
      %36 = arith.select %21, %34, %35 : vector<256x128xi1>, vector<256x128xf32>
      %c0_17 = arith.constant 0 : index
      %c0_18 = arith.constant 0 : index
      %37 = vector.load %arg5[%c0_17, %c0_18] : memref<256x128xf32, #tpu.memory_space<vmem>>, vector<256x128xf32>
      tpu.vector_store %arg5[%c0_17, %c0_18], %36 {strides = array<i32>} : memref<256x128xf32, #tpu.memory_space<vmem>>, vector<256x128xf32>,
    } else {
    }
    return
  }
  func.func @transform_0(%arg0: i32, %arg1: i32) -> (i32, i32) {
    %c0_i32 = arith.constant 0 : i32
    return %arg0, %arg1 : i32, i32
  }
  func.func @transform_1(%arg0: i32, %arg1: i32) -> (i32, i32) {
    %c0_i32 = arith.constant 0 : i32
    %c0_i32_0 = arith.constant 0 : i32
    %c0_i32_1 = arith.constant 0 : i32
    return %c0_i32, %c0_i32_0 : i32, i32
  }
  func.func @transform_2(%arg0: i32, %arg1: i32) -> (i32, i32) {
    %c0_i32 = arith.constant 0 : i32
    %c0_i32_0 = arith.constant 0 : i32
    %c0_i32_1 = arith.constant 0 : i32
    return %c0_i32, %c0_i32_0 : i32, i32
  }
  func.func @transform_3(%arg0: i32, %arg1: i32) -> (i32, i32) {
    %c0_i32 = arith.constant 0 : i32
    %c0_i32_0 = arith.constant 0 : i32
    return %arg0, %c0_i32 : i32, i32
  }
}

module attributes {stable_mosaic.version = 11 : i64} {
  func.func @_matmul_kernel(%arg0: i32, %arg1: memref<256x128xbf16, #tpu.memory_space<vmem>>, %arg2: memref<128x128xbf16, #tpu.memory_space<vmem>>, %arg3: memref<256x128xbf16, #tpu.memory_space<vmem>>) attributes {dimension_semantics = [#tpu.dimension_semantics<parallel>], iteration_bounds = array<i64: 2>, scalar_prefetch = 0 : i64, scratch_operands = 0 : i64, tpu.core_type = #tpu.core_type<tc>, window_params = [{transform_indices = @transform_0, window_bounds = array<i64: 256, 128>}, {pipeline_mode = #tpu.pipeline_mode<synchronous>, transform_indices = @transform_1, window_bounds = array<i64: 128, 128>}, {transform_indices = @transform_2, window_bounds = array<i64: 256, 128>}]} {
    %c0 = arith.constant 0 : index
    %c0_0 = arith.constant 0 : index
    %0 = vector.load %arg1[%c0, %c0_0] : memref<256x128xbf16, #tpu.memory_space<vmem>>, vector<256x128xbf16>
    %c0_1 = arith.constant 0 : index
    %c0_2 = arith.constant 0 : index
    %1 = vector.load %arg2[%c0_1, %c0_2] : memref<128x128xbf16, #tpu.memory_space<vmem>>, vector<128x128xbf16>
    %cst = arith.constant dense<0.000000e+00> : vector<256x128xf32>
    %2 = tpu.matmul %0, %1, %cst {dimension_numbers = #tpu.dot_dimension_numbers<[1], [0], [0], [1], [0, 0, 1, 1], [], []>} : vector<256x128xbf16>, vector<128x128xbf16>, vector<256x128xf32> -> vector<256x128xf32>
    %3 = arith.truncf %2 : vector<256x128xf32> to vector<256x128xbf16>
    %c0_3 = arith.constant 0 : index
    %c0_4 = arith.constant 0 : index
    %4 = vector.load %arg3[%c0_3, %c0_4] : memref<256x128xbf16, #tpu.memory_space<vmem>>, vector<256x128xbf16>
    tpu.vector_store %arg3[%c0_3, %c0_4], %3 {strides = array<i32>} : memref<256x128xbf16, #tpu.memory_space<vmem>>, vector<256x128xbf16>,
    return
  }
  func.func @transform_0(%arg0: i32) -> (i32, i32) {
    %c0_i32 = arith.constant 0 : i32
    %c0_i32_0 = arith.constant 0 : i32
    return %arg0, %c0_i32 : i32, i32
  }
  func.func @transform_1(%arg0: i32) -> (i32, i32) {
    %c0_i32 = arith.constant 0 : i32
    %c0_i32_0 = arith.constant 0 : i32
    %c0_i32_1 = arith.constant 0 : i32
    return %c0_i32, %c0_i32_0 : i32, i32
  }
  func.func @transform_2(%arg0: i32) -> (i32, i32) {
    %c0_i32 = arith.constant 0 : i32
    %c0_i32_0 = arith.constant 0 : i32
    return %arg0, %c0_i32 : i32, i32
  }
}

module attributes {stable_mosaic.version = 11 : i64} {
  func.func @_spmm_kernel(%arg0: i32, %arg1: i32, %arg2: memref<256x512xbf16, #tpu.memory_space<vmem>>, %arg3: memref<512x128xbf16, #tpu.memory_space<vmem>>, %arg4: memref<1x128xf32, #tpu.memory_space<vmem>>, %arg5: memref<256x128xbf16, #tpu.memory_space<vmem>>, %arg6: memref<256x128xf32, #tpu.memory_space<vmem>>) attributes {dimension_semantics = [#tpu.dimension_semantics<parallel>, #tpu.dimension_semantics<arbitrary>], iteration_bounds = array<i64: 2, 1>, scalar_prefetch = 0 : i64, scratch_operands = 1 : i64, tpu.core_type = #tpu.core_type<tc>, window_params = [{transform_indices = @transform_0, window_bounds = array<i64: 256, 512>}, {pipeline_mode = #tpu.pipeline_mode<synchronous>, transform_indices = @transform_1, window_bounds = array<i64: 512, 128>}, {pipeline_mode = #tpu.pipeline_mode<synchronous>, transform_indices = @transform_2, window_bounds = array<i64: 1, 128>}, {transform_indices = @transform_3, window_bounds = array<i64: 256, 128>}]} {
    %c0_i32 = arith.constant 0 : i32
    %0 = arith.cmpi eq, %arg1, %c0_i32 : i32
    %1 = arith.extui %0 : i1 to i32
    %c0_i32_0 = arith.constant 0 : i32
    %2 = arith.cmpi ne, %1, %c0_i32_0 : i32
    scf.if %2 {
      %cst_9 = arith.constant 0.000000e+00 : f32
      %15 = vector.broadcast %cst_9 : f32 to vector<256x128xf32>
      %c0_10 = arith.constant 0 : index
      %c0_11 = arith.constant 0 : index
      %16 = vector.load %arg6[%c0_10, %c0_11] : memref<256x128xf32, #tpu.memory_space<vmem>>, vector<256x128xf32>
      tpu.vector_store %arg6[%c0_10, %c0_11], %15 {strides = array<i32>} : memref<256x128xf32, #tpu.memory_space<vmem>>, vector<256x128xf32>,
    } else {
    }
    %c512_i32 = arith.constant 512 : i32
    %3 = arith.muli %arg1, %c512_i32 : i32
    %4 = tpu.assume_multiple %3, 512 : i32
    %5 = arith.index_cast %4 : i32 to index
    %c0 = arith.constant 0 : index
    %6 = vector.load %arg3[%5, %c0] : memref<512x128xbf16, #tpu.memory_space<vmem>>, vector<512x128xbf16>
    %c0_1 = arith.constant 0 : index
    %c0_2 = arith.constant 0 : index
    %7 = vector.load %arg6[%c0_1, %c0_2] : memref<256x128xf32, #tpu.memory_space<vmem>>, vector<256x128xf32>
    %c0_3 = arith.constant 0 : index
    %c0_4 = arith.constant 0 : index
    %8 = vector.load %arg2[%c0_3, %c0_4] : memref<256x512xbf16, #tpu.memory_space<vmem>>, vector<256x512xbf16>
    %cst = arith.constant dense<0.000000e+00> : vector<256x128xf32>
    %9 = tpu.matmul %8, %6, %cst {dimension_numbers = #tpu.dot_dimension_numbers<[1], [0], [0], [1], [0, 0, 1, 1], [], []>} : vector<256x512xbf16>, vector<512x128xbf16>, vector<256x128xf32> -> vector<256x128xf32>
    %10 = arith.addf %7, %9 : vector<256x128xf32>
    %c0_5 = arith.constant 0 : index
    %c0_6 = arith.constant 0 : index
    %11 = vector.load %arg6[%c0_5, %c0_6] : memref<256x128xf32, #tpu.memory_space<vmem>>, vector<256x128xf32>
    tpu.vector_store %arg6[%c0_5, %c0_6], %10 {strides = array<i32>} : memref<256x128xf32, #tpu.memory_space<vmem>>, vector<256x128xf32>,
    %c0_i32_7 = arith.constant 0 : i32
    %12 = arith.cmpi eq, %arg1, %c0_i32_7 : i32
    %13 = arith.extui %12 : i1 to i32
    %c0_i32_8 = arith.constant 0 : i32
    %14 = arith.cmpi ne, %13, %c0_i32_8 : i32
    scf.if %14 {
      %c0_9 = arith.constant 0 : index
      %c0_10 = arith.constant 0 : index
      %15 = vector.load %arg6[%c0_9, %c0_10] : memref<256x128xf32, #tpu.memory_space<vmem>>, vector<256x128xf32>
      %c0_11 = arith.constant 0 : index
      %c0_12 = arith.constant 0 : index
      %16 = vector.load %arg4[%c0_11, %c0_12] : memref<1x128xf32, #tpu.memory_space<vmem>>, vector<1x128xf32>
      %17 = vector.broadcast %16 : vector<1x128xf32> to vector<256x128xf32>
      %18 = arith.addf %15, %17 : vector<256x128xf32>
      %cst_13 = arith.constant 0.000000e+00 : f32
      %19 = vector.broadcast %cst_13 : f32 to vector<256x128xf32>
      %20 = arith.maximumf %18, %19 : vector<256x128xf32>
      %21 = arith.truncf %20 : vector<256x128xf32> to vector<256x128xbf16>
      %c0_14 = arith.constant 0 : index
      %c0_15 = arith.constant 0 : index
      %22 = vector.load %arg5[%c0_14, %c0_15] : memref<256x128xbf16, #tpu.memory_space<vmem>>, vector<256x128xbf16>
      tpu.vector_store %arg5[%c0_14, %c0_15], %21 {strides = array<i32>} : memref<256x128xbf16, #tpu.memory_space<vmem>>, vector<256x128xbf16>,
    } else {
    }
    return
  }
  func.func @transform_0(%arg0: i32, %arg1: i32) -> (i32, i32) {
    %c0_i32 = arith.constant 0 : i32
    return %arg0, %arg1 : i32, i32
  }
  func.func @transform_1(%arg0: i32, %arg1: i32) -> (i32, i32) {
    %c0_i32 = arith.constant 0 : i32
    %c0_i32_0 = arith.constant 0 : i32
    %c0_i32_1 = arith.constant 0 : i32
    return %c0_i32, %c0_i32_0 : i32, i32
  }
  func.func @transform_2(%arg0: i32, %arg1: i32) -> (i32, i32) {
    %c0_i32 = arith.constant 0 : i32
    %c0_i32_0 = arith.constant 0 : i32
    %c0_i32_1 = arith.constant 0 : i32
    return %c0_i32, %c0_i32_0 : i32, i32
  }
  func.func @transform_3(%arg0: i32, %arg1: i32) -> (i32, i32) {
    %c0_i32 = arith.constant 0 : i32
    %c0_i32_0 = arith.constant 0 : i32
    return %arg0, %c0_i32 : i32, i32
  }
}

</mosaic_0001>

<llo_original>
// kernel: gcn_forward.6
$region0: #{gcn_forward.6}
  #allocation0 [shape = 'u32[]', space=smem, size = 0x4, offset = 0x4, fixed_abs, tag = 'smem constant byte address 0x4 - core index']
  #allocation1 [shape = 'u32[144,128]{1,0:T(1,128)}', space=vmem, size = 0x12000, scoped, tag = 'internal scratch']
  %s0 = inlined_call_operand.vmem [shape: bf16[512,128], index: 0, kind: input, shape index: {}]
  %s1 = inlined_call_operand.vmem [shape: bf16[128,128], index: 1, kind: input, shape index: {}]
  %s2 = inlined_call_operand.vmem [shape: bf16[512,128], index: 2, kind: output, shape index: {}]
  %s3 = sld [smem:[#allocation0]]
  $region41: #{gcn_forward.6} parent=0
    _
  %s5 = ssub.s32 1, %s3
  %s6 = scalar_select 0, %s5, %s3
  loop: start=0, step=1, limit=4
  $region2: #{gcn_forward.6} parent=0 // loop_pre_header
    _
  $region3: #{gcn_forward.6} parent=0 // loop_header
    %s8 = sphi 0, %s12
    %p9 = scmp.ge.s32.totalorder %s8, 4
    %s18 = sphi 0, %s20
    %s21 = sphi 0, %s18
    %s22 = sphi 0, %s21
    %s38 = sphi 0, %s22
    %s42 = sphi 0, %s42
    %s44 = sphi 0, %s42
    %s45 = sphi 0, %s44
    %s59 = sphi 0, %s45
    %s65 = sphi 0, %s67
    %s68 = sphi 0, %s65
    %s69 = sphi 0, %s68
    %s85 = sphi 0, %s69
  $region4: #{gcn_forward.6} parent=0 // loop_header_branch
    %11 = sbr.rel (%p9) target = $region8
  $region5: #{gcn_forward.6} parent=0 // loop_body
    %s13 = ssub.s32 %s8, 1
    %s14 = ssub.s32 %s8, 2
    %s15 = sadd.s32 %s8, 1
    %s16 = ssub.s32 %s8, %s15
    %p17 = scmp.eq.s32.totalorder %s16, 0
    %s19 = sadd.s32 %s18, 1
    %s20 = scalar_select %p17, %s18, %s19
    %p23 = pneg %p17
    %p24 = scmp.eq.s32.totalorder %s8, 1
    %p25 = por %p23, %p24
    %p26 = scmp.ne.s32.totalorder %s18, %s21
    %p27 = scmp.eq.s32.totalorder %s8, 0
    %p28 = por %p26, %p27
    %p29 = scmp.ne.s32.totalorder %s18, %s21
    %p30 = scmp.eq.s32.totalorder %s13, 1
    %p31 = por %p29, %p30
    %p32 = scmp.ne.s32.totalorder %s21, %s22
    %p33 = scmp.eq.s32.totalorder %s13, 0
    %p34 = por %p32, %p33
    %p35 = scmp.ne.s32.totalorder %s21, %s22
    %p36 = scmp.eq.s32.totalorder %s14, 1
    %p37 = por %p35, %p36
    %p39 = scmp.ne.s32.totalorder %s22, %s38
    %p40 = scmp.eq.s32.totalorder %s14, 0
    %p41 = por %p39, %p40
    %s43 = sadd.s32 %s42, 1
    %p46 = scmp.eq.s32.totalorder %s8, 1
    %p47 = scmp.ne.s32.totalorder %s42, %s44
    %p48 = scmp.eq.s32.totalorder %s8, 0
    %p49 = por %p47, %p48
    %p50 = scmp.ne.s32.totalorder %s42, %s44
    %p51 = scmp.eq.s32.totalorder %s13, 1
    %p52 = por %p50, %p51
    %p53 = scmp.ne.s32.totalorder %s44, %s45
    %p54 = scmp.eq.s32.totalorder %s13, 0
    %p55 = por %p53, %p54
    %p56 = scmp.ne.s32.totalorder %s44, %s45
    %p57 = scmp.eq.s32.totalorder %s14, 1
    %p58 = por %p56, %p57
    %p60 = scmp.ne.s32.totalorder %s45, %s59
    %p61 = scmp.eq.s32.totalorder %s14, 0
    %p62 = por %p60, %p61
    %s63 = ssub.s32 %s8, %s15
    %p64 = scmp.eq.s32.totalorder %s63, 0
    %s66 = sadd.s32 %s65, 1
    %s67 = scalar_select %p64, %s65, %s66
    %p70 = pneg %p64
    %p71 = scmp.eq.s32.totalorder %s8, 1
    %p72 = por %p70, %p71
    %p73 = scmp.ne.s32.totalorder %s65, %s68
    %p74 = scmp.eq.s32.totalorder %s8, 0
    %p75 = por %p73, %p74
    %p76 = scmp.ne.s32.totalorder %s65, %s68
    %p77 = scmp.eq.s32.totalorder %s13, 1
    %p78 = por %p76, %p77
    %p79 = scmp.ne.s32.totalorder %s68, %s69
    %p80 = scmp.eq.s32.totalorder %s13, 0
    %p81 = por %p79, %p80
    %p82 = scmp.ne.s32.totalorder %s68, %s69
    %p83 = scmp.eq.s32.totalorder %s14, 1
    %p84 = por %p82, %p83
    %p86 = scmp.ne.s32.totalorder %s69, %s85
    %p87 = scmp.eq.s32.totalorder %s14, 0
    %p88 = por %p86, %p87
    %p89 = scmp.le.s32.totalorder 1, %s8
    %p90 = scmp.lt.s32.totalorder %s8, 3
    %p91 = pnand %p89, %p90
    %p92 = pneg %p91
    // Predicated region
    $region9: #{gcn_forward.6} parent=5 // pred_check
      _
    $region10: #{gcn_forward.6} parent=5 // pred_check_branch
      %94 = sbr.rel (%p91) target = $region12
    $region11: #{gcn_forward.6} parent=5 // pred_region
      %s95 = ssub.s32 %s8, 1
      // Predicated region
      $region13: #{gcn_forward.6} parent=11 // pred_check
        %p96 = pneg %p55
      $region14: #{gcn_forward.6} parent=11 // pred_check_branch
        %98 = sbr.rel (%p96) target = $region16
      $region15: #{gcn_forward.6} parent=11 // pred_region
        _
      $region16: #{gcn_forward.6} parent=11 // pred_fallthru
        _
    $region12: #{gcn_forward.6} parent=5 // pred_fallthru
      _
    %p99 = scmp.lt.s32.totalorder %s8, 2
    // Predicated region
    $region17: #{gcn_forward.6} parent=5 // pred_check
      %p100 = pneg %p99
    $region18: #{gcn_forward.6} parent=5 // pred_check_branch
      %102 = sbr.rel (%p100) target = $region20
    $region19: #{gcn_forward.6} parent=5 // pred_region
      // Predicated region
      $region21: #{gcn_forward.6} parent=19 // pred_check
        %p103 = pneg %p28
      $region22: #{gcn_forward.6} parent=19 // pred_check_branch
        %105 = sbr.rel (%p103) target = $region24
      $region23: #{gcn_forward.6} parent=19 // pred_region
        %s106 = smul.u32 32, %s8
        %p107 = scmp.lt.s32.totalorder %s106, 63
        %s108 = scalar_select %p107, %s106, 63
        %s109 = smul.addr %s108, 4
        %s110 = scalar_lea.vmem %s0, %s109
        %s111 = smul.u32 32, %s8
      $region24: #{gcn_forward.6} parent=19 // pred_fallthru
        _
    $region20: #{gcn_forward.6} parent=5 // pred_fallthru
      _
    %p112 = scmp.le.s32.totalorder 1, %s8
    %p113 = scmp.lt.s32.totalorder %s8, 3
    %p114 = pnand %p112, %p113
    %p115 = pneg %p114
    // Predicated region
    $region25: #{gcn_forward.6} parent=5 // pred_check
      _
    $region26: #{gcn_forward.6} parent=5 // pred_check_branch
      %117 = sbr.rel (%p114) target = $region28
    $region27: #{gcn_forward.6} parent=5 // pred_region
      %s118 = ssub.s32 %s8, 1
      %s119 = smul.u32 32, %s13
      %p120 = scmp.lt.s32.totalorder %s119, 63
      %s121 = scalar_select %p120, %s119, 63
      %s122 = smul.addr %s121, 4
      %s123 = scalar_lea.vmem %s0, %s122
      %p124 = pneg %p34
      %p125 = pneg %p31
      %p126 = pneg %p55
      %p127 = pneg %p52
      %p128 = pneg %p81
      %p129 = pneg %p78
      %s130 = smul.u32 32, %s13
      %p131 = scmp.lt.s32.totalorder %s130, 63
      %s132 = scalar_select %p131, %s130, 63
      %s133 = smul.addr %s132, 4
      %s134 = scalar_lea.vmem %s2, %s133
      %s135 = smul.u32 32, %s13
      %p136 = scmp.lt.s32.totalorder %s135, 63
      %s137 = scalar_select %p136, %s135, 63
      %s138 = smul.addr %s137, 4
      %s139 = scalar_lea.vmem %s0, %s138
      %s140 = smul.u32 32, %s13
      %s141 = smul.u32 32, %s13
      %p142 = scmp.lt.s32.totalorder %s141, 63
      %s143 = scalar_select %p142, %s141, 63
      %s144 = smul.addr %s143, 4
      %s145 = scalar_lea.vmem %s2, %s144
      %s146 = smul.u32 32, %s13
      %v148 = vld [vmem:[%s139] sm:$0xf]
      %v149 = vld [vmem:[%s139 + $0x4] sm:$0xf]
      %v150 = vld [vmem:[%s139 + $0x8] sm:$0xf]
      %v151 = vld [vmem:[%s139 + $0xc] sm:$0xf]
      %v152 = vld [vmem:[%s139 + $0x10] sm:$0xf]
      %v153 = vld [vmem:[%s139 + $0x14] sm:$0xf]
      %v154 = vld [vmem:[%s139 + $0x18] sm:$0xf]
      %v155 = vld [vmem:[%s139 + $0x1c] sm:$0xf]
      %v156 = vld [vmem:[%s139 + $0x20] sm:$0xf]
      %v157 = vld [vmem:[%s139 + $0x24] sm:$0xf]
      %v158 = vld [vmem:[%s139 + $0x28] sm:$0xf]
      %v159 = vld [vmem:[%s139 + $0x2c] sm:$0xf]
      %v160 = vld [vmem:[%s139 + $0x30] sm:$0xf]
      %v161 = vld [vmem:[%s139 + $0x34] sm:$0xf]
      %v162 = vld [vmem:[%s139 + $0x38] sm:$0xf]
      %v163 = vld [vmem:[%s139 + $0x3c] sm:$0xf]
      %v164 = vld [vmem:[%s139 + $0x40] sm:$0xf]
      %v165 = vld [vmem:[%s139 + $0x44] sm:$0xf]
      %v166 = vld [vmem:[%s139 + $0x48] sm:$0xf]
      %v167 = vld [vmem:[%s139 + $0x4c] sm:$0xf]
      %v168 = vld [vmem:[%s139 + $0x50] sm:$0xf]
      %v169 = vld [vmem:[%s139 + $0x54] sm:$0xf]
      %v170 = vld [vmem:[%s139 + $0x58] sm:$0xf]
      %v171 = vld [vmem:[%s139 + $0x5c] sm:$0xf]
      %v172 = vld [vmem:[%s139 + $0x60] sm:$0xf]
      %v173 = vld [vmem:[%s139 + $0x64] sm:$0xf]
      %v174 = vld [vmem:[%s139 + $0x68] sm:$0xf]
      %v175 = vld [vmem:[%s139 + $0x6c] sm:$0xf]
      %v176 = vld [vmem:[%s139 + $0x70] sm:$0xf]
      %v177 = vld [vmem:[%s139 + $0x74] sm:$0xf]
      %v178 = vld [vmem:[%s139 + $0x78] sm:$0xf]
      %v179 = vld [vmem:[%s139 + $0x7c] sm:$0xf]
      %v180 = vld [vmem:[%s1] sm:$0xf]
      %v181 = vld [vmem:[%s1 + $0x4] sm:$0xf]
      %v182 = vld [vmem:[%s1 + $0x8] sm:$0xf]
      %v183 = vld [vmem:[%s1 + $0xc] sm:$0xf]
      %v184 = vld [vmem:[%s1 + $0x10] sm:$0xf]
      %v185 = vld [vmem:[%s1 + $0x14] sm:$0xf]
      %v186 = vld [vmem:[%s1 + $0x18] sm:$0xf]
      %v187 = vld [vmem:[%s1 + $0x1c] sm:$0xf]
      %v188 = vld [vmem:[%s1 + $0x20] sm:$0xf]
      %v189 = vld [vmem:[%s1 + $0x24] sm:$0xf]
      %v190 = vld [vmem:[%s1 + $0x28] sm:$0xf]
      %v191 = vld [vmem:[%s1 + $0x2c] sm:$0xf]
      %v192 = vld [vmem:[%s1 + $0x30] sm:$0xf]
      %v193 = vld [vmem:[%s1 + $0x34] sm:$0xf]
      %v194 = vld [vmem:[%s1 + $0x38] sm:$0xf]
      %v195 = vld [vmem:[%s1 + $0x3c] sm:$0xf]
      %v228 = vunpack.c.l.b16 %v148
      %v229 = vunpack.c.l.b16 %v149
      %v230 = vunpack.c.l.b16 %v150
      %v231 = vunpack.c.l.b16 %v151
      %v232 = vunpack.c.l.b16 %v152
      %v233 = vunpack.c.l.b16 %v153
      %v234 = vunpack.c.l.b16 %v154
      %v235 = vunpack.c.l.b16 %v155
      %v236 = vunpack.c.l.b16 %v156
      %v237 = vunpack.c.l.b16 %v157
      %v238 = vunpack.c.l.b16 %v158
      %v239 = vunpack.c.l.b16 %v159
      %v240 = vunpack.c.l.b16 %v160
      %v241 = vunpack.c.l.b16 %v161
      %v242 = vunpack.c.l.b16 %v162
      %v243 = vunpack.c.l.b16 %v163
      %v244 = vunpack.c.l.b16 %v164
      %v245 = vunpack.c.l.b16 %v165
      %v246 = vunpack.c.l.b16 %v166
      %v247 = vunpack.c.l.b16 %v167
      %v248 = vunpack.c.l.b16 %v168
      %v249 = vunpack.c.l.b16 %v169
      %v250 = vunpack.c.l.b16 %v170
      %v251 = vunpack.c.l.b16 %v171
      %v252 = vunpack.c.l.b16 %v172
      %v253 = vunpack.c.l.b16 %v173
      %v254 = vunpack.c.l.b16 %v174
      %v255 = vunpack.c.l.b16 %v175
      %v256 = vunpack.c.l.b16 %v176
      %v257 = vunpack.c.l.b16 %v177
      %v258 = vunpack.c.l.b16 %v178
      %v259 = vunpack.c.l.b16 %v179
      %v260 = vpack.c.b16 %v229, %v228
      %v261 = vpack.c.b16 %v231, %v230
      %v262 = vpack.c.b16 %v233, %v232
      %v263 = vpack.c.b16 %v235, %v234
      %v264 = vpack.c.b16 %v237, %v236
      %v265 = vpack.c.b16 %v239, %v238
      %v266 = vpack.c.b16 %v241, %v240
      %v267 = vpack.c.b16 %v243, %v242
      %v268 = vpack.c.b16 %v245, %v244
      %v269 = vpack.c.b16 %v247, %v246
      %v270 = vpack.c.b16 %v249, %v248
      %v271 = vpack.c.b16 %v251, %v250
      %v272 = vpack.c.b16 %v253, %v252
      %v273 = vpack.c.b16 %v255, %v254
      %v274 = vpack.c.b16 %v257, %v256
      %v275 = vpack.c.b16 %v259, %v258
      %v308 = vunpack.c.l.b16 %v180
      %v309 = vunpack.c.l.b16 %v181
      %v310 = vunpack.c.l.b16 %v182
      %v311 = vunpack.c.l.b16 %v183
      %v312 = vunpack.c.l.b16 %v184
      %v313 = vunpack.c.l.b16 %v185
      %v314 = vunpack.c.l.b16 %v186
      %v315 = vunpack.c.l.b16 %v187
      %v316 = vunpack.c.l.b16 %v188
      %v317 = vunpack.c.l.b16 %v189
      %v318 = vunpack.c.l.b16 %v190
      %v319 = vunpack.c.l.b16 %v191
      %v320 = vunpack.c.l.b16 %v192
      %v321 = vunpack.c.l.b16 %v193
      %v322 = vunpack.c.l.b16 %v194
      %v323 = vunpack.c.l.b16 %v195
      %v324 = vpack.c.b16 %v309, %v308
      %v325 = vpack.c.b16 %v311, %v310
      %v326 = vpack.c.b16 %v313, %v312
      %v327 = vpack.c.b16 %v315, %v314
      %v328 = vpack.c.b16 %v317, %v316
      %v329 = vpack.c.b16 %v319, %v318
      %v330 = vpack.c.b16 %v321, %v320
      %v331 = vpack.c.b16 %v323, %v322
      %340 = vmatprep.subr.bf16.mxu0 0
      %341 = vmatpush1.bf16.msra.mxu0 %v324
      %342 = vmatprep.subr.bf16.mxu0 0
      %343 = vmatpush1.bf16.msra.mxu0 %v325
      %344 = vmatprep.subr.bf16.mxu0 0
      %345 = vmatpush1.bf16.msra.mxu0 %v326
      %346 = vmatprep.subr.bf16.mxu0 0
      %347 = vmatpush1.bf16.msra.mxu0 %v327
      %348 = vmatprep.subr.bf16.mxu0 0
      %349 = vmatpush1.bf16.msra.mxu0 %v328
      %350 = vmatprep.subr.bf16.mxu0 0
      %351 = vmatpush1.bf16.msra.mxu0 %v329
      %352 = vmatprep.subr.bf16.mxu0 0
      %353 = vmatpush1.bf16.msra.mxu0 %v330
      %354 = vmatprep.subr.bf16.mxu0 0
      %355 = vmatpush1.bf16.msra.mxu0 %v331
      %356 = vmatprep.subr.bf16.mxu0 0
      %357 = vmatpush1.bf16.msra.mxu0 0
      %358 = vmatprep.subr.bf16.mxu0 0
      %359 = vmatpush1.bf16.msra.mxu0 0
      %360 = vmatprep.subr.bf16.mxu0 0
      %361 = vmatpush1.bf16.msra.mxu0 0
      %362 = vmatprep.subr.bf16.mxu0 0
      %363 = vmatpush1.bf16.msra.mxu0 0
      %364 = vmatprep.subr.bf16.mxu0 0
      %365 = vmatpush1.bf16.msra.mxu0 0
      %366 = vmatprep.subr.bf16.mxu0 0
      %367 = vmatpush1.bf16.msra.mxu0 0
      %368 = vmatprep.subr.bf16.mxu0 0
      %369 = vmatpush1.bf16.msra.mxu0 0
      %370 = vmatprep.subr.bf16.mxu0 0
      %371 = vmatpush1.bf16.msra.mxu0 0
      %372 = vmatprep.mubr.bf16.mxu0 0
      %373 = vmatmul.mubr.bf16.gmra.mrb[0].mxu0 %v260
      %v374 = vpop.f32.mrb[0].mxu0
      %v375 = vadd.f32 0.0, %v374
      %v376 = vpop.f32.mrb[0].mxu0
      %v377 = vpop.f32.mrb[0].mxu0
      %v378 = vadd.f32 0.0, %v377
      %v379 = vpop.f32.mrb[0].mxu0
      %380 = vmatprep.mubr.bf16.mxu0 0
      %381 = vmatmul.mubr.bf16.gmra.mrb[0].mxu0 %v261
      %v382 = vpop.f32.mrb[0].mxu0
      %v383 = vadd.f32 0.0, %v382
      %v384 = vpop.f32.mrb[0].mxu0
      %v385 = vpop.f32.mrb[0].mxu0
      %v386 = vadd.f32 0.0, %v385
      %v387 = vpop.f32.mrb[0].mxu0
      %388 = vmatprep.mubr.bf16.mxu0 0
      %389 = vmatmul.mubr.bf16.gmra.mrb[0].mxu0 %v262
      %v390 = vpop.f32.mrb[0].mxu0
      %v391 = vadd.f32 0.0, %v390
      %v392 = vpop.f32.mrb[0].mxu0
      %v393 = vpop.f32.mrb[0].mxu0
      %v394 = vadd.f32 0.0, %v393
      %v395 = vpop.f32.mrb[0].mxu0
      %396 = vmatprep.mubr.bf16.mxu0 0
      %397 = vmatmul.mubr.bf16.gmra.mrb[0].mxu0 %v263
      %v398 = vpop.f32.mrb[0].mxu0
      %v399 = vadd.f32 0.0, %v398
      %v400 = vpop.f32.mrb[0].mxu0
      %v401 = vpop.f32.mrb[0].mxu0
      %v402 = vadd.f32 0.0, %v401
      %v403 = vpop.f32.mrb[0].mxu0
      %404 = vmatprep.mubr.bf16.mxu0 0
      %405 = vmatmul.mubr.bf16.gmra.mrb[0].mxu0 %v264
      %v406 = vpop.f32.mrb[0].mxu0
      %v407 = vadd.f32 0.0, %v406
      %v408 = vpop.f32.mrb[0].mxu0
      %v409 = vpop.f32.mrb[0].mxu0
      %v410 = vadd.f32 0.0, %v409
      %v411 = vpop.f32.mrb[0].mxu0
      %412 = vmatprep.mubr.bf16.mxu0 0
      %413 = vmatmul.mubr.bf16.gmra.mrb[0].mxu0 %v265
      %v414 = vpop.f32.mrb[0].mxu0
      %v415 = vadd.f32 0.0, %v414
      %v416 = vpop.f32.mrb[0].mxu0
      %v417 = vpop.f32.mrb[0].mxu0
      %v418 = vadd.f32 0.0, %v417
      %v419 = vpop.f32.mrb[0].mxu0
      %420 = vmatprep.mubr.bf16.mxu0 0
      %421 = vmatmul.mubr.bf16.gmra.mrb[0].mxu0 %v266
      %v422 = vpop.f32.mrb[0].mxu0
      %v423 = vadd.f32 0.0, %v422
      %v424 = vpop.f32.mrb[0].mxu0
      %v425 = vpop.f32.mrb[0].mxu0
      %v426 = vadd.f32 0.0, %v425
      %v427 = vpop.f32.mrb[0].mxu0
      %428 = vmatprep.mubr.bf16.mxu0 0
      %429 = vmatmul.mubr.bf16.gmra.mrb[0].mxu0 %v267
      %v430 = vpop.f32.mrb[0].mxu0
      %v431 = vadd.f32 0.0, %v430
      %v432 = vpop.f32.mrb[0].mxu0
      %v433 = vpop.f32.mrb[0].mxu0
      %v434 = vadd.f32 0.0, %v433
      %v435 = vpop.f32.mrb[0].mxu0
      %436 = vmatprep.mubr.bf16.mxu0 0
      %437 = vmatmul.mubr.bf16.gmra.mrb[0].mxu0 %v268
      %v438 = vpop.f32.mrb[0].mxu0
      %v439 = vadd.f32 0.0, %v438
      %v440 = vpop.f32.mrb[0].mxu0
      %v441 = vpop.f32.mrb[0].mxu0
      %v442 = vadd.f32 0.0, %v441
      %v443 = vpop.f32.mrb[0].mxu0
      %444 = vmatprep.mubr.bf16.mxu0 0
      %445 = vmatmul.mubr.bf16.gmra.mrb[0].mxu0 %v269
      %v446 = vpop.f32.mrb[0].mxu0
      %v447 = vadd.f32 0.0, %v446
      %v448 = vpop.f32.mrb[0].mxu0
      %v449 = vpop.f32.mrb[0].mxu0
      %v450 = vadd.f32 0.0, %v449
      %v451 = vpop.f32.mrb[0].mxu0
      %452 = vmatprep.mubr.bf16.mxu0 0
      %453 = vmatmul.mubr.bf16.gmra.mrb[0].mxu0 %v270
      %v454 = vpop.f32.mrb[0].mxu0
      %v455 = vadd.f32 0.0, %v454
      %v456 = vpop.f32.mrb[0].mxu0
      %v457 = vpop.f32.mrb[0].mxu0
      %v458 = vadd.f32 0.0, %v457
      %v459 = vpop.f32.mrb[0].mxu0
      %460 = vmatprep.mubr.bf16.mxu0 0
      %461 = vmatmul.mubr.bf16.gmra.mrb[0].mxu0 %v271
      %v462 = vpop.f32.mrb[0].mxu0
      %v463 = vadd.f32 0.0, %v462
      %v464 = vpop.f32.mrb[0].mxu0
      %v465 = vpop.f32.mrb[0].mxu0
      %v466 = vadd.f32 0.0, %v465
      %v467 = vpop.f32.mrb[0].mxu0
      %468 = vmatprep.mubr.bf16.mxu0 0
      %469 = vmatmul.mubr.bf16.gmra.mrb[0].mxu0 %v272
      %v470 = vpop.f32.mrb[0].mxu0
      %v471 = vadd.f32 0.0, %v470
      %v472 = vpop.f32.mrb[0].mxu0
      %v473 = vpop.f32.mrb[0].mxu0
      %v474 = vadd.f32 0.0, %v473
      %v475 = vpop.f32.mrb[0].mxu0
      %476 = vmatprep.mubr.bf16.mxu0 0
      %477 = vmatmul.mubr.bf16.gmra.mrb[0].mxu0 %v273
      %v478 = vpop.f32.mrb[0].mxu0
      %v479 = vadd.f32 0.0, %v478
      %v480 = vpop.f32.mrb[0].mxu0
      %v481 = vpop.f32.mrb[0].mxu0
      %v482 = vadd.f32 0.0, %v481
      %v483 = vpop.f32.mrb[0].mxu0
      %484 = vmatprep.mubr.bf16.mxu0 0
      %485 = vmatmul.mubr.bf16.gmra.mrb[0].mxu0 %v274
      %v486 = vpop.f32.mrb[0].mxu0
      %v487 = vadd.f32 0.0, %v486
      %v488 = vpop.f32.mrb[0].mxu0
      %v489 = vpop.f32.mrb[0].mxu0
      %v490 = vadd.f32 0.0, %v489
      %v491 = vpop.f32.mrb[0].mxu0
      %492 = vmatprep.mubr.bf16.mxu0 0
      %493 = vmatmul.mubr.bf16.gmra.mrb[0].mxu0 %v275
      %v494 = vpop.f32.mrb[0].mxu0
      %v495 = vadd.f32 0.0, %v494
      %v496 = vpop.f32.mrb[0].mxu0
      %v497 = vpop.f32.mrb[0].mxu0
      %v498 = vadd.f32 0.0, %v497
      %v499 = vpop.f32.mrb[0].mxu0
      %500 = vdwg.mxu0
      %v501 = vpack.c.bf16 %v378, %v375
      %v502 = vpack.c.bf16 %v386, %v383
      %v503 = vpack.c.bf16 %v394, %v391
      %v504 = vpack.c.bf16 %v402, %v399
      %v505 = vpack.c.bf16 %v410, %v407
      %v506 = vpack.c.bf16 %v418, %v415
      %v507 = vpack.c.bf16 %v426, %v423
      %v508 = vpack.c.bf16 %v434, %v431
      %v509 = vpack.c.bf16 %v442, %v439
      %v510 = vpack.c.bf16 %v450, %v447
      %v511 = vpack.c.bf16 %v458, %v455
      %v512 = vpack.c.bf16 %v466, %v463
      %v513 = vpack.c.bf16 %v474, %v471
      %v514 = vpack.c.bf16 %v482, %v479
      %v515 = vpack.c.bf16 %v490, %v487
      %v516 = vpack.c.bf16 %v498, %v495
      %v533 = vunpack.c.l.b16 %v501
      %v534 = vunpack.c.h.b16 %v501
      %v535 = vunpack.c.l.b16 %v502
      %v536 = vunpack.c.h.b16 %v502
      %v537 = vunpack.c.l.b16 %v503
      %v538 = vunpack.c.h.b16 %v503
      %v539 = vunpack.c.l.b16 %v504
      %v540 = vunpack.c.h.b16 %v504
      %v541 = vunpack.c.l.b16 %v505
      %v542 = vunpack.c.h.b16 %v505
      %v543 = vunpack.c.l.b16 %v506
      %v544 = vunpack.c.h.b16 %v506
      %v545 = vunpack.c.l.b16 %v507
      %v546 = vunpack.c.h.b16 %v507
      %v547 = vunpack.c.l.b16 %v508
      %v548 = vunpack.c.h.b16 %v508
      %v549 = vunpack.c.l.b16 %v509
      %v550 = vunpack.c.h.b16 %v509
      %v551 = vunpack.c.l.b16 %v510
      %v552 = vunpack.c.h.b16 %v510
      %v553 = vunpack.c.l.b16 %v511
      %v554 = vunpack.c.h.b16 %v511
      %v555 = vunpack.c.l.b16 %v512
      %v556 = vunpack.c.h.b16 %v512
      %v557 = vunpack.c.l.b16 %v513
      %v558 = vunpack.c.h.b16 %v513
      %v559 = vunpack.c.l.b16 %v514
      %v560 = vunpack.c.h.b16 %v514
      %v561 = vunpack.c.l.b16 %v515
      %v562 = vunpack.c.h.b16 %v515
      %v563 = vunpack.c.l.b16 %v516
      %v564 = vunpack.c.h.b16 %v516
      %v565 = vpack.c.b16 %v533, %v533
      %v566 = vpack.c.b16 %v534, %v534
      %v567 = vpack.c.b16 %v535, %v535
      %v568 = vpack.c.b16 %v536, %v536
      %v569 = vpack.c.b16 %v537, %v537
      %v570 = vpack.c.b16 %v538, %v538
      %v571 = vpack.c.b16 %v539, %v539
      %v572 = vpack.c.b16 %v540, %v540
      %v573 = vpack.c.b16 %v541, %v541
      %v574 = vpack.c.b16 %v542, %v542
      %v575 = vpack.c.b16 %v543, %v543
      %v576 = vpack.c.b16 %v544, %v544
      %v577 = vpack.c.b16 %v545, %v545
      %v578 = vpack.c.b16 %v546, %v546
      %v579 = vpack.c.b16 %v547, %v547
      %v580 = vpack.c.b16 %v548, %v548
      %v581 = vpack.c.b16 %v549, %v549
      %v582 = vpack.c.b16 %v550, %v550
      %v583 = vpack.c.b16 %v551, %v551
      %v584 = vpack.c.b16 %v552, %v552
      %v585 = vpack.c.b16 %v553, %v553
      %v586 = vpack.c.b16 %v554, %v554
      %v587 = vpack.c.b16 %v555, %v555
      %v588 = vpack.c.b16 %v556, %v556
      %v589 = vpack.c.b16 %v557, %v557
      %v590 = vpack.c.b16 %v558, %v558
      %v591 = vpack.c.b16 %v559, %v559
      %v592 = vpack.c.b16 %v560, %v560
      %v593 = vpack.c.b16 %v561, %v561
      %v594 = vpack.c.b16 %v562, %v562
      %v595 = vpack.c.b16 %v563, %v563
      %v596 = vpack.c.b16 %v564, %v564
      %629 = vst [vmem:[%s145] sm:$0xf] %v565
      %630 = vst [vmem:[%s145 + $0x4] sm:$0xf] %v566
      %631 = vst [vmem:[%s145 + $0x8] sm:$0xf] %v567
      %632 = vst [vmem:[%s145 + $0xc] sm:$0xf] %v568
      %633 = vst [vmem:[%s145 + $0x10] sm:$0xf] %v569
      %634 = vst [vmem:[%s145 + $0x14] sm:$0xf] %v570
      %635 = vst [vmem:[%s145 + $0x18] sm:$0xf] %v571
      %636 = vst [vmem:[%s145 + $0x1c] sm:$0xf] %v572
      %637 = vst [vmem:[%s145 + $0x20] sm:$0xf] %v573
      %638 = vst [vmem:[%s145 + $0x24] sm:$0xf] %v574
      %639 = vst [vmem:[%s145 + $0x28] sm:$0xf] %v575
      %640 = vst [vmem:[%s145 + $0x2c] sm:$0xf] %v576
      %641 = vst [vmem:[%s145 + $0x30] sm:$0xf] %v577
      %642 = vst [vmem:[%s145 + $0x34] sm:$0xf] %v578
      %643 = vst [vmem:[%s145 + $0x38] sm:$0xf] %v579
      %644 = vst [vmem:[%s145 + $0x3c] sm:$0xf] %v580
      %645 = vst [vmem:[%s145 + $0x40] sm:$0xf] %v581
      %646 = vst [vmem:[%s145 + $0x44] sm:$0xf] %v582
      %647 = vst [vmem:[%s145 + $0x48] sm:$0xf] %v583
      %648 = vst [vmem:[%s145 + $0x4c] sm:$0xf] %v584
      %649 = vst [vmem:[%s145 + $0x50] sm:$0xf] %v585
      %650 = vst [vmem:[%s145 + $0x54] sm:$0xf] %v586
      %651 = vst [vmem:[%s145 + $0x58] sm:$0xf] %v587
      %652 = vst [vmem:[%s145 + $0x5c] sm:$0xf] %v588
      %653 = vst [vmem:[%s145 + $0x60] sm:$0xf] %v589
      %654 = vst [vmem:[%s145 + $0x64] sm:$0xf] %v590
      %655 = vst [vmem:[%s145 + $0x68] sm:$0xf] %v591
      %656 = vst [vmem:[%s145 + $0x6c] sm:$0xf] %v592
      %657 = vst [vmem:[%s145 + $0x70] sm:$0xf] %v593
      %658 = vst [vmem:[%s145 + $0x74] sm:$0xf] %v594
      %659 = vst [vmem:[%s145 + $0x78] sm:$0xf] %v595
      %660 = vst [vmem:[%s145 + $0x7c] sm:$0xf] %v596
      %s661 = smul.u32 32, %s13
      %p662 = scmp.lt.s32.totalorder %s661, 63
      %s663 = scalar_select %p662, %s661, 63
      %s664 = smul.addr %s663, 4
      %s665 = scalar_lea.vmem %s2, %s664
      // Predicated region
      $region29: #{gcn_forward.6} parent=27 // pred_check
        %p666 = pneg %p78
      $region30: #{gcn_forward.6} parent=27 // pred_check_branch
        %668 = sbr.rel (%p666) target = $region32
      $region31: #{gcn_forward.6} parent=27 // pred_region
        %s669 = smul.u32 32, %s13
      $region32: #{gcn_forward.6} parent=27 // pred_fallthru
        _
    $region28: #{gcn_forward.6} parent=5 // pred_fallthru
      _
    %p670 = scmp.le.s32.totalorder 2, %s8
    // Predicated region
    $region33: #{gcn_forward.6} parent=5 // pred_check
      %p671 = pneg %p670
    $region34: #{gcn_forward.6} parent=5 // pred_check_branch
      %673 = sbr.rel (%p671) target = $region36
    $region35: #{gcn_forward.6} parent=5 // pred_region
      %s674 = ssub.s32 %s8, 2
      // Predicated region
      $region37: #{gcn_forward.6} parent=35 // pred_check
        %p675 = pneg %p84
      $region38: #{gcn_forward.6} parent=35 // pred_check_branch
        %677 = sbr.rel (%p675) target = $region40
      $region39: #{gcn_forward.6} parent=35 // pred_region
        %s678 = smul.u32 32, %s14
        %p679 = scmp.lt.s32.totalorder %s678, 63
        %s680 = scalar_select %p679, %s678, 63
        %s681 = smul.addr %s680, 4
        %s682 = scalar_lea.vmem %s2, %s681
      $region40: #{gcn_forward.6} parent=35 // pred_fallthru
        _
    $region36: #{gcn_forward.6} parent=5 // pred_fallthru
      _
  $region6: #{gcn_forward.6} parent=0 // loop_footer
    %s12 = sadd.s32 1, %s8
  $region7: #{gcn_forward.6} parent=0 // loop_footer_branch
    %7 = sbr.rel target = $region3
  $region8: #{gcn_forward.6} parent=0 // loop_exit
    _

// kernel: gcn_forward.4
$region0: #{gcn_forward.4}
  #allocation0 [shape = 'u32[]', space=smem, size = 0x4, offset = 0x4, fixed_abs, tag = 'smem constant byte address 0x4 - core index']
  #allocation1 [shape = 'u32[144,128]{1,0:T(1,128)}', space=vmem, size = 0x12000, scoped, tag = 'internal scratch']
  %s0 = inlined_call_operand.hbm [shape: bf16[512,128], index: 0, kind: input, shape index: {}]
  %s1 = inlined_call_operand.hbm [shape: bf16[128,128], index: 1, kind: input, shape index: {}]
  %s2 = inlined_call_operand.vmem [shape: bf16[512,128], index: 2, kind: output, shape index: {}]
  %s3 = sld [smem:[#allocation0]]
  $region49: #{gcn_forward.4} parent=0
    _
  %s5 = ssub.s32 1, %s3
  %s6 = scalar_select 0, %s5, %s3
  $region1: #{gcn_forward.4} parent=0
    #allocation2 [shape = 'u8[131072]{0}', space=vmem, size = 0x20000, scoped, tag = 'input window, operand 0']
    #allocation3 [shape = 's32[2]{0}', space=sflag, size = 0x8, scoped, tag = 'scoped memory for gcn_forward.4']
    #allocation4 [shape = 'u8[32768]{0}', space=vmem, size = 0x8000, scoped, tag = 'input window, operand 1, single buffered']
    #allocation5 [shape = 's32[1]{0}', space=sflag, size = 0x4, scoped, tag = 'scoped memory for gcn_forward.4']
    %7 = vsyncpa [#allocation3], 0
    %s8 = scalar_lea.sflag [#allocation3], 1
    %9 = vsyncpa %s8, 0
    %10 = vsyncpa [#allocation5], 0
    loop: start=0, step=1, limit=4
    $region2: #{gcn_forward.4} parent=1 // loop_pre_header
      _
    $region3: #{gcn_forward.4} parent=1 // loop_header
      %s12 = sphi 0, %s16
      %p13 = scmp.ge.s32.totalorder %s12, 4
      %s22 = sphi 0, %s24
      %s25 = sphi 0, %s22
      %s26 = sphi 0, %s25
      %s42 = sphi 0, %s26
      %s46 = sphi 0, %s46
      %s48 = sphi 0, %s46
      %s49 = sphi 0, %s48
      %s63 = sphi 0, %s49
      %s69 = sphi 0, %s71
      %s72 = sphi 0, %s69
      %s73 = sphi 0, %s72
      %s89 = sphi 0, %s73
    $region4: #{gcn_forward.4} parent=1 // loop_header_branch
      %15 = sbr.rel (%p13) target = $region8
    $region5: #{gcn_forward.4} parent=1 // loop_body
      %s17 = ssub.s32 %s12, 1
      %s18 = ssub.s32 %s12, 2
      %s19 = sadd.s32 %s12, 1
      %s20 = ssub.s32 %s12, %s19
      %p21 = scmp.eq.s32.totalorder %s20, 0
      %s23 = sadd.s32 %s22, 1
      %s24 = scalar_select %p21, %s22, %s23
      %p27 = pneg %p21
      %p28 = scmp.eq.s32.totalorder %s12, 1
      %p29 = por %p27, %p28
      %p30 = scmp.ne.s32.totalorder %s22, %s25
      %p31 = scmp.eq.s32.totalorder %s12, 0
      %p32 = por %p30, %p31
      %p33 = scmp.ne.s32.totalorder %s22, %s25
      %p34 = scmp.eq.s32.totalorder %s17, 1
      %p35 = por %p33, %p34
      %p36 = scmp.ne.s32.totalorder %s25, %s26
      %p37 = scmp.eq.s32.totalorder %s17, 0
      %p38 = por %p36, %p37
      %p39 = scmp.ne.s32.totalorder %s25, %s26
      %p40 = scmp.eq.s32.totalorder %s18, 1
      %p41 = por %p39, %p40
      %p43 = scmp.ne.s32.totalorder %s26, %s42
      %p44 = scmp.eq.s32.totalorder %s18, 0
      %p45 = por %p43, %p44
      %s47 = sadd.s32 %s46, 1
      %p50 = scmp.eq.s32.totalorder %s12, 1
      %p51 = scmp.ne.s32.totalorder %s46, %s48
      %p52 = scmp.eq.s32.totalorder %s12, 0
      %p53 = por %p51, %p52
      %p54 = scmp.ne.s32.totalorder %s46, %s48
      %p55 = scmp.eq.s32.totalorder %s17, 1
      %p56 = por %p54, %p55
      %p57 = scmp.ne.s32.totalorder %s48, %s49
      %p58 = scmp.eq.s32.totalorder %s17, 0
      %p59 = por %p57, %p58
      %p60 = scmp.ne.s32.totalorder %s48, %s49
      %p61 = scmp.eq.s32.totalorder %s18, 1
      %p62 = por %p60, %p61
      %p64 = scmp.ne.s32.totalorder %s49, %s63
      %p65 = scmp.eq.s32.totalorder %s18, 0
      %p66 = por %p64, %p65
      %s67 = ssub.s32 %s12, %s19
      %p68 = scmp.eq.s32.totalorder %s67, 0
      %s70 = sadd.s32 %s69, 1
      %s71 = scalar_select %p68, %s69, %s70
      %p74 = pneg %p68
      %p75 = scmp.eq.s32.totalorder %s12, 1
      %p76 = por %p74, %p75
      %p77 = scmp.ne.s32.totalorder %s69, %s72
      %p78 = scmp.eq.s32.totalorder %s12, 0
      %p79 = por %p77, %p78
      %p80 = scmp.ne.s32.totalorder %s69, %s72
      %p81 = scmp.eq.s32.totalorder %s17, 1
      %p82 = por %p80, %p81
      %p83 = scmp.ne.s32.totalorder %s72, %s73
      %p84 = scmp.eq.s32.totalorder %s17, 0
      %p85 = por %p83, %p84
      %p86 = scmp.ne.s32.totalorder %s72, %s73
      %p87 = scmp.eq.s32.totalorder %s18, 1
      %p88 = por %p86, %p87
      %p90 = scmp.ne.s32.totalorder %s73, %s89
      %p91 = scmp.eq.s32.totalorder %s18, 0
      %p92 = por %p90, %p91
      %p93 = scmp.le.s32.totalorder 1, %s12
      %p94 = scmp.lt.s32.totalorder %s12, 3
      %p95 = pnand %p93, %p94
      %p96 = pneg %p95
      // Predicated region
      $region9: #{gcn_forward.4} parent=5 // pred_check
        _
      $region10: #{gcn_forward.4} parent=5 // pred_check_branch
        %98 = sbr.rel (%p95) target = $region12
      $region11: #{gcn_forward.4} parent=5 // pred_region
        %s99 = ssub.s32 %s12, 1
        // Predicated region
        $region13: #{gcn_forward.4} parent=11 // pred_check
          %p100 = pneg %p59
        $region14: #{gcn_forward.4} parent=11 // pred_check_branch
          %102 = sbr.rel (%p100) target = $region16
        $region15: #{gcn_forward.4} parent=11 // pred_region
          %s104 = ssub.s32 1024, 1024
          %105 = vsyncadd [#allocation5], %s104
          %s106 = sshll.u32 [#allocation4], 4
          %s107 = int_to_ptr.vmem [resolvable:$true] %s106
          %112 = dma.hbm_to_vmem [thread:$0]  %s1, 1024, %s107, [#allocation5], 64, 64, 4
        $region16: #{gcn_forward.4} parent=11 // pred_fallthru
          _
      $region12: #{gcn_forward.4} parent=5 // pred_fallthru
        _
      %p113 = scmp.lt.s32.totalorder %s12, 2
      // Predicated region
      $region17: #{gcn_forward.4} parent=5 // pred_check
        %p114 = pneg %p113
      $region18: #{gcn_forward.4} parent=5 // pred_check_branch
        %116 = sbr.rel (%p114) target = $region20
      $region19: #{gcn_forward.4} parent=5 // pred_region
        // Predicated region
        $region21: #{gcn_forward.4} parent=19 // pred_check
          %p117 = pneg %p32
        $region22: #{gcn_forward.4} parent=19 // pred_check_branch
          %119 = sbr.rel (%p117) target = $region24
        $region23: #{gcn_forward.4} parent=19 // pred_region
          %s120 = sand.u32 %s22, 1
          %s121 = scalar_lea.sflag [#allocation3], %s120
          %s122 = sand.u32 %s22, 1
          %s123 = smul.addr %s122, 128
          %s124 = scalar_lea.vmem [#allocation2], %s123
          %s125 = smul.u32 32, %s12
          %s127 = ssub.s32 2048, 2048
          %128 = vsyncadd %s121, %s127
          %s129 = smul.addr %s125, 64
          %s130 = scalar_lea.hbm %s0, %s129
          %s131 = sshll.u32 %s124, 4
          %s132 = int_to_ptr.vmem [resolvable:$true] %s131
          %137 = dma.hbm_to_vmem [thread:$0]  %s130, 2048, %s132, %s121, 64, 64, 4
        $region24: #{gcn_forward.4} parent=19 // pred_fallthru
          _
      $region20: #{gcn_forward.4} parent=5 // pred_fallthru
        _
      %p138 = scmp.le.s32.totalorder 1, %s12
      %p139 = scmp.lt.s32.totalorder %s12, 3
      %p140 = pnand %p138, %p139
      %p141 = pneg %p140
      // Predicated region
      $region25: #{gcn_forward.4} parent=5 // pred_check
        _
      $region26: #{gcn_forward.4} parent=5 // pred_check_branch
        %143 = sbr.rel (%p140) target = $region28
      $region27: #{gcn_forward.4} parent=5 // pred_region
        %s144 = ssub.s32 %s12, 1
        %s145 = sand.u32 %s25, 1
        %s146 = scalar_lea.sflag [#allocation3], %s145
        %s147 = sand.u32 %s25, 1
        %s148 = smul.addr %s147, 128
        %s149 = scalar_lea.vmem [#allocation2], %s148
        // Predicated region
        $region29: #{gcn_forward.4} parent=27 // pred_check
          %p150 = pneg %p38
        $region30: #{gcn_forward.4} parent=27 // pred_check_branch
          %152 = sbr.rel (%p150) target = $region32
        $region31: #{gcn_forward.4} parent=27 // pred_region
          %153 = dma.done %s146, 2048
        $region32: #{gcn_forward.4} parent=27 // pred_fallthru
          _
        // Predicated region
        $region33: #{gcn_forward.4} parent=27 // pred_check
          %p154 = pneg %p59
        $region34: #{gcn_forward.4} parent=27 // pred_check_branch
          %156 = sbr.rel (%p154) target = $region36
        $region35: #{gcn_forward.4} parent=27 // pred_region
          %157 = dma.done [#allocation5], 1024
        $region36: #{gcn_forward.4} parent=27 // pred_fallthru
          _
        %s158 = sand.u32 %s25, 1
        %s159 = scalar_lea.sflag [#allocation3], %s158
        %s160 = sand.u32 %s25, 1
        %s161 = smul.addr %s160, 128
        %s162 = scalar_lea.vmem [#allocation2], %s161
        %p163 = pneg %p38
        %p164 = pneg %p35
        %p165 = pneg %p59
        %p166 = pneg %p56
        %p167 = pneg %p85
        %p168 = pneg %p82
        %s169 = smul.u32 32, %s17
        %p170 = scmp.lt.s32.totalorder %s169, 63
        %s171 = scalar_select %p170, %s169, 63
        %s172 = smul.addr %s171, 4
        %s173 = scalar_lea.vmem %s2, %s172
        %s174 = smul.u32 32, %s17
        %s175 = smul.u32 32, %s17
        %p176 = scmp.lt.s32.totalorder %s175, 63
        %s177 = scalar_select %p176, %s175, 63
        %s178 = smul.addr %s177, 4
        %s179 = scalar_lea.vmem %s2, %s178
        %s180 = smul.u32 32, %s17
        %v182 = vld [vmem:[%s149] sm:$0xf]
        %v183 = vld [vmem:[%s149 + $0x4] sm:$0xf]
        %v184 = vld [vmem:[%s149 + $0x8] sm:$0xf]
        %v185 = vld [vmem:[%s149 + $0xc] sm:$0xf]
        %v186 = vld [vmem:[%s149 + $0x10] sm:$0xf]
        %v187 = vld [vmem:[%s149 + $0x14] sm:$0xf]
        %v188 = vld [vmem:[%s149 + $0x18] sm:$0xf]
        %v189 = vld [vmem:[%s149 + $0x1c] sm:$0xf]
        %v190 = vld [vmem:[%s149 + $0x20] sm:$0xf]
        %v191 = vld [vmem:[%s149 + $0x24] sm:$0xf]
        %v192 = vld [vmem:[%s149 + $0x28] sm:$0xf]
        %v193 = vld [vmem:[%s149 + $0x2c] sm:$0xf]
        %v194 = vld [vmem:[%s149 + $0x30] sm:$0xf]
        %v195 = vld [vmem:[%s149 + $0x34] sm:$0xf]
        %v196 = vld [vmem:[%s149 + $0x38] sm:$0xf]
        %v197 = vld [vmem:[%s149 + $0x3c] sm:$0xf]
        %v198 = vld [vmem:[%s149 + $0x40] sm:$0xf]
        %v199 = vld [vmem:[%s149 + $0x44] sm:$0xf]
        %v200 = vld [vmem:[%s149 + $0x48] sm:$0xf]
        %v201 = vld [vmem:[%s149 + $0x4c] sm:$0xf]
        %v202 = vld [vmem:[%s149 + $0x50] sm:$0xf]
        %v203 = vld [vmem:[%s149 + $0x54] sm:$0xf]
        %v204 = vld [vmem:[%s149 + $0x58] sm:$0xf]
        %v205 = vld [vmem:[%s149 + $0x5c] sm:$0xf]
        %v206 = vld [vmem:[%s149 + $0x60] sm:$0xf]
        %v207 = vld [vmem:[%s149 + $0x64] sm:$0xf]
        %v208 = vld [vmem:[%s149 + $0x68] sm:$0xf]
        %v209 = vld [vmem:[%s149 + $0x6c] sm:$0xf]
        %v210 = vld [vmem:[%s149 + $0x70] sm:$0xf]
        %v211 = vld [vmem:[%s149 + $0x74] sm:$0xf]
        %v212 = vld [vmem:[%s149 + $0x78] sm:$0xf]
        %v213 = vld [vmem:[%s149 + $0x7c] sm:$0xf]
        %v214 = vld [vmem:[#allocation4] sm:$0xf]
        %v215 = vld [vmem:[#allocation4 + $0x4] sm:$0xf]
        %v216 = vld [vmem:[#allocation4 + $0x8] sm:$0xf]
        %v217 = vld [vmem:[#allocation4 + $0xc] sm:$0xf]
        %v218 = vld [vmem:[#allocation4 + $0x10] sm:$0xf]
        %v219 = vld [vmem:[#allocation4 + $0x14] sm:$0xf]
        %v220 = vld [vmem:[#allocation4 + $0x18] sm:$0xf]
        %v221 = vld [vmem:[#allocation4 + $0x1c] sm:$0xf]
        %v222 = vld [vmem:[#allocation4 + $0x20] sm:$0xf]
        %v223 = vld [vmem:[#allocation4 + $0x24] sm:$0xf]
        %v224 = vld [vmem:[#allocation4 + $0x28] sm:$0xf]
        %v225 = vld [vmem:[#allocation4 + $0x2c] sm:$0xf]
        %v226 = vld [vmem:[#allocation4 + $0x30] sm:$0xf]
        %v227 = vld [vmem:[#allocation4 + $0x34] sm:$0xf]
        %v228 = vld [vmem:[#allocation4 + $0x38] sm:$0xf]
        %v229 = vld [vmem:[#allocation4 + $0x3c] sm:$0xf]
        %v262 = vunpack.c.l.b16 %v182
        %v263 = vunpack.c.l.b16 %v183
        %v264 = vunpack.c.l.b16 %v184
        %v265 = vunpack.c.l.b16 %v185
        %v266 = vunpack.c.l.b16 %v186
        %v267 = vunpack.c.l.b16 %v187
        %v268 = vunpack.c.l.b16 %v188
        %v269 = vunpack.c.l.b16 %v189
        %v270 = vunpack.c.l.b16 %v190
        %v271 = vunpack.c.l.b16 %v191
        %v272 = vunpack.c.l.b16 %v192
        %v273 = vunpack.c.l.b16 %v193
        %v274 = vunpack.c.l.b16 %v194
        %v275 = vunpack.c.l.b16 %v195
        %v276 = vunpack.c.l.b16 %v196
        %v277 = vunpack.c.l.b16 %v197
        %v278 = vunpack.c.l.b16 %v198
        %v279 = vunpack.c.l.b16 %v199
        %v280 = vunpack.c.l.b16 %v200
        %v281 = vunpack.c.l.b16 %v201
        %v282 = vunpack.c.l.b16 %v202
        %v283 = vunpack.c.l.b16 %v203
        %v284 = vunpack.c.l.b16 %v204
        %v285 = vunpack.c.l.b16 %v205
        %v286 = vunpack.c.l.b16 %v206
        %v287 = vunpack.c.l.b16 %v207
        %v288 = vunpack.c.l.b16 %v208
        %v289 = vunpack.c.l.b16 %v209
        %v290 = vunpack.c.l.b16 %v210
        %v291 = vunpack.c.l.b16 %v211
        %v292 = vunpack.c.l.b16 %v212
        %v293 = vunpack.c.l.b16 %v213
        %v294 = vpack.c.b16 %v263, %v262
        %v295 = vpack.c.b16 %v265, %v264
        %v296 = vpack.c.b16 %v267, %v266
        %v297 = vpack.c.b16 %v269, %v268
        %v298 = vpack.c.b16 %v271, %v270
        %v299 = vpack.c.b16 %v273, %v272
        %v300 = vpack.c.b16 %v275, %v274
        %v301 = vpack.c.b16 %v277, %v276
        %v302 = vpack.c.b16 %v279, %v278
        %v303 = vpack.c.b16 %v281, %v280
        %v304 = vpack.c.b16 %v283, %v282
        %v305 = vpack.c.b16 %v285, %v284
        %v306 = vpack.c.b16 %v287, %v286
        %v307 = vpack.c.b16 %v289, %v288
        %v308 = vpack.c.b16 %v291, %v290
        %v309 = vpack.c.b16 %v293, %v292
        %v342 = vunpack.c.l.b16 %v214
        %v343 = vunpack.c.l.b16 %v215
        %v344 = vunpack.c.l.b16 %v216
        %v345 = vunpack.c.l.b16 %v217
        %v346 = vunpack.c.l.b16 %v218
        %v347 = vunpack.c.l.b16 %v219
        %v348 = vunpack.c.l.b16 %v220
        %v349 = vunpack.c.l.b16 %v221
        %v350 = vunpack.c.l.b16 %v222
        %v351 = vunpack.c.l.b16 %v223
        %v352 = vunpack.c.l.b16 %v224
        %v353 = vunpack.c.l.b16 %v225
        %v354 = vunpack.c.l.b16 %v226
        %v355 = vunpack.c.l.b16 %v227
        %v356 = vunpack.c.l.b16 %v228
        %v357 = vunpack.c.l.b16 %v229
        %v358 = vpack.c.b16 %v343, %v342
        %v359 = vpack.c.b16 %v345, %v344
        %v360 = vpack.c.b16 %v347, %v346
        %v361 = vpack.c.b16 %v349, %v348
        %v362 = vpack.c.b16 %v351, %v350
        %v363 = vpack.c.b16 %v353, %v352
        %v364 = vpack.c.b16 %v355, %v354
        %v365 = vpack.c.b16 %v357, %v356
        %374 = vmatprep.subr.bf16.mxu0 0
        %375 = vmatpush1.bf16.msra.mxu0 %v358
        %376 = vmatprep.subr.bf16.mxu0 0
        %377 = vmatpush1.bf16.msra.mxu0 %v359
        %378 = vmatprep.subr.bf16.mxu0 0
        %379 = vmatpush1.bf16.msra.mxu0 %v360
        %380 = vmatprep.subr.bf16.mxu0 0
        %381 = vmatpush1.bf16.msra.mxu0 %v361
        %382 = vmatprep.subr.bf16.mxu0 0
        %383 = vmatpush1.bf16.msra.mxu0 %v362
        %384 = vmatprep.subr.bf16.mxu0 0
        %385 = vmatpush1.bf16.msra.mxu0 %v363
        %386 = vmatprep.subr.bf16.mxu0 0
        %387 = vmatpush1.bf16.msra.mxu0 %v364
        %388 = vmatprep.subr.bf16.mxu0 0
        %389 = vmatpush1.bf16.msra.mxu0 %v365
        %390 = vmatprep.subr.bf16.mxu0 0
        %391 = vmatpush1.bf16.msra.mxu0 0
        %392 = vmatprep.subr.bf16.mxu0 0
        %393 = vmatpush1.bf16.msra.mxu0 0
        %394 = vmatprep.subr.bf16.mxu0 0
        %395 = vmatpush1.bf16.msra.mxu0 0
        %396 = vmatprep.subr.bf16.mxu0 0
        %397 = vmatpush1.bf16.msra.mxu0 0
        %398 = vmatprep.subr.bf16.mxu0 0
        %399 = vmatpush1.bf16.msra.mxu0 0
        %400 = vmatprep.subr.bf16.mxu0 0
        %401 = vmatpush1.bf16.msra.mxu0 0
        %402 = vmatprep.subr.bf16.mxu0 0
        %403 = vmatpush1.bf16.msra.mxu0 0
        %404 = vmatprep.subr.bf16.mxu0 0
        %405 = vmatpush1.bf16.msra.mxu0 0
        %406 = vmatprep.mubr.bf16.mxu0 0
        %407 = vmatmul.mubr.bf16.gmra.mrb[0].mxu0 %v294
        %v408 = vpop.f32.mrb[0].mxu0
        %v409 = vadd.f32 0.0, %v408
        %v410 = vpop.f32.mrb[0].mxu0
        %v411 = vpop.f32.mrb[0].mxu0
        %v412 = vadd.f32 0.0, %v411
        %v413 = vpop.f32.mrb[0].mxu0
        %414 = vmatprep.mubr.bf16.mxu0 0
        %415 = vmatmul.mubr.bf16.gmra.mrb[0].mxu0 %v295
        %v416 = vpop.f32.mrb[0].mxu0
        %v417 = vadd.f32 0.0, %v416
        %v418 = vpop.f32.mrb[0].mxu0
        %v419 = vpop.f32.mrb[0].mxu0
        %v420 = vadd.f32 0.0, %v419
        %v421 = vpop.f32.mrb[0].mxu0
        %422 = vmatprep.mubr.bf16.mxu0 0
        %423 = vmatmul.mubr.bf16.gmra.mrb[0].mxu0 %v296
        %v424 = vpop.f32.mrb[0].mxu0
        %v425 = vadd.f32 0.0, %v424
        %v426 = vpop.f32.mrb[0].mxu0
        %v427 = vpop.f32.mrb[0].mxu0
        %v428 = vadd.f32 0.0, %v427
        %v429 = vpop.f32.mrb[0].mxu0
        %430 = vmatprep.mubr.bf16.mxu0 0
        %431 = vmatmul.mubr.bf16.gmra.mrb[0].mxu0 %v297
        %v432 = vpop.f32.mrb[0].mxu0
        %v433 = vadd.f32 0.0, %v432
        %v434 = vpop.f32.mrb[0].mxu0
        %v435 = vpop.f32.mrb[0].mxu0
        %v436 = vadd.f32 0.0, %v435
        %v437 = vpop.f32.mrb[0].mxu0
        %438 = vmatprep.mubr.bf16.mxu0 0
        %439 = vmatmul.mubr.bf16.gmra.mrb[0].mxu0 %v298
        %v440 = vpop.f32.mrb[0].mxu0
        %v441 = vadd.f32 0.0, %v440
        %v442 = vpop.f32.mrb[0].mxu0
        %v443 = vpop.f32.mrb[0].mxu0
        %v444 = vadd.f32 0.0, %v443
        %v445 = vpop.f32.mrb[0].mxu0
        %446 = vmatprep.mubr.bf16.mxu0 0
        %447 = vmatmul.mubr.bf16.gmra.mrb[0].mxu0 %v299
        %v448 = vpop.f32.mrb[0].mxu0
        %v449 = vadd.f32 0.0, %v448
        %v450 = vpop.f32.mrb[0].mxu0
        %v451 = vpop.f32.mrb[0].mxu0
        %v452 = vadd.f32 0.0, %v451
        %v453 = vpop.f32.mrb[0].mxu0
        %454 = vmatprep.mubr.bf16.mxu0 0
        %455 = vmatmul.mubr.bf16.gmra.mrb[0].mxu0 %v300
        %v456 = vpop.f32.mrb[0].mxu0
        %v457 = vadd.f32 0.0, %v456
        %v458 = vpop.f32.mrb[0].mxu0
        %v459 = vpop.f32.mrb[0].mxu0
        %v460 = vadd.f32 0.0, %v459
        %v461 = vpop.f32.mrb[0].mxu0
        %462 = vmatprep.mubr.bf16.mxu0 0
        %463 = vmatmul.mubr.bf16.gmra.mrb[0].mxu0 %v301
        %v464 = vpop.f32.mrb[0].mxu0
        %v465 = vadd.f32 0.0, %v464
        %v466 = vpop.f32.mrb[0].mxu0
        %v467 = vpop.f32.mrb[0].mxu0
        %v468 = vadd.f32 0.0, %v467
        %v469 = vpop.f32.mrb[0].mxu0
        %470 = vmatprep.mubr.bf16.mxu0 0
        %471 = vmatmul.mubr.bf16.gmra.mrb[0].mxu0 %v302
        %v472 = vpop.f32.mrb[0].mxu0
        %v473 = vadd.f32 0.0, %v472
        %v474 = vpop.f32.mrb[0].mxu0
        %v475 = vpop.f32.mrb[0].mxu0
        %v476 = vadd.f32 0.0, %v475
        %v477 = vpop.f32.mrb[0].mxu0
        %478 = vmatprep.mubr.bf16.mxu0 0
        %479 = vmatmul.mubr.bf16.gmra.mrb[0].mxu0 %v303
        %v480 = vpop.f32.mrb[0].mxu0
        %v481 = vadd.f32 0.0, %v480
        %v482 = vpop.f32.mrb[0].mxu0
        %v483 = vpop.f32.mrb[0].mxu0
        %v484 = vadd.f32 0.0, %v483
        %v485 = vpop.f32.mrb[0].mxu0
        %486 = vmatprep.mubr.bf16.mxu0 0
        %487 = vmatmul.mubr.bf16.gmra.mrb[0].mxu0 %v304
        %v488 = vpop.f32.mrb[0].mxu0
        %v489 = vadd.f32 0.0, %v488
        %v490 = vpop.f32.mrb[0].mxu0
        %v491 = vpop.f32.mrb[0].mxu0
        %v492 = vadd.f32 0.0, %v491
        %v493 = vpop.f32.mrb[0].mxu0
        %494 = vmatprep.mubr.bf16.mxu0 0
        %495 = vmatmul.mubr.bf16.gmra.mrb[0].mxu0 %v305
        %v496 = vpop.f32.mrb[0].mxu0
        %v497 = vadd.f32 0.0, %v496
        %v498 = vpop.f32.mrb[0].mxu0
        %v499 = vpop.f32.mrb[0].mxu0
        %v500 = vadd.f32 0.0, %v499
        %v501 = vpop.f32.mrb[0].mxu0
        %502 = vmatprep.mubr.bf16.mxu0 0
        %503 = vmatmul.mubr.bf16.gmra.mrb[0].mxu0 %v306
        %v504 = vpop.f32.mrb[0].mxu0
        %v505 = vadd.f32 0.0, %v504
        %v506 = vpop.f32.mrb[0].mxu0
        %v507 = vpop.f32.mrb[0].mxu0
        %v508 = vadd.f32 0.0, %v507
        %v509 = vpop.f32.mrb[0].mxu0
        %510 = vmatprep.mubr.bf16.mxu0 0
        %511 = vmatmul.mubr.bf16.gmra.mrb[0].mxu0 %v307
        %v512 = vpop.f32.mrb[0].mxu0
        %v513 = vadd.f32 0.0, %v512
        %v514 = vpop.f32.mrb[0].mxu0
        %v515 = vpop.f32.mrb[0].mxu0
        %v516 = vadd.f32 0.0, %v515
        %v517 = vpop.f32.mrb[0].mxu0
        %518 = vmatprep.mubr.bf16.mxu0 0
        %519 = vmatmul.mubr.bf16.gmra.mrb[0].mxu0 %v308
        %v520 = vpop.f32.mrb[0].mxu0
        %v521 = vadd.f32 0.0, %v520
        %v522 = vpop.f32.mrb[0].mxu0
        %v523 = vpop.f32.mrb[0].mxu0
        %v524 = vadd.f32 0.0, %v523
        %v525 = vpop.f32.mrb[0].mxu0
        %526 = vmatprep.mubr.bf16.mxu0 0
        %527 = vmatmul.mubr.bf16.gmra.mrb[0].mxu0 %v309
        %v528 = vpop.f32.mrb[0].mxu0
        %v529 = vadd.f32 0.0, %v528
        %v530 = vpop.f32.mrb[0].mxu0
        %v531 = vpop.f32.mrb[0].mxu0
        %v532 = vadd.f32 0.0, %v531
        %v533 = vpop.f32.mrb[0].mxu0
        %534 = vdwg.mxu0
        %v535 = vpack.c.bf16 %v412, %v409
        %v536 = vpack.c.bf16 %v420, %v417
        %v537 = vpack.c.bf16 %v428, %v425
        %v538 = vpack.c.bf16 %v436, %v433
        %v539 = vpack.c.bf16 %v444, %v441
        %v540 = vpack.c.bf16 %v452, %v449
        %v541 = vpack.c.bf16 %v460, %v457
        %v542 = vpack.c.bf16 %v468, %v465
        %v543 = vpack.c.bf16 %v476, %v473
        %v544 = vpack.c.bf16 %v484, %v481
        %v545 = vpack.c.bf16 %v492, %v489
        %v546 = vpack.c.bf16 %v500, %v497
        %v547 = vpack.c.bf16 %v508, %v505
        %v548 = vpack.c.bf16 %v516, %v513
        %v549 = vpack.c.bf16 %v524, %v521
        %v550 = vpack.c.bf16 %v532, %v529
        %v567 = vunpack.c.l.b16 %v535
        %v568 = vunpack.c.h.b16 %v535
        %v569 = vunpack.c.l.b16 %v536
        %v570 = vunpack.c.h.b16 %v536
        %v571 = vunpack.c.l.b16 %v537
        %v572 = vunpack.c.h.b16 %v537
        %v573 = vunpack.c.l.b16 %v538
        %v574 = vunpack.c.h.b16 %v538
        %v575 = vunpack.c.l.b16 %v539
        %v576 = vunpack.c.h.b16 %v539
        %v577 = vunpack.c.l.b16 %v540
        %v578 = vunpack.c.h.b16 %v540
        %v579 = vunpack.c.l.b16 %v541
        %v580 = vunpack.c.h.b16 %v541
        %v581 = vunpack.c.l.b16 %v542
        %v582 = vunpack.c.h.b16 %v542
        %v583 = vunpack.c.l.b16 %v543
        %v584 = vunpack.c.h.b16 %v543
        %v585 = vunpack.c.l.b16 %v544
        %v586 = vunpack.c.h.b16 %v544
        %v587 = vunpack.c.l.b16 %v545
        %v588 = vunpack.c.h.b16 %v545
        %v589 = vunpack.c.l.b16 %v546
        %v590 = vunpack.c.h.b16 %v546
        %v591 = vunpack.c.l.b16 %v547
        %v592 = vunpack.c.h.b16 %v547
        %v593 = vunpack.c.l.b16 %v548
        %v594 = vunpack.c.h.b16 %v548
        %v595 = vunpack.c.l.b16 %v549
        %v596 = vunpack.c.h.b16 %v549
        %v597 = vunpack.c.l.b16 %v550
        %v598 = vunpack.c.h.b16 %v550
        %v599 = vpack.c.b16 %v567, %v567
        %v600 = vpack.c.b16 %v568, %v568
        %v601 = vpack.c.b16 %v569, %v569
        %v602 = vpack.c.b16 %v570, %v570
        %v603 = vpack.c.b16 %v571, %v571
        %v604 = vpack.c.b16 %v572, %v572
        %v605 = vpack.c.b16 %v573, %v573
        %v606 = vpack.c.b16 %v574, %v574
        %v607 = vpack.c.b16 %v575, %v575
        %v608 = vpack.c.b16 %v576, %v576
        %v609 = vpack.c.b16 %v577, %v577
        %v610 = vpack.c.b16 %v578, %v578
        %v611 = vpack.c.b16 %v579, %v579
        %v612 = vpack.c.b16 %v580, %v580
        %v613 = vpack.c.b16 %v581, %v581
        %v614 = vpack.c.b16 %v582, %v582
        %v615 = vpack.c.b16 %v583, %v583
        %v616 = vpack.c.b16 %v584, %v584
        %v617 = vpack.c.b16 %v585, %v585
        %v618 = vpack.c.b16 %v586, %v586
        %v619 = vpack.c.b16 %v587, %v587
        %v620 = vpack.c.b16 %v588, %v588
        %v621 = vpack.c.b16 %v589, %v589
        %v622 = vpack.c.b16 %v590, %v590
        %v623 = vpack.c.b16 %v591, %v591
        %v624 = vpack.c.b16 %v592, %v592
        %v625 = vpack.c.b16 %v593, %v593
        %v626 = vpack.c.b16 %v594, %v594
        %v627 = vpack.c.b16 %v595, %v595
        %v628 = vpack.c.b16 %v596, %v596
        %v629 = vpack.c.b16 %v597, %v597
        %v630 = vpack.c.b16 %v598, %v598
        %663 = vst [vmem:[%s179] sm:$0xf] %v599
        %664 = vst [vmem:[%s179 + $0x4] sm:$0xf] %v600
        %665 = vst [vmem:[%s179 + $0x8] sm:$0xf] %v601
        %666 = vst [vmem:[%s179 + $0xc] sm:$0xf] %v602
        %667 = vst [vmem:[%s179 + $0x10] sm:$0xf] %v603
        %668 = vst [vmem:[%s179 + $0x14] sm:$0xf] %v604
        %669 = vst [vmem:[%s179 + $0x18] sm:$0xf] %v605
        %670 = vst [vmem:[%s179 + $0x1c] sm:$0xf] %v606
        %671 = vst [vmem:[%s179 + $0x20] sm:$0xf] %v607
        %672 = vst [vmem:[%s179 + $0x24] sm:$0xf] %v608
        %673 = vst [vmem:[%s179 + $0x28] sm:$0xf] %v609
        %674 = vst [vmem:[%s179 + $0x2c] sm:$0xf] %v610
        %675 = vst [vmem:[%s179 + $0x30] sm:$0xf] %v611
        %676 = vst [vmem:[%s179 + $0x34] sm:$0xf] %v612
        %677 = vst [vmem:[%s179 + $0x38] sm:$0xf] %v613
        %678 = vst [vmem:[%s179 + $0x3c] sm:$0xf] %v614
        %679 = vst [vmem:[%s179 + $0x40] sm:$0xf] %v615
        %680 = vst [vmem:[%s179 + $0x44] sm:$0xf] %v616
        %681 = vst [vmem:[%s179 + $0x48] sm:$0xf] %v617
        %682 = vst [vmem:[%s179 + $0x4c] sm:$0xf] %v618
        %683 = vst [vmem:[%s179 + $0x50] sm:$0xf] %v619
        %684 = vst [vmem:[%s179 + $0x54] sm:$0xf] %v620
        %685 = vst [vmem:[%s179 + $0x58] sm:$0xf] %v621
        %686 = vst [vmem:[%s179 + $0x5c] sm:$0xf] %v622
        %687 = vst [vmem:[%s179 + $0x60] sm:$0xf] %v623
        %688 = vst [vmem:[%s179 + $0x64] sm:$0xf] %v624
        %689 = vst [vmem:[%s179 + $0x68] sm:$0xf] %v625
        %690 = vst [vmem:[%s179 + $0x6c] sm:$0xf] %v626
        %691 = vst [vmem:[%s179 + $0x70] sm:$0xf] %v627
        %692 = vst [vmem:[%s179 + $0x74] sm:$0xf] %v628
        %693 = vst [vmem:[%s179 + $0x78] sm:$0xf] %v629
        %694 = vst [vmem:[%s179 + $0x7c] sm:$0xf] %v630
        %s695 = smul.u32 32, %s17
        %p696 = scmp.lt.s32.totalorder %s695, 63
        %s697 = scalar_select %p696, %s695, 63
        %s698 = smul.addr %s697, 4
        %s699 = scalar_lea.vmem %s2, %s698
        // Predicated region
        $region37: #{gcn_forward.4} parent=27 // pred_check
          %p700 = pneg %p82
        $region38: #{gcn_forward.4} parent=27 // pred_check_branch
          %702 = sbr.rel (%p700) target = $region40
        $region39: #{gcn_forward.4} parent=27 // pred_region
          %s703 = smul.u32 32, %s17
        $region40: #{gcn_forward.4} parent=27 // pred_fallthru
          _
      $region28: #{gcn_forward.4} parent=5 // pred_fallthru
        _
      %p704 = scmp.le.s32.totalorder 2, %s12
      // Predicated region
      $region41: #{gcn_forward.4} parent=5 // pred_check
        %p705 = pneg %p704
      $region42: #{gcn_forward.4} parent=5 // pred_check_branch
        %707 = sbr.rel (%p705) target = $region44
      $region43: #{gcn_forward.4} parent=5 // pred_region
        %s708 = ssub.s32 %s12, 2
        // Predicated region
        $region45: #{gcn_forward.4} parent=43 // pred_check
          %p709 = pneg %p88
        $region46: #{gcn_forward.4} parent=43 // pred_check_branch
          %711 = sbr.rel (%p709) target = $region48
        $region47: #{gcn_forward.4} parent=43 // pred_region
          %s712 = smul.u32 32, %s18
          %p713 = scmp.lt.s32.totalorder %s712, 63
          %s714 = scalar_select %p713, %s712, 63
          %s715 = smul.addr %s714, 4
          %s716 = scalar_lea.vmem %s2, %s715
        $region48: #{gcn_forward.4} parent=43 // pred_fallthru
          _
      $region44: #{gcn_forward.4} parent=5 // pred_fallthru
        _
    $region6: #{gcn_forward.4} parent=1 // loop_footer
      %s16 = sadd.s32 1, %s12
    $region7: #{gcn_forward.4} parent=1 // loop_footer_branch
      %11 = sbr.rel target = $region3
    $region8: #{gcn_forward.4} parent=1 // loop_exit
      _
    %717 = vsyncpa [#allocation3], 1
    %s718 = scalar_lea.sflag [#allocation3], 1
    %719 = vsyncpa %s718, 1
    %720 = vsyncpa [#allocation5], 1

// kernel: gcn_forward.5
$region0: #{gcn_forward.5}
  #allocation0 [shape = 'u32[]', space=smem, size = 0x4, offset = 0x4, fixed_abs, tag = 'smem constant byte address 0x4 - core index']
  #allocation1 [shape = 'u32[144,128]{1,0:T(1,128)}', space=vmem, size = 0x12000, scoped, tag = 'internal scratch']
  #allocation2 [shape = 'f32[256,128]{1,0:T(8,128)}', space=vmem, size = 0x20000, scoped, tag = 'scratch operand']
  %s0 = inlined_call_operand.hbm [shape: bf16[512,512], index: 0, kind: input, shape index: {}]
  %s1 = inlined_call_operand.vmem [shape: bf16[512,128], index: 1, kind: input, shape index: {}]
  %s2 = inlined_call_operand.vmem [shape: f32[1,128], index: 2, kind: input, shape index: {}]
  %s3 = inlined_call_operand.vmem [shape: bf16[512,128], index: 3, kind: output, shape index: {}]
  %s4 = sld [smem:[#allocation0]]
  $region57: #{gcn_forward.5} parent=0
    _
  %s6 = ssub.s32 1, %s4
  %s7 = scalar_select 0, %s6, %s4
  $region1: #{gcn_forward.5} parent=0
    #allocation3 [shape = 'u8[524288]{0}', space=vmem, size = 0x80000, scoped, tag = 'input window, operand 0']
    #allocation4 [shape = 's32[2]{0}', space=sflag, size = 0x8, scoped, tag = 'scoped memory for gcn_forward.5']
    %8 = vsyncpa [#allocation4], 0
    %s9 = scalar_lea.sflag [#allocation4], 1
    %10 = vsyncpa %s9, 0
    loop: start=0, step=1, limit=4
    $region2: #{gcn_forward.5} parent=1 // loop_pre_header
      _
    $region3: #{gcn_forward.5} parent=1 // loop_header
      %s12 = sphi 0, %s16
      %p13 = scmp.ge.s32.totalorder %s12, 4
      %s19 = sphi 0, %s31
      %s20 = sphi 0, %s27
      %s21 = sphi 0, %s19
      %s22 = sphi 0, %s20
      %s23 = sphi 0, %s21
      %s24 = sphi 0, %s22
      %s36 = sphi 0, %s38
      %s39 = sphi 0, %s36
      %s40 = sphi 0, %s39
      %s56 = sphi 0, %s40
      %s60 = sphi 0, %s60
      %s62 = sphi 0, %s60
      %s63 = sphi 0, %s62
      %s77 = sphi 0, %s63
      %s81 = sphi 0, %s81
      %s83 = sphi 0, %s81
      %s84 = sphi 0, %s83
      %s98 = sphi 0, %s84
      %s104 = sphi 0, %s106
      %s107 = sphi 0, %s104
      %s108 = sphi 0, %s107
      %s124 = sphi 0, %s108
    $region4: #{gcn_forward.5} parent=1 // loop_header_branch
      %15 = sbr.rel (%p13) target = $region8
    $region5: #{gcn_forward.5} parent=1 // loop_body
      %s17 = ssub.s32 %s12, 1
      %s18 = ssub.s32 %s12, 2
      %s25 = sadd.s32 1, %s20
      %p26 = scmp.ge.s32.totalorder %s25, 1
      %s27 = scalar_select %p26, 0, %s25
      %s28 = sadd.s32 1, %s19
      %s29 = scalar_select %p26, %s28, %s19
      %p30 = scmp.ge.s32.totalorder %s29, 2
      %s31 = scalar_select %p30, 0, %s29
      %s32 = ssub.s32 %s19, %s31
      %s33 = ssub.s32 %s20, %s27
      %s34 = sor.u32 %s32, %s33
      %p35 = scmp.eq.s32.totalorder %s34, 0
      %s37 = sadd.s32 %s36, 1
      %s38 = scalar_select %p35, %s36, %s37
      %p41 = pneg %p35
      %p42 = scmp.eq.s32.totalorder %s12, 1
      %p43 = por %p41, %p42
      %p44 = scmp.ne.s32.totalorder %s36, %s39
      %p45 = scmp.eq.s32.totalorder %s12, 0
      %p46 = por %p44, %p45
      %p47 = scmp.ne.s32.totalorder %s36, %s39
      %p48 = scmp.eq.s32.totalorder %s17, 1
      %p49 = por %p47, %p48
      %p50 = scmp.ne.s32.totalorder %s39, %s40
      %p51 = scmp.eq.s32.totalorder %s17, 0
      %p52 = por %p50, %p51
      %p53 = scmp.ne.s32.totalorder %s39, %s40
      %p54 = scmp.eq.s32.totalorder %s18, 1
      %p55 = por %p53, %p54
      %p57 = scmp.ne.s32.totalorder %s40, %s56
      %p58 = scmp.eq.s32.totalorder %s18, 0
      %p59 = por %p57, %p58
      %s61 = sadd.s32 %s60, 1
      %p64 = scmp.eq.s32.totalorder %s12, 1
      %p65 = scmp.ne.s32.totalorder %s60, %s62
      %p66 = scmp.eq.s32.totalorder %s12, 0
      %p67 = por %p65, %p66
      %p68 = scmp.ne.s32.totalorder %s60, %s62
      %p69 = scmp.eq.s32.totalorder %s17, 1
      %p70 = por %p68, %p69
      %p71 = scmp.ne.s32.totalorder %s62, %s63
      %p72 = scmp.eq.s32.totalorder %s17, 0
      %p73 = por %p71, %p72
      %p74 = scmp.ne.s32.totalorder %s62, %s63
      %p75 = scmp.eq.s32.totalorder %s18, 1
      %p76 = por %p74, %p75
      %p78 = scmp.ne.s32.totalorder %s63, %s77
      %p79 = scmp.eq.s32.totalorder %s18, 0
      %p80 = por %p78, %p79
      %s82 = sadd.s32 %s81, 1
      %p85 = scmp.eq.s32.totalorder %s12, 1
      %p86 = scmp.ne.s32.totalorder %s81, %s83
      %p87 = scmp.eq.s32.totalorder %s12, 0
      %p88 = por %p86, %p87
      %p89 = scmp.ne.s32.totalorder %s81, %s83
      %p90 = scmp.eq.s32.totalorder %s17, 1
      %p91 = por %p89, %p90
      %p92 = scmp.ne.s32.totalorder %s83, %s84
      %p93 = scmp.eq.s32.totalorder %s17, 0
      %p94 = por %p92, %p93
      %p95 = scmp.ne.s32.totalorder %s83, %s84
      %p96 = scmp.eq.s32.totalorder %s18, 1
      %p97 = por %p95, %p96
      %p99 = scmp.ne.s32.totalorder %s84, %s98
      %p100 = scmp.eq.s32.totalorder %s18, 0
      %p101 = por %p99, %p100
      %s102 = ssub.s32 %s19, %s31
      %p103 = scmp.eq.s32.totalorder %s102, 0
      %s105 = sadd.s32 %s104, 1
      %s106 = scalar_select %p103, %s104, %s105
      %p109 = pneg %p103
      %p110 = scmp.eq.s32.totalorder %s12, 1
      %p111 = por %p109, %p110
      %p112 = scmp.ne.s32.totalorder %s104, %s107
      %p113 = scmp.eq.s32.totalorder %s12, 0
      %p114 = por %p112, %p113
      %p115 = scmp.ne.s32.totalorder %s104, %s107
      %p116 = scmp.eq.s32.totalorder %s17, 1
      %p117 = por %p115, %p116
      %p118 = scmp.ne.s32.totalorder %s107, %s108
      %p119 = scmp.eq.s32.totalorder %s17, 0
      %p120 = por %p118, %p119
      %p121 = scmp.ne.s32.totalorder %s107, %s108
      %p122 = scmp.eq.s32.totalorder %s18, 1
      %p123 = por %p121, %p122
      %p125 = scmp.ne.s32.totalorder %s108, %s124
      %p126 = scmp.eq.s32.totalorder %s18, 0
      %p127 = por %p125, %p126
      %p128 = scmp.le.s32.totalorder 1, %s12
      %p129 = scmp.lt.s32.totalorder %s12, 3
      %p130 = pnand %p128, %p129
      %p131 = pneg %p130
      // Predicated region
      $region9: #{gcn_forward.5} parent=5 // pred_check
        _
      $region10: #{gcn_forward.5} parent=5 // pred_check_branch
        %133 = sbr.rel (%p130) target = $region12
      $region11: #{gcn_forward.5} parent=5 // pred_region
        %s134 = ssub.s32 %s12, 1
        // Predicated region
        $region13: #{gcn_forward.5} parent=11 // pred_check
          %p135 = pneg %p73
        $region14: #{gcn_forward.5} parent=11 // pred_check_branch
          %137 = sbr.rel (%p135) target = $region16
        $region15: #{gcn_forward.5} parent=11 // pred_region
          _
        $region16: #{gcn_forward.5} parent=11 // pred_fallthru
          _
        // Predicated region
        $region17: #{gcn_forward.5} parent=11 // pred_check
          %p138 = pneg %p94
        $region18: #{gcn_forward.5} parent=11 // pred_check_branch
          %140 = sbr.rel (%p138) target = $region20
        $region19: #{gcn_forward.5} parent=11 // pred_region
          _
        $region20: #{gcn_forward.5} parent=11 // pred_fallthru
          _
      $region12: #{gcn_forward.5} parent=5 // pred_fallthru
        _
      %p141 = scmp.lt.s32.totalorder %s12, 2
      // Predicated region
      $region21: #{gcn_forward.5} parent=5 // pred_check
        %p142 = pneg %p141
      $region22: #{gcn_forward.5} parent=5 // pred_check_branch
        %144 = sbr.rel (%p142) target = $region24
      $region23: #{gcn_forward.5} parent=5 // pred_region
        // Predicated region
        $region25: #{gcn_forward.5} parent=23 // pred_check
          %p145 = pneg %p46
        $region26: #{gcn_forward.5} parent=23 // pred_check_branch
          %147 = sbr.rel (%p145) target = $region28
        $region27: #{gcn_forward.5} parent=23 // pred_region
          %s148 = sand.u32 %s36, 1
          %s149 = scalar_lea.sflag [#allocation4], %s148
          %s150 = sand.u32 %s36, 1
          %s151 = smul.addr %s150, 512
          %s152 = scalar_lea.vmem [#allocation3], %s151
          %s153 = smul.u32 32, %s19
          %s154 = smul.u32 4, %s20
          %s156 = ssub.s32 8192, 8192
          %157 = vsyncadd %s149, %s156
          %s158 = smul.addr %s153, 4
          %s159 = sadd.s32 %s154, %s158
          %s160 = smul.addr %s159, 64
          %s161 = scalar_lea.hbm %s0, %s160
          %s162 = sshll.u32 %s152, 4
          %s163 = int_to_ptr.vmem [resolvable:$true] %s162
          %168 = dma.hbm_to_vmem [thread:$0]  %s161, 8192, %s163, %s149, 256, 256, 16
        $region28: #{gcn_forward.5} parent=23 // pred_fallthru
          _
      $region24: #{gcn_forward.5} parent=5 // pred_fallthru
        _
      %p169 = scmp.le.s32.totalorder 1, %s12
      %p170 = scmp.lt.s32.totalorder %s12, 3
      %p171 = pnand %p169, %p170
      %p172 = pneg %p171
      // Predicated region
      $region29: #{gcn_forward.5} parent=5 // pred_check
        _
      $region30: #{gcn_forward.5} parent=5 // pred_check_branch
        %174 = sbr.rel (%p171) target = $region32
      $region31: #{gcn_forward.5} parent=5 // pred_region
        %s175 = ssub.s32 %s12, 1
        %s176 = sand.u32 %s39, 1
        %s177 = scalar_lea.sflag [#allocation4], %s176
        %s178 = sand.u32 %s39, 1
        %s179 = smul.addr %s178, 512
        %s180 = scalar_lea.vmem [#allocation3], %s179
        // Predicated region
        $region33: #{gcn_forward.5} parent=31 // pred_check
          %p181 = pneg %p52
        $region34: #{gcn_forward.5} parent=31 // pred_check_branch
          %183 = sbr.rel (%p181) target = $region36
        $region35: #{gcn_forward.5} parent=31 // pred_region
          %184 = dma.done %s177, 8192
        $region36: #{gcn_forward.5} parent=31 // pred_fallthru
          _
        %s185 = sand.u32 %s39, 1
        %s186 = scalar_lea.sflag [#allocation4], %s185
        %s187 = sand.u32 %s39, 1
        %s188 = smul.addr %s187, 512
        %s189 = scalar_lea.vmem [#allocation3], %s188
        %p190 = pneg %p52
        %p191 = pneg %p49
        %p192 = pneg %p73
        %p193 = pneg %p70
        %p194 = pneg %p94
        %p195 = pneg %p91
        %p196 = pneg %p120
        %p197 = pneg %p117
        %s198 = smul.u32 32, %s21
        %p199 = scmp.lt.s32.totalorder %s198, 63
        %s200 = scalar_select %p199, %s198, 63
        %s201 = smul.addr %s200, 4
        %s202 = scalar_lea.vmem %s3, %s201
        %s203 = smul.u32 32, %s21
        %s204 = smul.u32 4, %s22
        %s205 = smul.u32 32, %s21
        %p206 = scmp.lt.s32.totalorder %s205, 63
        %s207 = scalar_select %p206, %s205, 63
        %s208 = smul.addr %s207, 4
        %s209 = scalar_lea.vmem %s3, %s208
        %s210 = smul.u32 32, %s21
        %p212 = scmp.eq.s32.totalorder %s22, 0
        // Predicated region
        $region37: #{gcn_forward.5} parent=31 // pred_check
          %p213 = pneg %p212
        $region38: #{gcn_forward.5} parent=31 // pred_check_branch
          %215 = sbr.rel (%p213) target = $region40
        $region39: #{gcn_forward.5} parent=31 // pred_region
          %216 = vst [vmem:[#allocation2] sm:$0xff] 0.0
          %217 = vst [vmem:[#allocation2 + $0x8] sm:$0xff] 0.0
          %218 = vst [vmem:[#allocation2 + $0x10] sm:$0xff] 0.0
          %219 = vst [vmem:[#allocation2 + $0x18] sm:$0xff] 0.0
          %220 = vst [vmem:[#allocation2 + $0x20] sm:$0xff] 0.0
          %221 = vst [vmem:[#allocation2 + $0x28] sm:$0xff] 0.0
          %222 = vst [vmem:[#allocation2 + $0x30] sm:$0xff] 0.0
          %223 = vst [vmem:[#allocation2 + $0x38] sm:$0xff] 0.0
          %224 = vst [vmem:[#allocation2 + $0x40] sm:$0xff] 0.0
          %225 = vst [vmem:[#allocation2 + $0x48] sm:$0xff] 0.0
          %226 = vst [vmem:[#allocation2 + $0x50] sm:$0xff] 0.0
          %227 = vst [vmem:[#allocation2 + $0x58] sm:$0xff] 0.0
          %228 = vst [vmem:[#allocation2 + $0x60] sm:$0xff] 0.0
          %229 = vst [vmem:[#allocation2 + $0x68] sm:$0xff] 0.0
          %230 = vst [vmem:[#allocation2 + $0x70] sm:$0xff] 0.0
          %231 = vst [vmem:[#allocation2 + $0x78] sm:$0xff] 0.0
          %232 = vst [vmem:[#allocation2 + $0x80] sm:$0xff] 0.0
          %233 = vst [vmem:[#allocation2 + $0x88] sm:$0xff] 0.0
          %234 = vst [vmem:[#allocation2 + $0x90] sm:$0xff] 0.0
          %235 = vst [vmem:[#allocation2 + $0x98] sm:$0xff] 0.0
          %236 = vst [vmem:[#allocation2 + $0xa0] sm:$0xff] 0.0
          %237 = vst [vmem:[#allocation2 + $0xa8] sm:$0xff] 0.0
          %238 = vst [vmem:[#allocation2 + $0xb0] sm:$0xff] 0.0
          %239 = vst [vmem:[#allocation2 + $0xb8] sm:$0xff] 0.0
          %240 = vst [vmem:[#allocation2 + $0xc0] sm:$0xff] 0.0
          %241 = vst [vmem:[#allocation2 + $0xc8] sm:$0xff] 0.0
          %242 = vst [vmem:[#allocation2 + $0xd0] sm:$0xff] 0.0
          %243 = vst [vmem:[#allocation2 + $0xd8] sm:$0xff] 0.0
          %244 = vst [vmem:[#allocation2 + $0xe0] sm:$0xff] 0.0
          %245 = vst [vmem:[#allocation2 + $0xe8] sm:$0xff] 0.0
          %246 = vst [vmem:[#allocation2 + $0xf0] sm:$0xff] 0.0
          %247 = vst [vmem:[#allocation2 + $0xf8] sm:$0xff] 0.0
        $region40: #{gcn_forward.5} parent=31 // pred_fallthru
          _
        %s248 = smul.u32 %s22, 512
        %s249 = sshra.s32 %s248, 3
        %s250 = sand.u32 %s248, 7
        %s251 = smul.addr %s249, 4
        %s252 = scalar_lea.vmem %s1, %s251
        %v253 = vld [vmem:[%s252] sm:$0xf]
        %v254 = vld [vmem:[%s252 + $0x4] sm:$0xf]
        %v255 = vld [vmem:[%s252 + $0x8] sm:$0xf]
        %v256 = vld [vmem:[%s252 + $0xc] sm:$0xf]
        %v257 = vld [vmem:[%s252 + $0x10] sm:$0xf]
        %v258 = vld [vmem:[%s252 + $0x14] sm:$0xf]
        %v259 = vld [vmem:[%s252 + $0x18] sm:$0xf]
        %v260 = vld [vmem:[%s252 + $0x1c] sm:$0xf]
        %v261 = vld [vmem:[%s252 + $0x20] sm:$0xf]
        %v262 = vld [vmem:[%s252 + $0x24] sm:$0xf]
        %v263 = vld [vmem:[%s252 + $0x28] sm:$0xf]
        %v264 = vld [vmem:[%s252 + $0x2c] sm:$0xf]
        %v265 = vld [vmem:[%s252 + $0x30] sm:$0xf]
        %v266 = vld [vmem:[%s252 + $0x34] sm:$0xf]
        %v267 = vld [vmem:[%s252 + $0x38] sm:$0xf]
        %v268 = vld [vmem:[%s252 + $0x3c] sm:$0xf]
        %v269 = vld [vmem:[%s252 + $0x40] sm:$0xf]
        %v270 = vld [vmem:[%s252 + $0x44] sm:$0xf]
        %v271 = vld [vmem:[%s252 + $0x48] sm:$0xf]
        %v272 = vld [vmem:[%s252 + $0x4c] sm:$0xf]
        %v273 = vld [vmem:[%s252 + $0x50] sm:$0xf]
        %v274 = vld [vmem:[%s252 + $0x54] sm:$0xf]
        %v275 = vld [vmem:[%s252 + $0x58] sm:$0xf]
        %v276 = vld [vmem:[%s252 + $0x5c] sm:$0xf]
        %v277 = vld [vmem:[%s252 + $0x60] sm:$0xf]
        %v278 = vld [vmem:[%s252 + $0x64] sm:$0xf]
        %v279 = vld [vmem:[%s252 + $0x68] sm:$0xf]
        %v280 = vld [vmem:[%s252 + $0x6c] sm:$0xf]
        %v281 = vld [vmem:[%s252 + $0x70] sm:$0xf]
        %v282 = vld [vmem:[%s252 + $0x74] sm:$0xf]
        %v283 = vld [vmem:[%s252 + $0x78] sm:$0xf]
        %v284 = vld [vmem:[%s252 + $0x7c] sm:$0xf]
        %v285 = vld [vmem:[%s252 + $0x80] sm:$0xf]
        %v286 = vld [vmem:[%s252 + $0x84] sm:$0xf]
        %v287 = vld [vmem:[%s252 + $0x88] sm:$0xf]
        %v288 = vld [vmem:[%s252 + $0x8c] sm:$0xf]
        %v289 = vld [vmem:[%s252 + $0x90] sm:$0xf]
        %v290 = vld [vmem:[%s252 + $0x94] sm:$0xf]
        %v291 = vld [vmem:[%s252 + $0x98] sm:$0xf]
        %v292 = vld [vmem:[%s252 + $0x9c] sm:$0xf]
        %v293 = vld [vmem:[%s252 + $0xa0] sm:$0xf]
        %v294 = vld [vmem:[%s252 + $0xa4] sm:$0xf]
        %v295 = vld [vmem:[%s252 + $0xa8] sm:$0xf]
        %v296 = vld [vmem:[%s252 + $0xac] sm:$0xf]
        %v297 = vld [vmem:[%s252 + $0xb0] sm:$0xf]
        %v298 = vld [vmem:[%s252 + $0xb4] sm:$0xf]
        %v299 = vld [vmem:[%s252 + $0xb8] sm:$0xf]
        %v300 = vld [vmem:[%s252 + $0xbc] sm:$0xf]
        %v301 = vld [vmem:[%s252 + $0xc0] sm:$0xf]
        %v302 = vld [vmem:[%s252 + $0xc4] sm:$0xf]
        %v303 = vld [vmem:[%s252 + $0xc8] sm:$0xf]
        %v304 = vld [vmem:[%s252 + $0xcc] sm:$0xf]
        %v305 = vld [vmem:[%s252 + $0xd0] sm:$0xf]
        %v306 = vld [vmem:[%s252 + $0xd4] sm:$0xf]
        %v307 = vld [vmem:[%s252 + $0xd8] sm:$0xf]
        %v308 = vld [vmem:[%s252 + $0xdc] sm:$0xf]
        %v309 = vld [vmem:[%s252 + $0xe0] sm:$0xf]
        %v310 = vld [vmem:[%s252 + $0xe4] sm:$0xf]
        %v311 = vld [vmem:[%s252 + $0xe8] sm:$0xf]
        %v312 = vld [vmem:[%s252 + $0xec] sm:$0xf]
        %v313 = vld [vmem:[%s252 + $0xf0] sm:$0xf]
        %v314 = vld [vmem:[%s252 + $0xf4] sm:$0xf]
        %v315 = vld [vmem:[%s252 + $0xf8] sm:$0xf]
        %v316 = vld [vmem:[%s252 + $0xfc] sm:$0xf]
        %v317 = vld [vmem:[#allocation2] sm:$0xff]
        %v318 = vld [vmem:[#allocation2 + $0x8] sm:$0xff]
        %v319 = vld [vmem:[#allocation2 + $0x10] sm:$0xff]
        %v320 = vld [vmem:[#allocation2 + $0x18] sm:$0xff]
        %v321 = vld [vmem:[#allocation2 + $0x20] sm:$0xff]
        %v322 = vld [vmem:[#allocation2 + $0x28] sm:$0xff]
        %v323 = vld [vmem:[#allocation2 + $0x30] sm:$0xff]
        %v324 = vld [vmem:[#allocation2 + $0x38] sm:$0xff]
        %v325 = vld [vmem:[#allocation2 + $0x40] sm:$0xff]
        %v326 = vld [vmem:[#allocation2 + $0x48] sm:$0xff]
        %v327 = vld [vmem:[#allocation2 + $0x50] sm:$0xff]
        %v328 = vld [vmem:[#allocation2 + $0x58] sm:$0xff]
        %v329 = vld [vmem:[#allocation2 + $0x60] sm:$0xff]
        %v330 = vld [vmem:[#allocation2 + $0x68] sm:$0xff]
        %v331 = vld [vmem:[#allocation2 + $0x70] sm:$0xff]
        %v332 = vld [vmem:[#allocation2 + $0x78] sm:$0xff]
        %v333 = vld [vmem:[#allocation2 + $0x80] sm:$0xff]
        %v334 = vld [vmem:[#allocation2 + $0x88] sm:$0xff]
        %v335 = vld [vmem:[#allocation2 + $0x90] sm:$0xff]
        %v336 = vld [vmem:[#allocation2 + $0x98] sm:$0xff]
        %v337 = vld [vmem:[#allocation2 + $0xa0] sm:$0xff]
        %v338 = vld [vmem:[#allocation2 + $0xa8] sm:$0xff]
        %v339 = vld [vmem:[#allocation2 + $0xb0] sm:$0xff]
        %v340 = vld [vmem:[#allocation2 + $0xb8] sm:$0xff]
        %v341 = vld [vmem:[#allocation2 + $0xc0] sm:$0xff]
        %v342 = vld [vmem:[#allocation2 + $0xc8] sm:$0xff]
        %v343 = vld [vmem:[#allocation2 + $0xd0] sm:$0xff]
        %v344 = vld [vmem:[#allocation2 + $0xd8] sm:$0xff]
        %v345 = vld [vmem:[#allocation2 + $0xe0] sm:$0xff]
        %v346 = vld [vmem:[#allocation2 + $0xe8] sm:$0xff]
        %v347 = vld [vmem:[#allocation2 + $0xf0] sm:$0xff]
        %v348 = vld [vmem:[#allocation2 + $0xf8] sm:$0xff]
        %v349 = vld [vmem:[%s180] sm:$0xff]
        %v350 = vld [vmem:[%s180 + $0x8] sm:$0xff]
        %v351 = vld [vmem:[%s180 + $0x10] sm:$0xff]
        %v352 = vld [vmem:[%s180 + $0x18] sm:$0xff]
        %v353 = vld [vmem:[%s180 + $0x20] sm:$0xff]
        %v354 = vld [vmem:[%s180 + $0x28] sm:$0xff]
        %v355 = vld [vmem:[%s180 + $0x30] sm:$0xff]
        %v356 = vld [vmem:[%s180 + $0x38] sm:$0xff]
        %v357 = vld [vmem:[%s180 + $0x40] sm:$0xff]
        %v358 = vld [vmem:[%s180 + $0x48] sm:$0xff]
        %v359 = vld [vmem:[%s180 + $0x50] sm:$0xff]
        %v360 = vld [vmem:[%s180 + $0x58] sm:$0xff]
        %v361 = vld [vmem:[%s180 + $0x60] sm:$0xff]
        %v362 = vld [vmem:[%s180 + $0x68] sm:$0xff]
        %v363 = vld [vmem:[%s180 + $0x70] sm:$0xff]
        %v364 = vld [vmem:[%s180 + $0x78] sm:$0xff]
        %v365 = vld [vmem:[%s180 + $0x80] sm:$0xff]
        %v366 = vld [vmem:[%s180 + $0x88] sm:$0xff]
        %v367 = vld [vmem:[%s180 + $0x90] sm:$0xff]
        %v368 = vld [vmem:[%s180 + $0x98] sm:$0xff]
        %v369 = vld [vmem:[%s180 + $0xa0] sm:$0xff]
        %v370 = vld [vmem:[%s180 + $0xa8] sm:$0xff]
        %v371 = vld [vmem:[%s180 + $0xb0] sm:$0xff]
        %v372 = vld [vmem:[%s180 + $0xb8] sm:$0xff]
        %v373 = vld [vmem:[%s180 + $0xc0] sm:$0xff]
        %v374 = vld [vmem:[%s180 + $0xc8] sm:$0xff]
        %v375 = vld [vmem:[%s180 + $0xd0] sm:$0xff]
        %v376 = vld [vmem:[%s180 + $0xd8] sm:$0xff]
        %v377 = vld [vmem:[%s180 + $0xe0] sm:$0xff]
        %v378 = vld [vmem:[%s180 + $0xe8] sm:$0xff]
        %v379 = vld [vmem:[%s180 + $0xf0] sm:$0xff]
        %v380 = vld [vmem:[%s180 + $0xf8] sm:$0xff]
        %v381 = vld [vmem:[%s180 + $0x100] sm:$0xff]
        %v382 = vld [vmem:[%s180 + $0x108] sm:$0xff]
        %v383 = vld [vmem:[%s180 + $0x110] sm:$0xff]
        %v384 = vld [vmem:[%s180 + $0x118] sm:$0xff]
        %v385 = vld [vmem:[%s180 + $0x120] sm:$0xff]
        %v386 = vld [vmem:[%s180 + $0x128] sm:$0xff]
        %v387 = vld [vmem:[%s180 + $0x130] sm:$0xff]
        %v388 = vld [vmem:[%s180 + $0x138] sm:$0xff]
        %v389 = vld [vmem:[%s180 + $0x140] sm:$0xff]
        %v390 = vld [vmem:[%s180 + $0x148] sm:$0xff]
        %v391 = vld [vmem:[%s180 + $0x150] sm:$0xff]
        %v392 = vld [vmem:[%s180 + $0x158] sm:$0xff]
        %v393 = vld [vmem:[%s180 + $0x160] sm:$0xff]
        %v394 = vld [vmem:[%s180 + $0x168] sm:$0xff]
        %v395 = vld [vmem:[%s180 + $0x170] sm:$0xff]
        %v396 = vld [vmem:[%s180 + $0x178] sm:$0xff]
        %v397 = vld [vmem:[%s180 + $0x180] sm:$0xff]
        %v398 = vld [vmem:[%s180 + $0x188] sm:$0xff]
        %v399 = vld [vmem:[%s180 + $0x190] sm:$0xff]
        %v400 = vld [vmem:[%s180 + $0x198] sm:$0xff]
        %v401 = vld [vmem:[%s180 + $0x1a0] sm:$0xff]
        %v402 = vld [vmem:[%s180 + $0x1a8] sm:$0xff]
        %v403 = vld [vmem:[%s180 + $0x1b0] sm:$0xff]
        %v404 = vld [vmem:[%s180 + $0x1b8] sm:$0xff]
        %v405 = vld [vmem:[%s180 + $0x1c0] sm:$0xff]
        %v406 = vld [vmem:[%s180 + $0x1c8] sm:$0xff]
        %v407 = vld [vmem:[%s180 + $0x1d0] sm:$0xff]
        %v408 = vld [vmem:[%s180 + $0x1d8] sm:$0xff]
        %v409 = vld [vmem:[%s180 + $0x1e0] sm:$0xff]
        %v410 = vld [vmem:[%s180 + $0x1e8] sm:$0xff]
        %v411 = vld [vmem:[%s180 + $0x1f0] sm:$0xff]
        %v412 = vld [vmem:[%s180 + $0x1f8] sm:$0xff]
        %v477 = vunpack.c.l.b16 %v349
        %v478 = vunpack.c.h.b16 %v349
        %v479 = vunpack.c.l.b16 %v350
        %v480 = vunpack.c.h.b16 %v350
        %v481 = vunpack.c.l.b16 %v351
        %v482 = vunpack.c.h.b16 %v351
        %v483 = vunpack.c.l.b16 %v352
        %v484 = vunpack.c.h.b16 %v352
        %v485 = vunpack.c.l.b16 %v353
        %v486 = vunpack.c.h.b16 %v353
        %v487 = vunpack.c.l.b16 %v354
        %v488 = vunpack.c.h.b16 %v354
        %v489 = vunpack.c.l.b16 %v355
        %v490 = vunpack.c.h.b16 %v355
        %v491 = vunpack.c.l.b16 %v356
        %v492 = vunpack.c.h.b16 %v356
        %v493 = vunpack.c.l.b16 %v357
        %v494 = vunpack.c.h.b16 %v357
        %v495 = vunpack.c.l.b16 %v358
        %v496 = vunpack.c.h.b16 %v358
        %v497 = vunpack.c.l.b16 %v359
        %v498 = vunpack.c.h.b16 %v359
        %v499 = vunpack.c.l.b16 %v360
        %v500 = vunpack.c.h.b16 %v360
        %v501 = vunpack.c.l.b16 %v361
        %v502 = vunpack.c.h.b16 %v361
        %v503 = vunpack.c.l.b16 %v362
        %v504 = vunpack.c.h.b16 %v362
        %v505 = vunpack.c.l.b16 %v363
        %v506 = vunpack.c.h.b16 %v363
        %v507 = vunpack.c.l.b16 %v364
        %v508 = vunpack.c.h.b16 %v364
        %v509 = vunpack.c.l.b16 %v365
        %v510 = vunpack.c.h.b16 %v365
        %v511 = vunpack.c.l.b16 %v366
        %v512 = vunpack.c.h.b16 %v366
        %v513 = vunpack.c.l.b16 %v367
        %v514 = vunpack.c.h.b16 %v367
        %v515 = vunpack.c.l.b16 %v368
        %v516 = vunpack.c.h.b16 %v368
        %v517 = vunpack.c.l.b16 %v369
        %v518 = vunpack.c.h.b16 %v369
        %v519 = vunpack.c.l.b16 %v370
        %v520 = vunpack.c.h.b16 %v370
        %v521 = vunpack.c.l.b16 %v371
        %v522 = vunpack.c.h.b16 %v371
        %v523 = vunpack.c.l.b16 %v372
        %v524 = vunpack.c.h.b16 %v372
        %v525 = vunpack.c.l.b16 %v373
        %v526 = vunpack.c.h.b16 %v373
        %v527 = vunpack.c.l.b16 %v374
        %v528 = vunpack.c.h.b16 %v374
        %v529 = vunpack.c.l.b16 %v375
        %v530 = vunpack.c.h.b16 %v375
        %v531 = vunpack.c.l.b16 %v376
        %v532 = vunpack.c.h.b16 %v376
        %v533 = vunpack.c.l.b16 %v377
        %v534 = vunpack.c.h.b16 %v377
        %v535 = vunpack.c.l.b16 %v378
        %v536 = vunpack.c.h.b16 %v378
        %v537 = vunpack.c.l.b16 %v379
        %v538 = vunpack.c.h.b16 %v379
        %v539 = vunpack.c.l.b16 %v380
        %v540 = vunpack.c.h.b16 %v380
        %v541 = vunpack.c.l.b16 %v381
        %v542 = vunpack.c.h.b16 %v381
        %v543 = vunpack.c.l.b16 %v382
        %v544 = vunpack.c.h.b16 %v382
        %v545 = vunpack.c.l.b16 %v383
        %v546 = vunpack.c.h.b16 %v383
        %v547 = vunpack.c.l.b16 %v384
        %v548 = vunpack.c.h.b16 %v384
        %v549 = vunpack.c.l.b16 %v385
        %v550 = vunpack.c.h.b16 %v385
        %v551 = vunpack.c.l.b16 %v386
        %v552 = vunpack.c.h.b16 %v386
        %v553 = vunpack.c.l.b16 %v387
        %v554 = vunpack.c.h.b16 %v387
        %v555 = vunpack.c.l.b16 %v388
        %v556 = vunpack.c.h.b16 %v388
        %v557 = vunpack.c.l.b16 %v389
        %v558 = vunpack.c.h.b16 %v389
        %v559 = vunpack.c.l.b16 %v390
        %v560 = vunpack.c.h.b16 %v390
        %v561 = vunpack.c.l.b16 %v391
        %v562 = vunpack.c.h.b16 %v391
        %v563 = vunpack.c.l.b16 %v392
        %v564 = vunpack.c.h.b16 %v392
        %v565 = vunpack.c.l.b16 %v393
        %v566 = vunpack.c.h.b16 %v393
        %v567 = vunpack.c.l.b16 %v394
        %v568 = vunpack.c.h.b16 %v394
        %v569 = vunpack.c.l.b16 %v395
        %v570 = vunpack.c.h.b16 %v395
        %v571 = vunpack.c.l.b16 %v396
        %v572 = vunpack.c.h.b16 %v396
        %v573 = vunpack.c.l.b16 %v397
        %v574 = vunpack.c.h.b16 %v397
        %v575 = vunpack.c.l.b16 %v398
        %v576 = vunpack.c.h.b16 %v398
        %v577 = vunpack.c.l.b16 %v399
        %v578 = vunpack.c.h.b16 %v399
        %v579 = vunpack.c.l.b16 %v400
        %v580 = vunpack.c.h.b16 %v400
        %v581 = vunpack.c.l.b16 %v401
        %v582 = vunpack.c.h.b16 %v401
        %v583 = vunpack.c.l.b16 %v402
        %v584 = vunpack.c.h.b16 %v402
        %v585 = vunpack.c.l.b16 %v403
        %v586 = vunpack.c.h.b16 %v403
        %v587 = vunpack.c.l.b16 %v404
        %v588 = vunpack.c.h.b16 %v404
        %v589 = vunpack.c.l.b16 %v405
        %v590 = vunpack.c.h.b16 %v405
        %v591 = vunpack.c.l.b16 %v406
        %v592 = vunpack.c.h.b16 %v406
        %v593 = vunpack.c.l.b16 %v407
        %v594 = vunpack.c.h.b16 %v407
        %v595 = vunpack.c.l.b16 %v408
        %v596 = vunpack.c.h.b16 %v408
        %v597 = vunpack.c.l.b16 %v409
        %v598 = vunpack.c.h.b16 %v409
        %v599 = vunpack.c.l.b16 %v410
        %v600 = vunpack.c.h.b16 %v410
        %v601 = vunpack.c.l.b16 %v411
        %v602 = vunpack.c.h.b16 %v411
        %v603 = vunpack.c.l.b16 %v412
        %v604 = vunpack.c.h.b16 %v412
        %v605 = vpack.c.b16 %v481, %v477
        %v606 = vpack.c.b16 %v482, %v478
        %v607 = vpack.c.b16 %v483, %v479
        %v608 = vpack.c.b16 %v484, %v480
        %v609 = vpack.c.b16 %v489, %v485
        %v610 = vpack.c.b16 %v490, %v486
        %v611 = vpack.c.b16 %v491, %v487
        %v612 = vpack.c.b16 %v492, %v488
        %v613 = vpack.c.b16 %v497, %v493
        %v614 = vpack.c.b16 %v498, %v494
        %v615 = vpack.c.b16 %v499, %v495
        %v616 = vpack.c.b16 %v500, %v496
        %v617 = vpack.c.b16 %v505, %v501
        %v618 = vpack.c.b16 %v506, %v502
        %v619 = vpack.c.b16 %v507, %v503
        %v620 = vpack.c.b16 %v508, %v504
        %v621 = vpack.c.b16 %v513, %v509
        %v622 = vpack.c.b16 %v514, %v510
        %v623 = vpack.c.b16 %v515, %v511
        %v624 = vpack.c.b16 %v516, %v512
        %v625 = vpack.c.b16 %v521, %v517
        %v626 = vpack.c.b16 %v522, %v518
        %v627 = vpack.c.b16 %v523, %v519
        %v628 = vpack.c.b16 %v524, %v520
        %v629 = vpack.c.b16 %v529, %v525
        %v630 = vpack.c.b16 %v530, %v526
        %v631 = vpack.c.b16 %v531, %v527
        %v632 = vpack.c.b16 %v532, %v528
        %v633 = vpack.c.b16 %v537, %v533
        %v634 = vpack.c.b16 %v538, %v534
        %v635 = vpack.c.b16 %v539, %v535
        %v636 = vpack.c.b16 %v540, %v536
        %v637 = vpack.c.b16 %v545, %v541
        %v638 = vpack.c.b16 %v546, %v542
        %v639 = vpack.c.b16 %v547, %v543
        %v640 = vpack.c.b16 %v548, %v544
        %v641 = vpack.c.b16 %v553, %v549
        %v642 = vpack.c.b16 %v554, %v550
        %v643 = vpack.c.b16 %v555, %v551
        %v644 = vpack.c.b16 %v556, %v552
        %v645 = vpack.c.b16 %v561, %v557
        %v646 = vpack.c.b16 %v562, %v558
        %v647 = vpack.c.b16 %v563, %v559
        %v648 = vpack.c.b16 %v564, %v560
        %v649 = vpack.c.b16 %v569, %v565
        %v650 = vpack.c.b16 %v570, %v566
        %v651 = vpack.c.b16 %v571, %v567
        %v652 = vpack.c.b16 %v572, %v568
        %v653 = vpack.c.b16 %v577, %v573
        %v654 = vpack.c.b16 %v578, %v574
        %v655 = vpack.c.b16 %v579, %v575
        %v656 = vpack.c.b16 %v580, %v576
        %v657 = vpack.c.b16 %v585, %v581
        %v658 = vpack.c.b16 %v586, %v582
        %v659 = vpack.c.b16 %v587, %v583
        %v660 = vpack.c.b16 %v588, %v584
        %v661 = vpack.c.b16 %v593, %v589
        %v662 = vpack.c.b16 %v594, %v590
        %v663 = vpack.c.b16 %v595, %v591
        %v664 = vpack.c.b16 %v596, %v592
        %v665 = vpack.c.b16 %v601, %v597
        %v666 = vpack.c.b16 %v602, %v598
        %v667 = vpack.c.b16 %v603, %v599
        %v668 = vpack.c.b16 %v604, %v600
        %v797 = vunpack.c.l.b16 %v253
        %v798 = vunpack.c.l.b16 %v254
        %v799 = vunpack.c.l.b16 %v255
        %v800 = vunpack.c.l.b16 %v256
        %v801 = vunpack.c.l.b16 %v257
        %v802 = vunpack.c.l.b16 %v258
        %v803 = vunpack.c.l.b16 %v259
        %v804 = vunpack.c.l.b16 %v260
        %v805 = vunpack.c.l.b16 %v261
        %v806 = vunpack.c.l.b16 %v262
        %v807 = vunpack.c.l.b16 %v263
        %v808 = vunpack.c.l.b16 %v264
        %v809 = vunpack.c.l.b16 %v265
        %v810 = vunpack.c.l.b16 %v266
        %v811 = vunpack.c.l.b16 %v267
        %v812 = vunpack.c.l.b16 %v268
        %v813 = vunpack.c.l.b16 %v269
        %v814 = vunpack.c.l.b16 %v270
        %v815 = vunpack.c.l.b16 %v271
        %v816 = vunpack.c.l.b16 %v272
        %v817 = vunpack.c.l.b16 %v273
        %v818 = vunpack.c.l.b16 %v274
        %v819 = vunpack.c.l.b16 %v275
        %v820 = vunpack.c.l.b16 %v276
        %v821 = vunpack.c.l.b16 %v277
        %v822 = vunpack.c.l.b16 %v278
        %v823 = vunpack.c.l.b16 %v279
        %v824 = vunpack.c.l.b16 %v280
        %v825 = vunpack.c.l.b16 %v281
        %v826 = vunpack.c.l.b16 %v282
        %v827 = vunpack.c.l.b16 %v283
        %v828 = vunpack.c.l.b16 %v284
        %v829 = vunpack.c.l.b16 %v285
        %v830 = vunpack.c.l.b16 %v286
        %v831 = vunpack.c.l.b16 %v287
        %v832 = vunpack.c.l.b16 %v288
        %v833 = vunpack.c.l.b16 %v289
        %v834 = vunpack.c.l.b16 %v290
        %v835 = vunpack.c.l.b16 %v291
        %v836 = vunpack.c.l.b16 %v292
        %v837 = vunpack.c.l.b16 %v293
        %v838 = vunpack.c.l.b16 %v294
        %v839 = vunpack.c.l.b16 %v295
        %v840 = vunpack.c.l.b16 %v296
        %v841 = vunpack.c.l.b16 %v297
        %v842 = vunpack.c.l.b16 %v298
        %v843 = vunpack.c.l.b16 %v299
        %v844 = vunpack.c.l.b16 %v300
        %v845 = vunpack.c.l.b16 %v301
        %v846 = vunpack.c.l.b16 %v302
        %v847 = vunpack.c.l.b16 %v303
        %v848 = vunpack.c.l.b16 %v304
        %v849 = vunpack.c.l.b16 %v305
        %v850 = vunpack.c.l.b16 %v306
        %v851 = vunpack.c.l.b16 %v307
        %v852 = vunpack.c.l.b16 %v308
        %v853 = vunpack.c.l.b16 %v309
        %v854 = vunpack.c.l.b16 %v310
        %v855 = vunpack.c.l.b16 %v311
        %v856 = vunpack.c.l.b16 %v312
        %v857 = vunpack.c.l.b16 %v313
        %v858 = vunpack.c.l.b16 %v314
        %v859 = vunpack.c.l.b16 %v315
        %v860 = vunpack.c.l.b16 %v316
        %v861 = vpack.c.b16 %v798, %v797
        %v862 = vpack.c.b16 %v800, %v799
        %v863 = vpack.c.b16 %v802, %v801
        %v864 = vpack.c.b16 %v804, %v803
        %v865 = vpack.c.b16 %v806, %v805
        %v866 = vpack.c.b16 %v808, %v807
        %v867 = vpack.c.b16 %v810, %v809
        %v868 = vpack.c.b16 %v812, %v811
        %v869 = vpack.c.b16 %v814, %v813
        %v870 = vpack.c.b16 %v816, %v815
        %v871 = vpack.c.b16 %v818, %v817
        %v872 = vpack.c.b16 %v820, %v819
        %v873 = vpack.c.b16 %v822, %v821
        %v874 = vpack.c.b16 %v824, %v823
        %v875 = vpack.c.b16 %v826, %v825
        %v876 = vpack.c.b16 %v828, %v827
        %v877 = vpack.c.b16 %v830, %v829
        %v878 = vpack.c.b16 %v832, %v831
        %v879 = vpack.c.b16 %v834, %v833
        %v880 = vpack.c.b16 %v836, %v835
        %v881 = vpack.c.b16 %v838, %v837
        %v882 = vpack.c.b16 %v840, %v839
        %v883 = vpack.c.b16 %v842, %v841
        %v884 = vpack.c.b16 %v844, %v843
        %v885 = vpack.c.b16 %v846, %v845
        %v886 = vpack.c.b16 %v848, %v847
        %v887 = vpack.c.b16 %v850, %v849
        %v888 = vpack.c.b16 %v852, %v851
        %v889 = vpack.c.b16 %v854, %v853
        %v890 = vpack.c.b16 %v856, %v855
        %v891 = vpack.c.b16 %v858, %v857
        %v892 = vpack.c.b16 %v860, %v859
        %925 = vmatprep.subr.bf16.mxu0 0
        %926 = vmatpush1.bf16.msra.mxu0 %v861
        %927 = vmatprep.subr.bf16.mxu0 0
        %928 = vmatpush1.bf16.msra.mxu0 %v862
        %929 = vmatprep.subr.bf16.mxu0 0
        %930 = vmatpush1.bf16.msra.mxu0 %v863
        %931 = vmatprep.subr.bf16.mxu0 0
        %932 = vmatpush1.bf16.msra.mxu0 %v864
        %933 = vmatprep.subr.bf16.mxu0 0
        %934 = vmatpush1.bf16.msra.mxu0 %v865
        %935 = vmatprep.subr.bf16.mxu0 0
        %936 = vmatpush1.bf16.msra.mxu0 %v866
        %937 = vmatprep.subr.bf16.mxu0 0
        %938 = vmatpush1.bf16.msra.mxu0 %v867
        %939 = vmatprep.subr.bf16.mxu0 0
        %940 = vmatpush1.bf16.msra.mxu0 %v868
        %941 = vmatprep.subr.bf16.mxu0 0
        %942 = vmatpush1.bf16.msra.mxu0 %v869
        %943 = vmatprep.subr.bf16.mxu0 0
        %944 = vmatpush1.bf16.msra.mxu0 %v870
        %945 = vmatprep.subr.bf16.mxu0 0
        %946 = vmatpush1.bf16.msra.mxu0 %v871
        %947 = vmatprep.subr.bf16.mxu0 0
        %948 = vmatpush1.bf16.msra.mxu0 %v872
        %949 = vmatprep.subr.bf16.mxu0 0
        %950 = vmatpush1.bf16.msra.mxu0 %v873
        %951 = vmatprep.subr.bf16.mxu0 0
        %952 = vmatpush1.bf16.msra.mxu0 %v874
        %953 = vmatprep.subr.bf16.mxu0 0
        %954 = vmatpush1.bf16.msra.mxu0 %v875
        %955 = vmatprep.subr.bf16.mxu0 0
        %956 = vmatpush1.bf16.msra.mxu0 %v876
        %957 = vmatprep.mubr.bf16.mxu0 %v606
        %958 = vmatmul.mubr.bf16.gmra.mrb[0].mxu0 %v605
        %v959 = vpop.f32.mrb[0].mxu0
        %v960 = vadd.f32 0.0, %v959
        %v961 = vpop.f32.mrb[0].mxu0
        %v962 = vpop.f32.mrb[0].mxu0
        %v963 = vadd.f32 0.0, %v962
        %v964 = vpop.f32.mrb[0].mxu0
        %965 = vmatprep.mubr.bf16.mxu0 %v610
        %966 = vmatmul.mubr.bf16.gmra.mrb[0].mxu0 %v609
        %v967 = vpop.f32.mrb[0].mxu0
        %v968 = vadd.f32 0.0, %v967
        %v969 = vpop.f32.mrb[0].mxu0
        %v970 = vpop.f32.mrb[0].mxu0
        %v971 = vadd.f32 0.0, %v970
        %v972 = vpop.f32.mrb[0].mxu0
        %973 = vmatprep.mubr.bf16.mxu0 %v614
        %974 = vmatmul.mubr.bf16.gmra.mrb[0].mxu0 %v613
        %v975 = vpop.f32.mrb[0].mxu0
        %v976 = vadd.f32 0.0, %v975
        %v977 = vpop.f32.mrb[0].mxu0
        %v978 = vpop.f32.mrb[0].mxu0
        %v979 = vadd.f32 0.0, %v978
        %v980 = vpop.f32.mrb[0].mxu0
        %981 = vmatprep.mubr.bf16.mxu0 %v618
        %982 = vmatmul.mubr.bf16.gmra.mrb[0].mxu0 %v617
        %v983 = vpop.f32.mrb[0].mxu0
        %v984 = vadd.f32 0.0, %v983
        %v985 = vpop.f32.mrb[0].mxu0
        %v986 = vpop.f32.mrb[0].mxu0
        %v987 = vadd.f32 0.0, %v986
        %v988 = vpop.f32.mrb[0].mxu0
        %989 = vmatprep.mubr.bf16.mxu0 %v622
        %990 = vmatmul.mubr.bf16.gmra.mrb[0].mxu0 %v621
        %v991 = vpop.f32.mrb[0].mxu0
        %v992 = vadd.f32 0.0, %v991
        %v993 = vpop.f32.mrb[0].mxu0
        %v994 = vpop.f32.mrb[0].mxu0
        %v995 = vadd.f32 0.0, %v994
        %v996 = vpop.f32.mrb[0].mxu0
        %997 = vmatprep.mubr.bf16.mxu0 %v626
        %998 = vmatmul.mubr.bf16.gmra.mrb[0].mxu0 %v625
        %v999 = vpop.f32.mrb[0].mxu0
        %v1000 = vadd.f32 0.0, %v999
        %v1001 = vpop.f32.mrb[0].mxu0
        %v1002 = vpop.f32.mrb[0].mxu0
        %v1003 = vadd.f32 0.0, %v1002
        %v1004 = vpop.f32.mrb[0].mxu0
        %1005 = vmatprep.mubr.bf16.mxu0 %v630
        %1006 = vmatmul.mubr.bf16.gmra.mrb[0].mxu0 %v629
        %v1007 = vpop.f32.mrb[0].mxu0
        %v1008 = vadd.f32 0.0, %v1007
        %v1009 = vpop.f32.mrb[0].mxu0
        %v1010 = vpop.f32.mrb[0].mxu0
        %v1011 = vadd.f32 0.0, %v1010
        %v1012 = vpop.f32.mrb[0].mxu0
        %1013 = vmatprep.mubr.bf16.mxu0 %v634
        %1014 = vmatmul.mubr.bf16.gmra.mrb[0].mxu0 %v633
        %v1015 = vpop.f32.mrb[0].mxu0
        %v1016 = vadd.f32 0.0, %v1015
        %v1017 = vpop.f32.mrb[0].mxu0
        %v1018 = vpop.f32.mrb[0].mxu0
        %v1019 = vadd.f32 0.0, %v1018
        %v1020 = vpop.f32.mrb[0].mxu0
        %1021 = vmatprep.mubr.bf16.mxu0 %v638
        %1022 = vmatmul.mubr.bf16.gmra.mrb[0].mxu0 %v637
        %v1023 = vpop.f32.mrb[0].mxu0
        %v1024 = vadd.f32 0.0, %v1023
        %v1025 = vpop.f32.mrb[0].mxu0
        %v1026 = vpop.f32.mrb[0].mxu0
        %v1027 = vadd.f32 0.0, %v1026
        %v1028 = vpop.f32.mrb[0].mxu0
        %1029 = vmatprep.mubr.bf16.mxu0 %v642
        %1030 = vmatmul.mubr.bf16.gmra.mrb[0].mxu0 %v641
        %v1031 = vpop.f32.mrb[0].mxu0
        %v1032 = vadd.f32 0.0, %v1031
        %v1033 = vpop.f32.mrb[0].mxu0
        %v1034 = vpop.f32.mrb[0].mxu0
        %v1035 = vadd.f32 0.0, %v1034
        %v1036 = vpop.f32.mrb[0].mxu0
        %1037 = vmatprep.mubr.bf16.mxu0 %v646
        %1038 = vmatmul.mubr.bf16.gmra.mrb[0].mxu0 %v645
        %v1039 = vpop.f32.mrb[0].mxu0
        %v1040 = vadd.f32 0.0, %v1039
        %v1041 = vpop.f32.mrb[0].mxu0
        %v1042 = vpop.f32.mrb[0].mxu0
        %v1043 = vadd.f32 0.0, %v1042
        %v1044 = vpop.f32.mrb[0].mxu0
        %1045 = vmatprep.mubr.bf16.mxu0 %v650
        %1046 = vmatmul.mubr.bf16.gmra.mrb[0].mxu0 %v649
        %v1047 = vpop.f32.mrb[0].mxu0
        %v1048 = vadd.f32 0.0, %v1047
        %v1049 = vpop.f32.mrb[0].mxu0
        %v1050 = vpop.f32.mrb[0].mxu0
        %v1051 = vadd.f32 0.0, %v1050
        %v1052 = vpop.f32.mrb[0].mxu0
        %1053 = vmatprep.mubr.bf16.mxu0 %v654
        %1054 = vmatmul.mubr.bf16.gmra.mrb[0].mxu0 %v653
        %v1055 = vpop.f32.mrb[0].mxu0
        %v1056 = vadd.f32 0.0, %v1055
        %v1057 = vpop.f32.mrb[0].mxu0
        %v1058 = vpop.f32.mrb[0].mxu0
        %v1059 = vadd.f32 0.0, %v1058
        %v1060 = vpop.f32.mrb[0].mxu0
        %1061 = vmatprep.mubr.bf16.mxu0 %v658
        %1062 = vmatmul.mubr.bf16.gmra.mrb[0].mxu0 %v657
        %v1063 = vpop.f32.mrb[0].mxu0
        %v1064 = vadd.f32 0.0, %v1063
        %v1065 = vpop.f32.mrb[0].mxu0
        %v1066 = vpop.f32.mrb[0].mxu0
        %v1067 = vadd.f32 0.0, %v1066
        %v1068 = vpop.f32.mrb[0].mxu0
        %1069 = vmatprep.mubr.bf16.mxu0 %v662
        %1070 = vmatmul.mubr.bf16.gmra.mrb[0].mxu0 %v661
        %v1071 = vpop.f32.mrb[0].mxu0
        %v1072 = vadd.f32 0.0, %v1071
        %v1073 = vpop.f32.mrb[0].mxu0
        %v1074 = vpop.f32.mrb[0].mxu0
        %v1075 = vadd.f32 0.0, %v1074
        %v1076 = vpop.f32.mrb[0].mxu0
        %1077 = vmatprep.mubr.bf16.mxu0 %v666
        %1078 = vmatmul.mubr.bf16.gmra.mrb[0].mxu0 %v665
        %v1079 = vpop.f32.mrb[0].mxu0
        %v1080 = vadd.f32 0.0, %v1079
        %v1081 = vpop.f32.mrb[0].mxu0
        %v1082 = vpop.f32.mrb[0].mxu0
        %v1083 = vadd.f32 0.0, %v1082
        %v1084 = vpop.f32.mrb[0].mxu0
        %1085 = vdwg.mxu0
        %1086 = vmatprep.subr.bf16.mxu0 0
        %1087 = vmatpush1.bf16.msra.mxu0 %v877
        %1088 = vmatprep.subr.bf16.mxu0 0
        %1089 = vmatpush1.bf16.msra.mxu0 %v878
        %1090 = vmatprep.subr.bf16.mxu0 0
        %1091 = vmatpush1.bf16.msra.mxu0 %v879
        %1092 = vmatprep.subr.bf16.mxu0 0
        %1093 = vmatpush1.bf16.msra.mxu0 %v880
        %1094 = vmatprep.subr.bf16.mxu0 0
        %1095 = vmatpush1.bf16.msra.mxu0 %v881
        %1096 = vmatprep.subr.bf16.mxu0 0
        %1097 = vmatpush1.bf16.msra.mxu0 %v882
        %1098 = vmatprep.subr.bf16.mxu0 0
        %1099 = vmatpush1.bf16.msra.mxu0 %v883
        %1100 = vmatprep.subr.bf16.mxu0 0
        %1101 = vmatpush1.bf16.msra.mxu0 %v884
        %1102 = vmatprep.subr.bf16.mxu0 0
        %1103 = vmatpush1.bf16.msra.mxu0 %v885
        %1104 = vmatprep.subr.bf16.mxu0 0
        %1105 = vmatpush1.bf16.msra.mxu0 %v886
        %1106 = vmatprep.subr.bf16.mxu0 0
        %1107 = vmatpush1.bf16.msra.mxu0 %v887
        %1108 = vmatprep.subr.bf16.mxu0 0
        %1109 = vmatpush1.bf16.msra.mxu0 %v888
        %1110 = vmatprep.subr.bf16.mxu0 0
        %1111 = vmatpush1.bf16.msra.mxu0 %v889
        %1112 = vmatprep.subr.bf16.mxu0 0
        %1113 = vmatpush1.bf16.msra.mxu0 %v890
        %1114 = vmatprep.subr.bf16.mxu0 0
        %1115 = vmatpush1.bf16.msra.mxu0 %v891
        %1116 = vmatprep.subr.bf16.mxu0 0
        %1117 = vmatpush1.bf16.msra.mxu0 %v892
        %1118 = vmatprep.mubr.bf16.mxu0 %v608
        %1119 = vmatmul.mubr.bf16.gmra.mrb[0].mxu0 %v607
        %v1120 = vpop.f32.mrb[0].mxu0
        %v1121 = vadd.f32 %v960, %v1120
        %v1122 = vpop.f32.mrb[0].mxu0
        %v1123 = vpop.f32.mrb[0].mxu0
        %v1124 = vadd.f32 %v963, %v1123
        %v1125 = vpop.f32.mrb[0].mxu0
        %1126 = vmatprep.mubr.bf16.mxu0 %v612
        %1127 = vmatmul.mubr.bf16.gmra.mrb[0].mxu0 %v611
        %v1128 = vpop.f32.mrb[0].mxu0
        %v1129 = vadd.f32 %v968, %v1128
        %v1130 = vpop.f32.mrb[0].mxu0
        %v1131 = vpop.f32.mrb[0].mxu0
        %v1132 = vadd.f32 %v971, %v1131
        %v1133 = vpop.f32.mrb[0].mxu0
        %1134 = vmatprep.mubr.bf16.mxu0 %v616
        %1135 = vmatmul.mubr.bf16.gmra.mrb[0].mxu0 %v615
        %v1136 = vpop.f32.mrb[0].mxu0
        %v1137 = vadd.f32 %v976, %v1136
        %v1138 = vpop.f32.mrb[0].mxu0
        %v1139 = vpop.f32.mrb[0].mxu0
        %v1140 = vadd.f32 %v979, %v1139
        %v1141 = vpop.f32.mrb[0].mxu0
        %1142 = vmatprep.mubr.bf16.mxu0 %v620
        %1143 = vmatmul.mubr.bf16.gmra.mrb[0].mxu0 %v619
        %v1144 = vpop.f32.mrb[0].mxu0
        %v1145 = vadd.f32 %v984, %v1144
        %v1146 = vpop.f32.mrb[0].mxu0
        %v1147 = vpop.f32.mrb[0].mxu0
        %v1148 = vadd.f32 %v987, %v1147
        %v1149 = vpop.f32.mrb[0].mxu0
        %1150 = vmatprep.mubr.bf16.mxu0 %v624
        %1151 = vmatmul.mubr.bf16.gmra.mrb[0].mxu0 %v623
        %v1152 = vpop.f32.mrb[0].mxu0
        %v1153 = vadd.f32 %v992, %v1152
        %v1154 = vpop.f32.mrb[0].mxu0
        %v1155 = vpop.f32.mrb[0].mxu0
        %v1156 = vadd.f32 %v995, %v1155
        %v1157 = vpop.f32.mrb[0].mxu0
        %1158 = vmatprep.mubr.bf16.mxu0 %v628
        %1159 = vmatmul.mubr.bf16.gmra.mrb[0].mxu0 %v627
        %v1160 = vpop.f32.mrb[0].mxu0
        %v1161 = vadd.f32 %v1000, %v1160
        %v1162 = vpop.f32.mrb[0].mxu0
        %v1163 = vpop.f32.mrb[0].mxu0
        %v1164 = vadd.f32 %v1003, %v1163
        %v1165 = vpop.f32.mrb[0].mxu0
        %1166 = vmatprep.mubr.bf16.mxu0 %v632
        %1167 = vmatmul.mubr.bf16.gmra.mrb[0].mxu0 %v631
        %v1168 = vpop.f32.mrb[0].mxu0
        %v1169 = vadd.f32 %v1008, %v1168
        %v1170 = vpop.f32.mrb[0].mxu0
        %v1171 = vpop.f32.mrb[0].mxu0
        %v1172 = vadd.f32 %v1011, %v1171
        %v1173 = vpop.f32.mrb[0].mxu0
        %1174 = vmatprep.mubr.bf16.mxu0 %v636
        %1175 = vmatmul.mubr.bf16.gmra.mrb[0].mxu0 %v635
        %v1176 = vpop.f32.mrb[0].mxu0
        %v1177 = vadd.f32 %v1016, %v1176
        %v1178 = vpop.f32.mrb[0].mxu0
        %v1179 = vpop.f32.mrb[0].mxu0
        %v1180 = vadd.f32 %v1019, %v1179
        %v1181 = vpop.f32.mrb[0].mxu0
        %1182 = vmatprep.mubr.bf16.mxu0 %v640
        %1183 = vmatmul.mubr.bf16.gmra.mrb[0].mxu0 %v639
        %v1184 = vpop.f32.mrb[0].mxu0
        %v1185 = vadd.f32 %v1024, %v1184
        %v1186 = vpop.f32.mrb[0].mxu0
        %v1187 = vpop.f32.mrb[0].mxu0
        %v1188 = vadd.f32 %v1027, %v1187
        %v1189 = vpop.f32.mrb[0].mxu0
        %1190 = vmatprep.mubr.bf16.mxu0 %v644
        %1191 = vmatmul.mubr.bf16.gmra.mrb[0].mxu0 %v643
        %v1192 = vpop.f32.mrb[0].mxu0
        %v1193 = vadd.f32 %v1032, %v1192
        %v1194 = vpop.f32.mrb[0].mxu0
        %v1195 = vpop.f32.mrb[0].mxu0
        %v1196 = vadd.f32 %v1035, %v1195
        %v1197 = vpop.f32.mrb[0].mxu0
        %1198 = vmatprep.mubr.bf16.mxu0 %v648
        %1199 = vmatmul.mubr.bf16.gmra.mrb[0].mxu0 %v647
        %v1200 = vpop.f32.mrb[0].mxu0
        %v1201 = vadd.f32 %v1040, %v1200
        %v1202 = vpop.f32.mrb[0].mxu0
        %v1203 = vpop.f32.mrb[0].mxu0
        %v1204 = vadd.f32 %v1043, %v1203
        %v1205 = vpop.f32.mrb[0].mxu0
        %1206 = vmatprep.mubr.bf16.mxu0 %v652
        %1207 = vmatmul.mubr.bf16.gmra.mrb[0].mxu0 %v651
        %v1208 = vpop.f32.mrb[0].mxu0
        %v1209 = vadd.f32 %v1048, %v1208
        %v1210 = vpop.f32.mrb[0].mxu0
        %v1211 = vpop.f32.mrb[0].mxu0
        %v1212 = vadd.f32 %v1051, %v1211
        %v1213 = vpop.f32.mrb[0].mxu0
        %1214 = vmatprep.mubr.bf16.mxu0 %v656
        %1215 = vmatmul.mubr.bf16.gmra.mrb[0].mxu0 %v655
        %v1216 = vpop.f32.mrb[0].mxu0
        %v1217 = vadd.f32 %v1056, %v1216
        %v1218 = vpop.f32.mrb[0].mxu0
        %v1219 = vpop.f32.mrb[0].mxu0
        %v1220 = vadd.f32 %v1059, %v1219
        %v1221 = vpop.f32.mrb[0].mxu0
        %1222 = vmatprep.mubr.bf16.mxu0 %v660
        %1223 = vmatmul.mubr.bf16.gmra.mrb[0].mxu0 %v659
        %v1224 = vpop.f32.mrb[0].mxu0
        %v1225 = vadd.f32 %v1064, %v1224
        %v1226 = vpop.f32.mrb[0].mxu0
        %v1227 = vpop.f32.mrb[0].mxu0
        %v1228 = vadd.f32 %v1067, %v1227
        %v1229 = vpop.f32.mrb[0].mxu0
        %1230 = vmatprep.mubr.bf16.mxu0 %v664
        %1231 = vmatmul.mubr.bf16.gmra.mrb[0].mxu0 %v663
        %v1232 = vpop.f32.mrb[0].mxu0
        %v1233 = vadd.f32 %v1072, %v1232
        %v1234 = vpop.f32.mrb[0].mxu0
        %v1235 = vpop.f32.mrb[0].mxu0
        %v1236 = vadd.f32 %v1075, %v1235
        %v1237 = vpop.f32.mrb[0].mxu0
        %1238 = vmatprep.mubr.bf16.mxu0 %v668
        %1239 = vmatmul.mubr.bf16.gmra.mrb[0].mxu0 %v667
        %v1240 = vpop.f32.mrb[0].mxu0
        %v1241 = vadd.f32 %v1080, %v1240
        %v1242 = vpop.f32.mrb[0].mxu0
        %v1243 = vpop.f32.mrb[0].mxu0
        %v1244 = vadd.f32 %v1083, %v1243
        %v1245 = vpop.f32.mrb[0].mxu0
        %1246 = vdwg.mxu0
        %v1247 = vadd.f32 %v317, %v1121
        %v1248 = vadd.f32 %v318, %v1124
        %v1249 = vadd.f32 %v319, %v1129
        %v1250 = vadd.f32 %v320, %v1132
        %v1251 = vadd.f32 %v321, %v1137
        %v1252 = vadd.f32 %v322, %v1140
        %v1253 = vadd.f32 %v323, %v1145
        %v1254 = vadd.f32 %v324, %v1148
        %v1255 = vadd.f32 %v325, %v1153
        %v1256 = vadd.f32 %v326, %v1156
        %v1257 = vadd.f32 %v327, %v1161
        %v1258 = vadd.f32 %v328, %v1164
        %v1259 = vadd.f32 %v329, %v1169
        %v1260 = vadd.f32 %v330, %v1172
        %v1261 = vadd.f32 %v331, %v1177
        %v1262 = vadd.f32 %v332, %v1180
        %v1263 = vadd.f32 %v333, %v1185
        %v1264 = vadd.f32 %v334, %v1188
        %v1265 = vadd.f32 %v335, %v1193
        %v1266 = vadd.f32 %v336, %v1196
        %v1267 = vadd.f32 %v337, %v1201
        %v1268 = vadd.f32 %v338, %v1204
        %v1269 = vadd.f32 %v339, %v1209
        %v1270 = vadd.f32 %v340, %v1212
        %v1271 = vadd.f32 %v341, %v1217
        %v1272 = vadd.f32 %v342, %v1220
        %v1273 = vadd.f32 %v343, %v1225
        %v1274 = vadd.f32 %v344, %v1228
        %v1275 = vadd.f32 %v345, %v1233
        %v1276 = vadd.f32 %v346, %v1236
        %v1277 = vadd.f32 %v347, %v1241
        %v1278 = vadd.f32 %v348, %v1244
        %1279 = vst [vmem:[#allocation2] sm:$0xff] %v1247
        %1280 = vst [vmem:[#allocation2 + $0x8] sm:$0xff] %v1248
        %1281 = vst [vmem:[#allocation2 + $0x10] sm:$0xff] %v1249
        %1282 = vst [vmem:[#allocation2 + $0x18] sm:$0xff] %v1250
        %1283 = vst [vmem:[#allocation2 + $0x20] sm:$0xff] %v1251
        %1284 = vst [vmem:[#allocation2 + $0x28] sm:$0xff] %v1252
        %1285 = vst [vmem:[#allocation2 + $0x30] sm:$0xff] %v1253
        %1286 = vst [vmem:[#allocation2 + $0x38] sm:$0xff] %v1254
        %1287 = vst [vmem:[#allocation2 + $0x40] sm:$0xff] %v1255
        %1288 = vst [vmem:[#allocation2 + $0x48] sm:$0xff] %v1256
        %1289 = vst [vmem:[#allocation2 + $0x50] sm:$0xff] %v1257
        %1290 = vst [vmem:[#allocation2 + $0x58] sm:$0xff] %v1258
        %1291 = vst [vmem:[#allocation2 + $0x60] sm:$0xff] %v1259
        %1292 = vst [vmem:[#allocation2 + $0x68] sm:$0xff] %v1260
        %1293 = vst [vmem:[#allocation2 + $0x70] sm:$0xff] %v1261
        %1294 = vst [vmem:[#allocation2 + $0x78] sm:$0xff] %v1262
        %1295 = vst [vmem:[#allocation2 + $0x80] sm:$0xff] %v1263
        %1296 = vst [vmem:[#allocation2 + $0x88] sm:$0xff] %v1264
        %1297 = vst [vmem:[#allocation2 + $0x90] sm:$0xff] %v1265
        %1298 = vst [vmem:[#allocation2 + $0x98] sm:$0xff] %v1266
        %1299 = vst [vmem:[#allocation2 + $0xa0] sm:$0xff] %v1267
        %1300 = vst [vmem:[#allocation2 + $0xa8] sm:$0xff] %v1268
        %1301 = vst [vmem:[#allocation2 + $0xb0] sm:$0xff] %v1269
        %1302 = vst [vmem:[#allocation2 + $0xb8] sm:$0xff] %v1270
        %1303 = vst [vmem:[#allocation2 + $0xc0] sm:$0xff] %v1271
        %1304 = vst [vmem:[#allocation2 + $0xc8] sm:$0xff] %v1272
        %1305 = vst [vmem:[#allocation2 + $0xd0] sm:$0xff] %v1273
        %1306 = vst [vmem:[#allocation2 + $0xd8] sm:$0xff] %v1274
        %1307 = vst [vmem:[#allocation2 + $0xe0] sm:$0xff] %v1275
        %1308 = vst [vmem:[#allocation2 + $0xe8] sm:$0xff] %v1276
        %1309 = vst [vmem:[#allocation2 + $0xf0] sm:$0xff] %v1277
        %1310 = vst [vmem:[#allocation2 + $0xf8] sm:$0xff] %v1278
        // Predicated region
        $region41: #{gcn_forward.5} parent=31 // pred_check
          %p1311 = pneg %p212
        $region42: #{gcn_forward.5} parent=31 // pred_check_branch
          %1313 = sbr.rel (%p1311) target = $region44
        $region43: #{gcn_forward.5} parent=31 // pred_region
          %v1314 = vld [vmem:[#allocation2] sm:$0xff]
          %v1315 = vld [vmem:[#allocation2 + $0x8] sm:$0xff]
          %v1316 = vld [vmem:[#allocation2 + $0x10] sm:$0xff]
          %v1317 = vld [vmem:[#allocation2 + $0x18] sm:$0xff]
          %v1318 = vld [vmem:[#allocation2 + $0x20] sm:$0xff]
          %v1319 = vld [vmem:[#allocation2 + $0x28] sm:$0xff]
          %v1320 = vld [vmem:[#allocation2 + $0x30] sm:$0xff]
          %v1321 = vld [vmem:[#allocation2 + $0x38] sm:$0xff]
          %v1322 = vld [vmem:[#allocation2 + $0x40] sm:$0xff]
          %v1323 = vld [vmem:[#allocation2 + $0x48] sm:$0xff]
          %v1324 = vld [vmem:[#allocation2 + $0x50] sm:$0xff]
          %v1325 = vld [vmem:[#allocation2 + $0x58] sm:$0xff]
          %v1326 = vld [vmem:[#allocation2 + $0x60] sm:$0xff]
          %v1327 = vld [vmem:[#allocation2 + $0x68] sm:$0xff]
          %v1328 = vld [vmem:[#allocation2 + $0x70] sm:$0xff]
          %v1329 = vld [vmem:[#allocation2 + $0x78] sm:$0xff]
          %v1330 = vld [vmem:[#allocation2 + $0x80] sm:$0xff]
          %v1331 = vld [vmem:[#allocation2 + $0x88] sm:$0xff]
          %v1332 = vld [vmem:[#allocation2 + $0x90] sm:$0xff]
          %v1333 = vld [vmem:[#allocation2 + $0x98] sm:$0xff]
          %v1334 = vld [vmem:[#allocation2 + $0xa0] sm:$0xff]
          %v1335 = vld [vmem:[#allocation2 + $0xa8] sm:$0xff]
          %v1336 = vld [vmem:[#allocation2 + $0xb0] sm:$0xff]
          %v1337 = vld [vmem:[#allocation2 + $0xb8] sm:$0xff]
          %v1338 = vld [vmem:[#allocation2 + $0xc0] sm:$0xff]
          %v1339 = vld [vmem:[#allocation2 + $0xc8] sm:$0xff]
          %v1340 = vld [vmem:[#allocation2 + $0xd0] sm:$0xff]
          %v1341 = vld [vmem:[#allocation2 + $0xd8] sm:$0xff]
          %v1342 = vld [vmem:[#allocation2 + $0xe0] sm:$0xff]
          %v1343 = vld [vmem:[#allocation2 + $0xe8] sm:$0xff]
          %v1344 = vld [vmem:[#allocation2 + $0xf0] sm:$0xff]
          %v1345 = vld [vmem:[#allocation2 + $0xf8] sm:$0xff]
          %v1346 = vld [vmem:[%s2] sm:$0x1]
          %v1348 = vlaneseq
          %v1349 = vshrl.u32 %v1348, 7
          %v1350 = vsub.s32 0, %v1349
          %v1351 = vrot.slane %v1346, %v1350
          %v1353 = vadd.f32 %v1314, %v1351
          %v1354 = vadd.f32 %v1315, %v1351
          %v1355 = vadd.f32 %v1316, %v1351
          %v1356 = vadd.f32 %v1317, %v1351
          %v1357 = vadd.f32 %v1318, %v1351
          %v1358 = vadd.f32 %v1319, %v1351
          %v1359 = vadd.f32 %v1320, %v1351
          %v1360 = vadd.f32 %v1321, %v1351
          %v1361 = vadd.f32 %v1322, %v1351
          %v1362 = vadd.f32 %v1323, %v1351
          %v1363 = vadd.f32 %v1324, %v1351
          %v1364 = vadd.f32 %v1325, %v1351
          %v1365 = vadd.f32 %v1326, %v1351
          %v1366 = vadd.f32 %v1327, %v1351
          %v1367 = vadd.f32 %v1328, %v1351
          %v1368 = vadd.f32 %v1329, %v1351
          %v1369 = vadd.f32 %v1330, %v1351
          %v1370 = vadd.f32 %v1331, %v1351
          %v1371 = vadd.f32 %v1332, %v1351
          %v1372 = vadd.f32 %v1333, %v1351
          %v1373 = vadd.f32 %v1334, %v1351
          %v1374 = vadd.f32 %v1335, %v1351
          %v1375 = vadd.f32 %v1336, %v1351
          %v1376 = vadd.f32 %v1337, %v1351
          %v1377 = vadd.f32 %v1338, %v1351
          %v1378 = vadd.f32 %v1339, %v1351
          %v1379 = vadd.f32 %v1340, %v1351
          %v1380 = vadd.f32 %v1341, %v1351
          %v1381 = vadd.f32 %v1342, %v1351
          %v1382 = vadd.f32 %v1343, %v1351
          %v1383 = vadd.f32 %v1344, %v1351
          %v1384 = vadd.f32 %v1345, %v1351
          %v1385 = vmax.f32 %v1353, 0.0
          %v1386 = vmax.f32 %v1354, 0.0
          %v1387 = vmax.f32 %v1355, 0.0
          %v1388 = vmax.f32 %v1356, 0.0
          %v1389 = vmax.f32 %v1357, 0.0
          %v1390 = vmax.f32 %v1358, 0.0
          %v1391 = vmax.f32 %v1359, 0.0
          %v1392 = vmax.f32 %v1360, 0.0
          %v1393 = vmax.f32 %v1361, 0.0
          %v1394 = vmax.f32 %v1362, 0.0
          %v1395 = vmax.f32 %v1363, 0.0
          %v1396 = vmax.f32 %v1364, 0.0
          %v1397 = vmax.f32 %v1365, 0.0
          %v1398 = vmax.f32 %v1366, 0.0
          %v1399 = vmax.f32 %v1367, 0.0
          %v1400 = vmax.f32 %v1368, 0.0
          %v1401 = vmax.f32 %v1369, 0.0
          %v1402 = vmax.f32 %v1370, 0.0
          %v1403 = vmax.f32 %v1371, 0.0
          %v1404 = vmax.f32 %v1372, 0.0
          %v1405 = vmax.f32 %v1373, 0.0
          %v1406 = vmax.f32 %v1374, 0.0
          %v1407 = vmax.f32 %v1375, 0.0
          %v1408 = vmax.f32 %v1376, 0.0
          %v1409 = vmax.f32 %v1377, 0.0
          %v1410 = vmax.f32 %v1378, 0.0
          %v1411 = vmax.f32 %v1379, 0.0
          %v1412 = vmax.f32 %v1380, 0.0
          %v1413 = vmax.f32 %v1381, 0.0
          %v1414 = vmax.f32 %v1382, 0.0
          %v1415 = vmax.f32 %v1383, 0.0
          %v1416 = vmax.f32 %v1384, 0.0
          %v1417 = vpack.c.bf16 %v1386, %v1385
          %v1418 = vpack.c.bf16 %v1388, %v1387
          %v1419 = vpack.c.bf16 %v1390, %v1389
          %v1420 = vpack.c.bf16 %v1392, %v1391
          %v1421 = vpack.c.bf16 %v1394, %v1393
          %v1422 = vpack.c.bf16 %v1396, %v1395
          %v1423 = vpack.c.bf16 %v1398, %v1397
          %v1424 = vpack.c.bf16 %v1400, %v1399
          %v1425 = vpack.c.bf16 %v1402, %v1401
          %v1426 = vpack.c.bf16 %v1404, %v1403
          %v1427 = vpack.c.bf16 %v1406, %v1405
          %v1428 = vpack.c.bf16 %v1408, %v1407
          %v1429 = vpack.c.bf16 %v1410, %v1409
          %v1430 = vpack.c.bf16 %v1412, %v1411
          %v1431 = vpack.c.bf16 %v1414, %v1413
          %v1432 = vpack.c.bf16 %v1416, %v1415
          %v1449 = vunpack.c.l.b16 %v1417
          %v1450 = vunpack.c.h.b16 %v1417
          %v1451 = vunpack.c.l.b16 %v1418
          %v1452 = vunpack.c.h.b16 %v1418
          %v1453 = vunpack.c.l.b16 %v1419
          %v1454 = vunpack.c.h.b16 %v1419
          %v1455 = vunpack.c.l.b16 %v1420
          %v1456 = vunpack.c.h.b16 %v1420
          %v1457 = vunpack.c.l.b16 %v1421
          %v1458 = vunpack.c.h.b16 %v1421
          %v1459 = vunpack.c.l.b16 %v1422
          %v1460 = vunpack.c.h.b16 %v1422
          %v1461 = vunpack.c.l.b16 %v1423
          %v1462 = vunpack.c.h.b16 %v1423
          %v1463 = vunpack.c.l.b16 %v1424
          %v1464 = vunpack.c.h.b16 %v1424
          %v1465 = vunpack.c.l.b16 %v1425
          %v1466 = vunpack.c.h.b16 %v1425
          %v1467 = vunpack.c.l.b16 %v1426
          %v1468 = vunpack.c.h.b16 %v1426
          %v1469 = vunpack.c.l.b16 %v1427
          %v1470 = vunpack.c.h.b16 %v1427
          %v1471 = vunpack.c.l.b16 %v1428
          %v1472 = vunpack.c.h.b16 %v1428
          %v1473 = vunpack.c.l.b16 %v1429
          %v1474 = vunpack.c.h.b16 %v1429
          %v1475 = vunpack.c.l.b16 %v1430
          %v1476 = vunpack.c.h.b16 %v1430
          %v1477 = vunpack.c.l.b16 %v1431
          %v1478 = vunpack.c.h.b16 %v1431
          %v1479 = vunpack.c.l.b16 %v1432
          %v1480 = vunpack.c.h.b16 %v1432
          %v1481 = vpack.c.b16 %v1449, %v1449
          %v1482 = vpack.c.b16 %v1450, %v1450
          %v1483 = vpack.c.b16 %v1451, %v1451
          %v1484 = vpack.c.b16 %v1452, %v1452
          %v1485 = vpack.c.b16 %v1453, %v1453
          %v1486 = vpack.c.b16 %v1454, %v1454
          %v1487 = vpack.c.b16 %v1455, %v1455
          %v1488 = vpack.c.b16 %v1456, %v1456
          %v1489 = vpack.c.b16 %v1457, %v1457
          %v1490 = vpack.c.b16 %v1458, %v1458
          %v1491 = vpack.c.b16 %v1459, %v1459
          %v1492 = vpack.c.b16 %v1460, %v1460
          %v1493 = vpack.c.b16 %v1461, %v1461
          %v1494 = vpack.c.b16 %v1462, %v1462
          %v1495 = vpack.c.b16 %v1463, %v1463
          %v1496 = vpack.c.b16 %v1464, %v1464
          %v1497 = vpack.c.b16 %v1465, %v1465
          %v1498 = vpack.c.b16 %v1466, %v1466
          %v1499 = vpack.c.b16 %v1467, %v1467
          %v1500 = vpack.c.b16 %v1468, %v1468
          %v1501 = vpack.c.b16 %v1469, %v1469
          %v1502 = vpack.c.b16 %v1470, %v1470
          %v1503 = vpack.c.b16 %v1471, %v1471
          %v1504 = vpack.c.b16 %v1472, %v1472
          %v1505 = vpack.c.b16 %v1473, %v1473
          %v1506 = vpack.c.b16 %v1474, %v1474
          %v1507 = vpack.c.b16 %v1475, %v1475
          %v1508 = vpack.c.b16 %v1476, %v1476
          %v1509 = vpack.c.b16 %v1477, %v1477
          %v1510 = vpack.c.b16 %v1478, %v1478
          %v1511 = vpack.c.b16 %v1479, %v1479
          %v1512 = vpack.c.b16 %v1480, %v1480
          %1545 = vst [vmem:[%s209] sm:$0xf] %v1481
          %1546 = vst [vmem:[%s209 + $0x4] sm:$0xf] %v1482
          %1547 = vst [vmem:[%s209 + $0x8] sm:$0xf] %v1483
          %1548 = vst [vmem:[%s209 + $0xc] sm:$0xf] %v1484
          %1549 = vst [vmem:[%s209 + $0x10] sm:$0xf] %v1485
          %1550 = vst [vmem:[%s209 + $0x14] sm:$0xf] %v1486
          %1551 = vst [vmem:[%s209 + $0x18] sm:$0xf] %v1487
          %1552 = vst [vmem:[%s209 + $0x1c] sm:$0xf] %v1488
          %1553 = vst [vmem:[%s209 + $0x20] sm:$0xf] %v1489
          %1554 = vst [vmem:[%s209 + $0x24] sm:$0xf] %v1490
          %1555 = vst [vmem:[%s209 + $0x28] sm:$0xf] %v1491
          %1556 = vst [vmem:[%s209 + $0x2c] sm:$0xf] %v1492
          %1557 = vst [vmem:[%s209 + $0x30] sm:$0xf] %v1493
          %1558 = vst [vmem:[%s209 + $0x34] sm:$0xf] %v1494
          %1559 = vst [vmem:[%s209 + $0x38] sm:$0xf] %v1495
          %1560 = vst [vmem:[%s209 + $0x3c] sm:$0xf] %v1496
          %1561 = vst [vmem:[%s209 + $0x40] sm:$0xf] %v1497
          %1562 = vst [vmem:[%s209 + $0x44] sm:$0xf] %v1498
          %1563 = vst [vmem:[%s209 + $0x48] sm:$0xf] %v1499
          %1564 = vst [vmem:[%s209 + $0x4c] sm:$0xf] %v1500
          %1565 = vst [vmem:[%s209 + $0x50] sm:$0xf] %v1501
          %1566 = vst [vmem:[%s209 + $0x54] sm:$0xf] %v1502
          %1567 = vst [vmem:[%s209 + $0x58] sm:$0xf] %v1503
          %1568 = vst [vmem:[%s209 + $0x5c] sm:$0xf] %v1504
          %1569 = vst [vmem:[%s209 + $0x60] sm:$0xf] %v1505
          %1570 = vst [vmem:[%s209 + $0x64] sm:$0xf] %v1506
          %1571 = vst [vmem:[%s209 + $0x68] sm:$0xf] %v1507
          %1572 = vst [vmem:[%s209 + $0x6c] sm:$0xf] %v1508
          %1573 = vst [vmem:[%s209 + $0x70] sm:$0xf] %v1509
          %1574 = vst [vmem:[%s209 + $0x74] sm:$0xf] %v1510
          %1575 = vst [vmem:[%s209 + $0x78] sm:$0xf] %v1511
          %1576 = vst [vmem:[%s209 + $0x7c] sm:$0xf] %v1512
        $region44: #{gcn_forward.5} parent=31 // pred_fallthru
          _
        %s1577 = smul.u32 32, %s21
        %p1578 = scmp.lt.s32.totalorder %s1577, 63
        %s1579 = scalar_select %p1578, %s1577, 63
        %s1580 = smul.addr %s1579, 4
        %s1581 = scalar_lea.vmem %s3, %s1580
        // Predicated region
        $region45: #{gcn_forward.5} parent=31 // pred_check
          %p1582 = pneg %p117
        $region46: #{gcn_forward.5} parent=31 // pred_check_branch
          %1584 = sbr.rel (%p1582) target = $region48
        $region47: #{gcn_forward.5} parent=31 // pred_region
          %s1585 = smul.u32 32, %s21
        $region48: #{gcn_forward.5} parent=31 // pred_fallthru
          _
      $region32: #{gcn_forward.5} parent=5 // pred_fallthru
        _
      %p1586 = scmp.le.s32.totalorder 2, %s12
      // Predicated region
      $region49: #{gcn_forward.5} parent=5 // pred_check
        %p1587 = pneg %p1586
      $region50: #{gcn_forward.5} parent=5 // pred_check_branch
        %1589 = sbr.rel (%p1587) target = $region52
      $region51: #{gcn_forward.5} parent=5 // pred_region
        %s1590 = ssub.s32 %s12, 2
        // Predicated region
        $region53: #{gcn_forward.5} parent=51 // pred_check
          %p1591 = pneg %p123
        $region54: #{gcn_forward.5} parent=51 // pred_check_branch
          %1593 = sbr.rel (%p1591) target = $region56
        $region55: #{gcn_forward.5} parent=51 // pred_region
          %s1594 = smul.u32 32, %s23
          %p1595 = scmp.lt.s32.totalorder %s1594, 63
          %s1596 = scalar_select %p1595, %s1594, 63
          %s1597 = smul.addr %s1596, 4
          %s1598 = scalar_lea.vmem %s3, %s1597
        $region56: #{gcn_forward.5} parent=51 // pred_fallthru
          _
      $region52: #{gcn_forward.5} parent=5 // pred_fallthru
        _
    $region6: #{gcn_forward.5} parent=1 // loop_footer
      %s16 = sadd.s32 1, %s12
    $region7: #{gcn_forward.5} parent=1 // loop_footer_branch
      %11 = sbr.rel target = $region3
    $region8: #{gcn_forward.5} parent=1 // loop_exit
      _
    %1599 = vsyncpa [#allocation4], 1
    %s1600 = scalar_lea.sflag [#allocation4], 1
    %1601 = vsyncpa %s1600, 1

// kernel: gcn_forward.7
$region0: #{gcn_forward.7}
  #allocation0 [shape = 'u32[]', space=smem, size = 0x4, offset = 0x4, fixed_abs, tag = 'smem constant byte address 0x4 - core index']
  #allocation1 [shape = 'u32[144,128]{1,0:T(1,128)}', space=vmem, size = 0x12000, scoped, tag = 'internal scratch']
  #allocation2 [shape = 'f32[256,128]{1,0:T(8,128)}', space=vmem, size = 0x20000, scoped, tag = 'scratch operand']
  %s0 = inlined_call_operand.vmem [shape: bf16[512,512], index: 0, kind: input, shape index: {}]
  %s1 = inlined_call_operand.vmem [shape: bf16[512,128], index: 1, kind: input, shape index: {}]
  %s2 = inlined_call_operand.vmem [shape: f32[1,128], index: 2, kind: input, shape index: {}]
  %s3 = inlined_call_operand.vmem [shape: f32[512,128], index: 3, kind: output, shape index: {}]
  %s4 = sld [smem:[#allocation0]]
  $region53: #{gcn_forward.7} parent=0
    _
  %s6 = ssub.s32 1, %s4
  %s7 = scalar_select 0, %s6, %s4
  loop: start=0, step=1, limit=4
  $region2: #{gcn_forward.7} parent=0 // loop_pre_header
    _
  $region3: #{gcn_forward.7} parent=0 // loop_header
    %s9 = sphi 0, %s13
    %p10 = scmp.ge.s32.totalorder %s9, 4
    %s16 = sphi 0, %s28
    %s17 = sphi 0, %s24
    %s18 = sphi 0, %s16
    %s19 = sphi 0, %s17
    %s20 = sphi 0, %s18
    %s21 = sphi 0, %s19
    %s33 = sphi 0, %s35
    %s36 = sphi 0, %s33
    %s37 = sphi 0, %s36
    %s53 = sphi 0, %s37
    %s57 = sphi 0, %s57
    %s59 = sphi 0, %s57
    %s60 = sphi 0, %s59
    %s74 = sphi 0, %s60
    %s78 = sphi 0, %s78
    %s80 = sphi 0, %s78
    %s81 = sphi 0, %s80
    %s95 = sphi 0, %s81
    %s101 = sphi 0, %s103
    %s104 = sphi 0, %s101
    %s105 = sphi 0, %s104
    %s121 = sphi 0, %s105
  $region4: #{gcn_forward.7} parent=0 // loop_header_branch
    %12 = sbr.rel (%p10) target = $region8
  $region5: #{gcn_forward.7} parent=0 // loop_body
    %s14 = ssub.s32 %s9, 1
    %s15 = ssub.s32 %s9, 2
    %s22 = sadd.s32 1, %s17
    %p23 = scmp.ge.s32.totalorder %s22, 1
    %s24 = scalar_select %p23, 0, %s22
    %s25 = sadd.s32 1, %s16
    %s26 = scalar_select %p23, %s25, %s16
    %p27 = scmp.ge.s32.totalorder %s26, 2
    %s28 = scalar_select %p27, 0, %s26
    %s29 = ssub.s32 %s16, %s28
    %s30 = ssub.s32 %s17, %s24
    %s31 = sor.u32 %s29, %s30
    %p32 = scmp.eq.s32.totalorder %s31, 0
    %s34 = sadd.s32 %s33, 1
    %s35 = scalar_select %p32, %s33, %s34
    %p38 = pneg %p32
    %p39 = scmp.eq.s32.totalorder %s9, 1
    %p40 = por %p38, %p39
    %p41 = scmp.ne.s32.totalorder %s33, %s36
    %p42 = scmp.eq.s32.totalorder %s9, 0
    %p43 = por %p41, %p42
    %p44 = scmp.ne.s32.totalorder %s33, %s36
    %p45 = scmp.eq.s32.totalorder %s14, 1
    %p46 = por %p44, %p45
    %p47 = scmp.ne.s32.totalorder %s36, %s37
    %p48 = scmp.eq.s32.totalorder %s14, 0
    %p49 = por %p47, %p48
    %p50 = scmp.ne.s32.totalorder %s36, %s37
    %p51 = scmp.eq.s32.totalorder %s15, 1
    %p52 = por %p50, %p51
    %p54 = scmp.ne.s32.totalorder %s37, %s53
    %p55 = scmp.eq.s32.totalorder %s15, 0
    %p56 = por %p54, %p55
    %s58 = sadd.s32 %s57, 1
    %p61 = scmp.eq.s32.totalorder %s9, 1
    %p62 = scmp.ne.s32.totalorder %s57, %s59
    %p63 = scmp.eq.s32.totalorder %s9, 0
    %p64 = por %p62, %p63
    %p65 = scmp.ne.s32.totalorder %s57, %s59
    %p66 = scmp.eq.s32.totalorder %s14, 1
    %p67 = por %p65, %p66
    %p68 = scmp.ne.s32.totalorder %s59, %s60
    %p69 = scmp.eq.s32.totalorder %s14, 0
    %p70 = por %p68, %p69
    %p71 = scmp.ne.s32.totalorder %s59, %s60
    %p72 = scmp.eq.s32.totalorder %s15, 1
    %p73 = por %p71, %p72
    %p75 = scmp.ne.s32.totalorder %s60, %s74
    %p76 = scmp.eq.s32.totalorder %s15, 0
    %p77 = por %p75, %p76
    %s79 = sadd.s32 %s78, 1
    %p82 = scmp.eq.s32.totalorder %s9, 1
    %p83 = scmp.ne.s32.totalorder %s78, %s80
    %p84 = scmp.eq.s32.totalorder %s9, 0
    %p85 = por %p83, %p84
    %p86 = scmp.ne.s32.totalorder %s78, %s80
    %p87 = scmp.eq.s32.totalorder %s14, 1
    %p88 = por %p86, %p87
    %p89 = scmp.ne.s32.totalorder %s80, %s81
    %p90 = scmp.eq.s32.totalorder %s14, 0
    %p91 = por %p89, %p90
    %p92 = scmp.ne.s32.totalorder %s80, %s81
    %p93 = scmp.eq.s32.totalorder %s15, 1
    %p94 = por %p92, %p93
    %p96 = scmp.ne.s32.totalorder %s81, %s95
    %p97 = scmp.eq.s32.totalorder %s15, 0
    %p98 = por %p96, %p97
    %s99 = ssub.s32 %s16, %s28
    %p100 = scmp.eq.s32.totalorder %s99, 0
    %s102 = sadd.s32 %s101, 1
    %s103 = scalar_select %p100, %s101, %s102
    %p106 = pneg %p100
    %p107 = scmp.eq.s32.totalorder %s9, 1
    %p108 = por %p106, %p107
    %p109 = scmp.ne.s32.totalorder %s101, %s104
    %p110 = scmp.eq.s32.totalorder %s9, 0
    %p111 = por %p109, %p110
    %p112 = scmp.ne.s32.totalorder %s101, %s104
    %p113 = scmp.eq.s32.totalorder %s14, 1
    %p114 = por %p112, %p113
    %p115 = scmp.ne.s32.totalorder %s104, %s105
    %p116 = scmp.eq.s32.totalorder %s14, 0
    %p117 = por %p115, %p116
    %p118 = scmp.ne.s32.totalorder %s104, %s105
    %p119 = scmp.eq.s32.totalorder %s15, 1
    %p120 = por %p118, %p119
    %p122 = scmp.ne.s32.totalorder %s105, %s121
    %p123 = scmp.eq.s32.totalorder %s15, 0
    %p124 = por %p122, %p123
    %p125 = scmp.le.s32.totalorder 1, %s9
    %p126 = scmp.lt.s32.totalorder %s9, 3
    %p127 = pnand %p125, %p126
    %p128 = pneg %p127
    // Predicated region
    $region9: #{gcn_forward.7} parent=5 // pred_check
      _
    $region10: #{gcn_forward.7} parent=5 // pred_check_branch
      %130 = sbr.rel (%p127) target = $region12
    $region11: #{gcn_forward.7} parent=5 // pred_region
      %s131 = ssub.s32 %s9, 1
      // Predicated region
      $region13: #{gcn_forward.7} parent=11 // pred_check
        %p132 = pneg %p70
      $region14: #{gcn_forward.7} parent=11 // pred_check_branch
        %134 = sbr.rel (%p132) target = $region16
      $region15: #{gcn_forward.7} parent=11 // pred_region
        _
      $region16: #{gcn_forward.7} parent=11 // pred_fallthru
        _
      // Predicated region
      $region17: #{gcn_forward.7} parent=11 // pred_check
        %p135 = pneg %p91
      $region18: #{gcn_forward.7} parent=11 // pred_check_branch
        %137 = sbr.rel (%p135) target = $region20
      $region19: #{gcn_forward.7} parent=11 // pred_region
        _
      $region20: #{gcn_forward.7} parent=11 // pred_fallthru
        _
    $region12: #{gcn_forward.7} parent=5 // pred_fallthru
      _
    %p138 = scmp.lt.s32.totalorder %s9, 2
    // Predicated region
    $region21: #{gcn_forward.7} parent=5 // pred_check
      %p139 = pneg %p138
    $region22: #{gcn_forward.7} parent=5 // pred_check_branch
      %141 = sbr.rel (%p139) target = $region24
    $region23: #{gcn_forward.7} parent=5 // pred_region
      // Predicated region
      $region25: #{gcn_forward.7} parent=23 // pred_check
        %p142 = pneg %p43
      $region26: #{gcn_forward.7} parent=23 // pred_check_branch
        %144 = sbr.rel (%p142) target = $region28
      $region27: #{gcn_forward.7} parent=23 // pred_region
        %s145 = smul.u32 32, %s16
        %s146 = smul.u32 4, %s17
        %p147 = scmp.lt.s32.totalorder %s145, 63
        %s148 = scalar_select %p147, %s145, 63
        %p149 = scmp.lt.s32.totalorder %s146, 3
        %s150 = scalar_select %p149, %s146, 3
        %s151 = smul.addr %s148, 4
        %s152 = sadd.s32 %s150, %s151
        %s153 = smul.addr %s152, 4
        %s154 = scalar_lea.vmem %s0, %s153
        %s155 = smul.u32 32, %s16
        %s156 = smul.u32 4, %s17
      $region28: #{gcn_forward.7} parent=23 // pred_fallthru
        _
    $region24: #{gcn_forward.7} parent=5 // pred_fallthru
      _
    %p157 = scmp.le.s32.totalorder 1, %s9
    %p158 = scmp.lt.s32.totalorder %s9, 3
    %p159 = pnand %p157, %p158
    %p160 = pneg %p159
    // Predicated region
    $region29: #{gcn_forward.7} parent=5 // pred_check
      _
    $region30: #{gcn_forward.7} parent=5 // pred_check_branch
      %162 = sbr.rel (%p159) target = $region32
    $region31: #{gcn_forward.7} parent=5 // pred_region
      %s163 = ssub.s32 %s9, 1
      %s164 = smul.u32 32, %s18
      %s165 = smul.u32 4, %s19
      %p166 = scmp.lt.s32.totalorder %s164, 63
      %s167 = scalar_select %p166, %s164, 63
      %p168 = scmp.lt.s32.totalorder %s165, 3
      %s169 = scalar_select %p168, %s165, 3
      %s170 = smul.addr %s167, 4
      %s171 = sadd.s32 %s169, %s170
      %s172 = smul.addr %s171, 4
      %s173 = scalar_lea.vmem %s0, %s172
      %p174 = pneg %p49
      %p175 = pneg %p46
      %p176 = pneg %p70
      %p177 = pneg %p67
      %p178 = pneg %p91
      %p179 = pneg %p88
      %p180 = pneg %p117
      %p181 = pneg %p114
      %s182 = smul.u32 32, %s18
      %p183 = scmp.lt.s32.totalorder %s182, 63
      %s184 = scalar_select %p183, %s182, 63
      %s185 = smul.addr %s184, 8
      %s186 = scalar_lea.vmem %s3, %s185
      %s187 = smul.u32 32, %s18
      %s188 = smul.u32 4, %s19
      %p189 = scmp.lt.s32.totalorder %s187, 63
      %s190 = scalar_select %p189, %s187, 63
      %p191 = scmp.lt.s32.totalorder %s188, 3
      %s192 = scalar_select %p191, %s188, 3
      %s193 = smul.addr %s190, 4
      %s194 = sadd.s32 %s192, %s193
      %s195 = smul.addr %s194, 4
      %s196 = scalar_lea.vmem %s0, %s195
      %s197 = smul.u32 32, %s18
      %s198 = smul.u32 4, %s19
      %s199 = smul.u32 32, %s18
      %p200 = scmp.lt.s32.totalorder %s199, 63
      %s201 = scalar_select %p200, %s199, 63
      %s202 = smul.addr %s201, 8
      %s203 = scalar_lea.vmem %s3, %s202
      %s204 = smul.u32 32, %s18
      %p206 = scmp.eq.s32.totalorder %s19, 0
      // Predicated region
      $region33: #{gcn_forward.7} parent=31 // pred_check
        %p207 = pneg %p206
      $region34: #{gcn_forward.7} parent=31 // pred_check_branch
        %209 = sbr.rel (%p207) target = $region36
      $region35: #{gcn_forward.7} parent=31 // pred_region
        %210 = vst [vmem:[#allocation2] sm:$0xff] 0.0
        %211 = vst [vmem:[#allocation2 + $0x8] sm:$0xff] 0.0
        %212 = vst [vmem:[#allocation2 + $0x10] sm:$0xff] 0.0
        %213 = vst [vmem:[#allocation2 + $0x18] sm:$0xff] 0.0
        %214 = vst [vmem:[#allocation2 + $0x20] sm:$0xff] 0.0
        %215 = vst [vmem:[#allocation2 + $0x28] sm:$0xff] 0.0
        %216 = vst [vmem:[#allocation2 + $0x30] sm:$0xff] 0.0
        %217 = vst [vmem:[#allocation2 + $0x38] sm:$0xff] 0.0
        %218 = vst [vmem:[#allocation2 + $0x40] sm:$0xff] 0.0
        %219 = vst [vmem:[#allocation2 + $0x48] sm:$0xff] 0.0
        %220 = vst [vmem:[#allocation2 + $0x50] sm:$0xff] 0.0
        %221 = vst [vmem:[#allocation2 + $0x58] sm:$0xff] 0.0
        %222 = vst [vmem:[#allocation2 + $0x60] sm:$0xff] 0.0
        %223 = vst [vmem:[#allocation2 + $0x68] sm:$0xff] 0.0
        %224 = vst [vmem:[#allocation2 + $0x70] sm:$0xff] 0.0
        %225 = vst [vmem:[#allocation2 + $0x78] sm:$0xff] 0.0
        %226 = vst [vmem:[#allocation2 + $0x80] sm:$0xff] 0.0
        %227 = vst [vmem:[#allocation2 + $0x88] sm:$0xff] 0.0
        %228 = vst [vmem:[#allocation2 + $0x90] sm:$0xff] 0.0
        %229 = vst [vmem:[#allocation2 + $0x98] sm:$0xff] 0.0
        %230 = vst [vmem:[#allocation2 + $0xa0] sm:$0xff] 0.0
        %231 = vst [vmem:[#allocation2 + $0xa8] sm:$0xff] 0.0
        %232 = vst [vmem:[#allocation2 + $0xb0] sm:$0xff] 0.0
        %233 = vst [vmem:[#allocation2 + $0xb8] sm:$0xff] 0.0
        %234 = vst [vmem:[#allocation2 + $0xc0] sm:$0xff] 0.0
        %235 = vst [vmem:[#allocation2 + $0xc8] sm:$0xff] 0.0
        %236 = vst [vmem:[#allocation2 + $0xd0] sm:$0xff] 0.0
        %237 = vst [vmem:[#allocation2 + $0xd8] sm:$0xff] 0.0
        %238 = vst [vmem:[#allocation2 + $0xe0] sm:$0xff] 0.0
        %239 = vst [vmem:[#allocation2 + $0xe8] sm:$0xff] 0.0
        %240 = vst [vmem:[#allocation2 + $0xf0] sm:$0xff] 0.0
        %241 = vst [vmem:[#allocation2 + $0xf8] sm:$0xff] 0.0
      $region36: #{gcn_forward.7} parent=31 // pred_fallthru
        _
      %s242 = smul.u32 %s19, 512
      %s243 = sshra.s32 %s242, 3
      %s244 = sand.u32 %s242, 7
      %s245 = smul.addr %s243, 4
      %s246 = scalar_lea.vmem %s1, %s245
      %v247 = vld [vmem:[%s246] sm:$0xf]
      %v248 = vld [vmem:[%s246 + $0x4] sm:$0xf]
      %v249 = vld [vmem:[%s246 + $0x8] sm:$0xf]
      %v250 = vld [vmem:[%s246 + $0xc] sm:$0xf]
      %v251 = vld [vmem:[%s246 + $0x10] sm:$0xf]
      %v252 = vld [vmem:[%s246 + $0x14] sm:$0xf]
      %v253 = vld [vmem:[%s246 + $0x18] sm:$0xf]
      %v254 = vld [vmem:[%s246 + $0x1c] sm:$0xf]
      %v255 = vld [vmem:[%s246 + $0x20] sm:$0xf]
      %v256 = vld [vmem:[%s246 + $0x24] sm:$0xf]
      %v257 = vld [vmem:[%s246 + $0x28] sm:$0xf]
      %v258 = vld [vmem:[%s246 + $0x2c] sm:$0xf]
      %v259 = vld [vmem:[%s246 + $0x30] sm:$0xf]
      %v260 = vld [vmem:[%s246 + $0x34] sm:$0xf]
      %v261 = vld [vmem:[%s246 + $0x38] sm:$0xf]
      %v262 = vld [vmem:[%s246 + $0x3c] sm:$0xf]
      %v263 = vld [vmem:[%s246 + $0x40] sm:$0xf]
      %v264 = vld [vmem:[%s246 + $0x44] sm:$0xf]
      %v265 = vld [vmem:[%s246 + $0x48] sm:$0xf]
      %v266 = vld [vmem:[%s246 + $0x4c] sm:$0xf]
      %v267 = vld [vmem:[%s246 + $0x50] sm:$0xf]
      %v268 = vld [vmem:[%s246 + $0x54] sm:$0xf]
      %v269 = vld [vmem:[%s246 + $0x58] sm:$0xf]
      %v270 = vld [vmem:[%s246 + $0x5c] sm:$0xf]
      %v271 = vld [vmem:[%s246 + $0x60] sm:$0xf]
      %v272 = vld [vmem:[%s246 + $0x64] sm:$0xf]
      %v273 = vld [vmem:[%s246 + $0x68] sm:$0xf]
      %v274 = vld [vmem:[%s246 + $0x6c] sm:$0xf]
      %v275 = vld [vmem:[%s246 + $0x70] sm:$0xf]
      %v276 = vld [vmem:[%s246 + $0x74] sm:$0xf]
      %v277 = vld [vmem:[%s246 + $0x78] sm:$0xf]
      %v278 = vld [vmem:[%s246 + $0x7c] sm:$0xf]
      %v279 = vld [vmem:[%s246 + $0x80] sm:$0xf]
      %v280 = vld [vmem:[%s246 + $0x84] sm:$0xf]
      %v281 = vld [vmem:[%s246 + $0x88] sm:$0xf]
      %v282 = vld [vmem:[%s246 + $0x8c] sm:$0xf]
      %v283 = vld [vmem:[%s246 + $0x90] sm:$0xf]
      %v284 = vld [vmem:[%s246 + $0x94] sm:$0xf]
      %v285 = vld [vmem:[%s246 + $0x98] sm:$0xf]
      %v286 = vld [vmem:[%s246 + $0x9c] sm:$0xf]
      %v287 = vld [vmem:[%s246 + $0xa0] sm:$0xf]
      %v288 = vld [vmem:[%s246 + $0xa4] sm:$0xf]
      %v289 = vld [vmem:[%s246 + $0xa8] sm:$0xf]
      %v290 = vld [vmem:[%s246 + $0xac] sm:$0xf]
      %v291 = vld [vmem:[%s246 + $0xb0] sm:$0xf]
      %v292 = vld [vmem:[%s246 + $0xb4] sm:$0xf]
      %v293 = vld [vmem:[%s246 + $0xb8] sm:$0xf]
      %v294 = vld [vmem:[%s246 + $0xbc] sm:$0xf]
      %v295 = vld [vmem:[%s246 + $0xc0] sm:$0xf]
      %v296 = vld [vmem:[%s246 + $0xc4] sm:$0xf]
      %v297 = vld [vmem:[%s246 + $0xc8] sm:$0xf]
      %v298 = vld [vmem:[%s246 + $0xcc] sm:$0xf]
      %v299 = vld [vmem:[%s246 + $0xd0] sm:$0xf]
      %v300 = vld [vmem:[%s246 + $0xd4] sm:$0xf]
      %v301 = vld [vmem:[%s246 + $0xd8] sm:$0xf]
      %v302 = vld [vmem:[%s246 + $0xdc] sm:$0xf]
      %v303 = vld [vmem:[%s246 + $0xe0] sm:$0xf]
      %v304 = vld [vmem:[%s246 + $0xe4] sm:$0xf]
      %v305 = vld [vmem:[%s246 + $0xe8] sm:$0xf]
      %v306 = vld [vmem:[%s246 + $0xec] sm:$0xf]
      %v307 = vld [vmem:[%s246 + $0xf0] sm:$0xf]
      %v308 = vld [vmem:[%s246 + $0xf4] sm:$0xf]
      %v309 = vld [vmem:[%s246 + $0xf8] sm:$0xf]
      %v310 = vld [vmem:[%s246 + $0xfc] sm:$0xf]
      %v311 = vld [vmem:[#allocation2] sm:$0xff]
      %v312 = vld [vmem:[#allocation2 + $0x8] sm:$0xff]
      %v313 = vld [vmem:[#allocation2 + $0x10] sm:$0xff]
      %v314 = vld [vmem:[#allocation2 + $0x18] sm:$0xff]
      %v315 = vld [vmem:[#allocation2 + $0x20] sm:$0xff]
      %v316 = vld [vmem:[#allocation2 + $0x28] sm:$0xff]
      %v317 = vld [vmem:[#allocation2 + $0x30] sm:$0xff]
      %v318 = vld [vmem:[#allocation2 + $0x38] sm:$0xff]
      %v319 = vld [vmem:[#allocation2 + $0x40] sm:$0xff]
      %v320 = vld [vmem:[#allocation2 + $0x48] sm:$0xff]
      %v321 = vld [vmem:[#allocation2 + $0x50] sm:$0xff]
      %v322 = vld [vmem:[#allocation2 + $0x58] sm:$0xff]
      %v323 = vld [vmem:[#allocation2 + $0x60] sm:$0xff]
      %v324 = vld [vmem:[#allocation2 + $0x68] sm:$0xff]
      %v325 = vld [vmem:[#allocation2 + $0x70] sm:$0xff]
      %v326 = vld [vmem:[#allocation2 + $0x78] sm:$0xff]
      %v327 = vld [vmem:[#allocation2 + $0x80] sm:$0xff]
      %v328 = vld [vmem:[#allocation2 + $0x88] sm:$0xff]
      %v329 = vld [vmem:[#allocation2 + $0x90] sm:$0xff]
      %v330 = vld [vmem:[#allocation2 + $0x98] sm:$0xff]
      %v331 = vld [vmem:[#allocation2 + $0xa0] sm:$0xff]
      %v332 = vld [vmem:[#allocation2 + $0xa8] sm:$0xff]
      %v333 = vld [vmem:[#allocation2 + $0xb0] sm:$0xff]
      %v334 = vld [vmem:[#allocation2 + $0xb8] sm:$0xff]
      %v335 = vld [vmem:[#allocation2 + $0xc0] sm:$0xff]
      %v336 = vld [vmem:[#allocation2 + $0xc8] sm:$0xff]
      %v337 = vld [vmem:[#allocation2 + $0xd0] sm:$0xff]
      %v338 = vld [vmem:[#allocation2 + $0xd8] sm:$0xff]
      %v339 = vld [vmem:[#allocation2 + $0xe0] sm:$0xff]
      %v340 = vld [vmem:[#allocation2 + $0xe8] sm:$0xff]
      %v341 = vld [vmem:[#allocation2 + $0xf0] sm:$0xff]
      %v342 = vld [vmem:[#allocation2 + $0xf8] sm:$0xff]
      %v343 = vld [vmem:[%s196] sm:$0xff]
      %v344 = vld [vmem:[%s196 + $0x8] sm:$0xff]
      %v345 = vld [vmem:[%s196 + $0x10] sm:$0xff]
      %v346 = vld [vmem:[%s196 + $0x18] sm:$0xff]
      %v347 = vld [vmem:[%s196 + $0x20] sm:$0xff]
      %v348 = vld [vmem:[%s196 + $0x28] sm:$0xff]
      %v349 = vld [vmem:[%s196 + $0x30] sm:$0xff]
      %v350 = vld [vmem:[%s196 + $0x38] sm:$0xff]
      %v351 = vld [vmem:[%s196 + $0x40] sm:$0xff]
      %v352 = vld [vmem:[%s196 + $0x48] sm:$0xff]
      %v353 = vld [vmem:[%s196 + $0x50] sm:$0xff]
      %v354 = vld [vmem:[%s196 + $0x58] sm:$0xff]
      %v355 = vld [vmem:[%s196 + $0x60] sm:$0xff]
      %v356 = vld [vmem:[%s196 + $0x68] sm:$0xff]
      %v357 = vld [vmem:[%s196 + $0x70] sm:$0xff]
      %v358 = vld [vmem:[%s196 + $0x78] sm:$0xff]
      %v359 = vld [vmem:[%s196 + $0x80] sm:$0xff]
      %v360 = vld [vmem:[%s196 + $0x88] sm:$0xff]
      %v361 = vld [vmem:[%s196 + $0x90] sm:$0xff]
      %v362 = vld [vmem:[%s196 + $0x98] sm:$0xff]
      %v363 = vld [vmem:[%s196 + $0xa0] sm:$0xff]
      %v364 = vld [vmem:[%s196 + $0xa8] sm:$0xff]
      %v365 = vld [vmem:[%s196 + $0xb0] sm:$0xff]
      %v366 = vld [vmem:[%s196 + $0xb8] sm:$0xff]
      %v367 = vld [vmem:[%s196 + $0xc0] sm:$0xff]
      %v368 = vld [vmem:[%s196 + $0xc8] sm:$0xff]
      %v369 = vld [vmem:[%s196 + $0xd0] sm:$0xff]
      %v370 = vld [vmem:[%s196 + $0xd8] sm:$0xff]
      %v371 = vld [vmem:[%s196 + $0xe0] sm:$0xff]
      %v372 = vld [vmem:[%s196 + $0xe8] sm:$0xff]
      %v373 = vld [vmem:[%s196 + $0xf0] sm:$0xff]
      %v374 = vld [vmem:[%s196 + $0xf8] sm:$0xff]
      %v375 = vld [vmem:[%s196 + $0x100] sm:$0xff]
      %v376 = vld [vmem:[%s196 + $0x108] sm:$0xff]
      %v377 = vld [vmem:[%s196 + $0x110] sm:$0xff]
      %v378 = vld [vmem:[%s196 + $0x118] sm:$0xff]
      %v379 = vld [vmem:[%s196 + $0x120] sm:$0xff]
      %v380 = vld [vmem:[%s196 + $0x128] sm:$0xff]
      %v381 = vld [vmem:[%s196 + $0x130] sm:$0xff]
      %v382 = vld [vmem:[%s196 + $0x138] sm:$0xff]
      %v383 = vld [vmem:[%s196 + $0x140] sm:$0xff]
      %v384 = vld [vmem:[%s196 + $0x148] sm:$0xff]
      %v385 = vld [vmem:[%s196 + $0x150] sm:$0xff]
      %v386 = vld [vmem:[%s196 + $0x158] sm:$0xff]
      %v387 = vld [vmem:[%s196 + $0x160] sm:$0xff]
      %v388 = vld [vmem:[%s196 + $0x168] sm:$0xff]
      %v389 = vld [vmem:[%s196 + $0x170] sm:$0xff]
      %v390 = vld [vmem:[%s196 + $0x178] sm:$0xff]
      %v391 = vld [vmem:[%s196 + $0x180] sm:$0xff]
      %v392 = vld [vmem:[%s196 + $0x188] sm:$0xff]
      %v393 = vld [vmem:[%s196 + $0x190] sm:$0xff]
      %v394 = vld [vmem:[%s196 + $0x198] sm:$0xff]
      %v395 = vld [vmem:[%s196 + $0x1a0] sm:$0xff]
      %v396 = vld [vmem:[%s196 + $0x1a8] sm:$0xff]
      %v397 = vld [vmem:[%s196 + $0x1b0] sm:$0xff]
      %v398 = vld [vmem:[%s196 + $0x1b8] sm:$0xff]
      %v399 = vld [vmem:[%s196 + $0x1c0] sm:$0xff]
      %v400 = vld [vmem:[%s196 + $0x1c8] sm:$0xff]
      %v401 = vld [vmem:[%s196 + $0x1d0] sm:$0xff]
      %v402 = vld [vmem:[%s196 + $0x1d8] sm:$0xff]
      %v403 = vld [vmem:[%s196 + $0x1e0] sm:$0xff]
      %v404 = vld [vmem:[%s196 + $0x1e8] sm:$0xff]
      %v405 = vld [vmem:[%s196 + $0x1f0] sm:$0xff]
      %v406 = vld [vmem:[%s196 + $0x1f8] sm:$0xff]
      %v471 = vunpack.c.l.b16 %v343
      %v472 = vunpack.c.h.b16 %v343
      %v473 = vunpack.c.l.b16 %v344
      %v474 = vunpack.c.h.b16 %v344
      %v475 = vunpack.c.l.b16 %v345
      %v476 = vunpack.c.h.b16 %v345
      %v477 = vunpack.c.l.b16 %v346
      %v478 = vunpack.c.h.b16 %v346
      %v479 = vunpack.c.l.b16 %v347
      %v480 = vunpack.c.h.b16 %v347
      %v481 = vunpack.c.l.b16 %v348
      %v482 = vunpack.c.h.b16 %v348
      %v483 = vunpack.c.l.b16 %v349
      %v484 = vunpack.c.h.b16 %v349
      %v485 = vunpack.c.l.b16 %v350
      %v486 = vunpack.c.h.b16 %v350
      %v487 = vunpack.c.l.b16 %v351
      %v488 = vunpack.c.h.b16 %v351
      %v489 = vunpack.c.l.b16 %v352
      %v490 = vunpack.c.h.b16 %v352
      %v491 = vunpack.c.l.b16 %v353
      %v492 = vunpack.c.h.b16 %v353
      %v493 = vunpack.c.l.b16 %v354
      %v494 = vunpack.c.h.b16 %v354
      %v495 = vunpack.c.l.b16 %v355
      %v496 = vunpack.c.h.b16 %v355
      %v497 = vunpack.c.l.b16 %v356
      %v498 = vunpack.c.h.b16 %v356
      %v499 = vunpack.c.l.b16 %v357
      %v500 = vunpack.c.h.b16 %v357
      %v501 = vunpack.c.l.b16 %v358
      %v502 = vunpack.c.h.b16 %v358
      %v503 = vunpack.c.l.b16 %v359
      %v504 = vunpack.c.h.b16 %v359
      %v505 = vunpack.c.l.b16 %v360
      %v506 = vunpack.c.h.b16 %v360
      %v507 = vunpack.c.l.b16 %v361
      %v508 = vunpack.c.h.b16 %v361
      %v509 = vunpack.c.l.b16 %v362
      %v510 = vunpack.c.h.b16 %v362
      %v511 = vunpack.c.l.b16 %v363
      %v512 = vunpack.c.h.b16 %v363
      %v513 = vunpack.c.l.b16 %v364
      %v514 = vunpack.c.h.b16 %v364
      %v515 = vunpack.c.l.b16 %v365
      %v516 = vunpack.c.h.b16 %v365
      %v517 = vunpack.c.l.b16 %v366
      %v518 = vunpack.c.h.b16 %v366
      %v519 = vunpack.c.l.b16 %v367
      %v520 = vunpack.c.h.b16 %v367
      %v521 = vunpack.c.l.b16 %v368
      %v522 = vunpack.c.h.b16 %v368
      %v523 = vunpack.c.l.b16 %v369
      %v524 = vunpack.c.h.b16 %v369
      %v525 = vunpack.c.l.b16 %v370
      %v526 = vunpack.c.h.b16 %v370
      %v527 = vunpack.c.l.b16 %v371
      %v528 = vunpack.c.h.b16 %v371
      %v529 = vunpack.c.l.b16 %v372
      %v530 = vunpack.c.h.b16 %v372
      %v531 = vunpack.c.l.b16 %v373
      %v532 = vunpack.c.h.b16 %v373
      %v533 = vunpack.c.l.b16 %v374
      %v534 = vunpack.c.h.b16 %v374
      %v535 = vunpack.c.l.b16 %v375
      %v536 = vunpack.c.h.b16 %v375
      %v537 = vunpack.c.l.b16 %v376
      %v538 = vunpack.c.h.b16 %v376
      %v539 = vunpack.c.l.b16 %v377
      %v540 = vunpack.c.h.b16 %v377
      %v541 = vunpack.c.l.b16 %v378
      %v542 = vunpack.c.h.b16 %v378
      %v543 = vunpack.c.l.b16 %v379
      %v544 = vunpack.c.h.b16 %v379
      %v545 = vunpack.c.l.b16 %v380
      %v546 = vunpack.c.h.b16 %v380
      %v547 = vunpack.c.l.b16 %v381
      %v548 = vunpack.c.h.b16 %v381
      %v549 = vunpack.c.l.b16 %v382
      %v550 = vunpack.c.h.b16 %v382
      %v551 = vunpack.c.l.b16 %v383
      %v552 = vunpack.c.h.b16 %v383
      %v553 = vunpack.c.l.b16 %v384
      %v554 = vunpack.c.h.b16 %v384
      %v555 = vunpack.c.l.b16 %v385
      %v556 = vunpack.c.h.b16 %v385
      %v557 = vunpack.c.l.b16 %v386
      %v558 = vunpack.c.h.b16 %v386
      %v559 = vunpack.c.l.b16 %v387
      %v560 = vunpack.c.h.b16 %v387
      %v561 = vunpack.c.l.b16 %v388
      %v562 = vunpack.c.h.b16 %v388
      %v563 = vunpack.c.l.b16 %v389
      %v564 = vunpack.c.h.b16 %v389
      %v565 = vunpack.c.l.b16 %v390
      %v566 = vunpack.c.h.b16 %v390
      %v567 = vunpack.c.l.b16 %v391
      %v568 = vunpack.c.h.b16 %v391
      %v569 = vunpack.c.l.b16 %v392
      %v570 = vunpack.c.h.b16 %v392
      %v571 = vunpack.c.l.b16 %v393
      %v572 = vunpack.c.h.b16 %v393
      %v573 = vunpack.c.l.b16 %v394
      %v574 = vunpack.c.h.b16 %v394
      %v575 = vunpack.c.l.b16 %v395
      %v576 = vunpack.c.h.b16 %v395
      %v577 = vunpack.c.l.b16 %v396
      %v578 = vunpack.c.h.b16 %v396
      %v579 = vunpack.c.l.b16 %v397
      %v580 = vunpack.c.h.b16 %v397
      %v581 = vunpack.c.l.b16 %v398
      %v582 = vunpack.c.h.b16 %v398
      %v583 = vunpack.c.l.b16 %v399
      %v584 = vunpack.c.h.b16 %v399
      %v585 = vunpack.c.l.b16 %v400
      %v586 = vunpack.c.h.b16 %v400
      %v587 = vunpack.c.l.b16 %v401
      %v588 = vunpack.c.h.b16 %v401
      %v589 = vunpack.c.l.b16 %v402
      %v590 = vunpack.c.h.b16 %v402
      %v591 = vunpack.c.l.b16 %v403
      %v592 = vunpack.c.h.b16 %v403
      %v593 = vunpack.c.l.b16 %v404
      %v594 = vunpack.c.h.b16 %v404
      %v595 = vunpack.c.l.b16 %v405
      %v596 = vunpack.c.h.b16 %v405
      %v597 = vunpack.c.l.b16 %v406
      %v598 = vunpack.c.h.b16 %v406
      %v599 = vpack.c.b16 %v475, %v471
      %v600 = vpack.c.b16 %v476, %v472
      %v601 = vpack.c.b16 %v477, %v473
      %v602 = vpack.c.b16 %v478, %v474
      %v603 = vpack.c.b16 %v483, %v479
      %v604 = vpack.c.b16 %v484, %v480
      %v605 = vpack.c.b16 %v485, %v481
      %v606 = vpack.c.b16 %v486, %v482
      %v607 = vpack.c.b16 %v491, %v487
      %v608 = vpack.c.b16 %v492, %v488
      %v609 = vpack.c.b16 %v493, %v489
      %v610 = vpack.c.b16 %v494, %v490
      %v611 = vpack.c.b16 %v499, %v495
      %v612 = vpack.c.b16 %v500, %v496
      %v613 = vpack.c.b16 %v501, %v497
      %v614 = vpack.c.b16 %v502, %v498
      %v615 = vpack.c.b16 %v507, %v503
      %v616 = vpack.c.b16 %v508, %v504
      %v617 = vpack.c.b16 %v509, %v505
      %v618 = vpack.c.b16 %v510, %v506
      %v619 = vpack.c.b16 %v515, %v511
      %v620 = vpack.c.b16 %v516, %v512
      %v621 = vpack.c.b16 %v517, %v513
      %v622 = vpack.c.b16 %v518, %v514
      %v623 = vpack.c.b16 %v523, %v519
      %v624 = vpack.c.b16 %v524, %v520
      %v625 = vpack.c.b16 %v525, %v521
      %v626 = vpack.c.b16 %v526, %v522
      %v627 = vpack.c.b16 %v531, %v527
      %v628 = vpack.c.b16 %v532, %v528
      %v629 = vpack.c.b16 %v533, %v529
      %v630 = vpack.c.b16 %v534, %v530
      %v631 = vpack.c.b16 %v539, %v535
      %v632 = vpack.c.b16 %v540, %v536
      %v633 = vpack.c.b16 %v541, %v537
      %v634 = vpack.c.b16 %v542, %v538
      %v635 = vpack.c.b16 %v547, %v543
      %v636 = vpack.c.b16 %v548, %v544
      %v637 = vpack.c.b16 %v549, %v545
      %v638 = vpack.c.b16 %v550, %v546
      %v639 = vpack.c.b16 %v555, %v551
      %v640 = vpack.c.b16 %v556, %v552
      %v641 = vpack.c.b16 %v557, %v553
      %v642 = vpack.c.b16 %v558, %v554
      %v643 = vpack.c.b16 %v563, %v559
      %v644 = vpack.c.b16 %v564, %v560
      %v645 = vpack.c.b16 %v565, %v561
      %v646 = vpack.c.b16 %v566, %v562
      %v647 = vpack.c.b16 %v571, %v567
      %v648 = vpack.c.b16 %v572, %v568
      %v649 = vpack.c.b16 %v573, %v569
      %v650 = vpack.c.b16 %v574, %v570
      %v651 = vpack.c.b16 %v579, %v575
      %v652 = vpack.c.b16 %v580, %v576
      %v653 = vpack.c.b16 %v581, %v577
      %v654 = vpack.c.b16 %v582, %v578
      %v655 = vpack.c.b16 %v587, %v583
      %v656 = vpack.c.b16 %v588, %v584
      %v657 = vpack.c.b16 %v589, %v585
      %v658 = vpack.c.b16 %v590, %v586
      %v659 = vpack.c.b16 %v595, %v591
      %v660 = vpack.c.b16 %v596, %v592
      %v661 = vpack.c.b16 %v597, %v593
      %v662 = vpack.c.b16 %v598, %v594
      %v791 = vunpack.c.l.b16 %v247
      %v792 = vunpack.c.l.b16 %v248
      %v793 = vunpack.c.l.b16 %v249
      %v794 = vunpack.c.l.b16 %v250
      %v795 = vunpack.c.l.b16 %v251
      %v796 = vunpack.c.l.b16 %v252
      %v797 = vunpack.c.l.b16 %v253
      %v798 = vunpack.c.l.b16 %v254
      %v799 = vunpack.c.l.b16 %v255
      %v800 = vunpack.c.l.b16 %v256
      %v801 = vunpack.c.l.b16 %v257
      %v802 = vunpack.c.l.b16 %v258
      %v803 = vunpack.c.l.b16 %v259
      %v804 = vunpack.c.l.b16 %v260
      %v805 = vunpack.c.l.b16 %v261
      %v806 = vunpack.c.l.b16 %v262
      %v807 = vunpack.c.l.b16 %v263
      %v808 = vunpack.c.l.b16 %v264
      %v809 = vunpack.c.l.b16 %v265
      %v810 = vunpack.c.l.b16 %v266
      %v811 = vunpack.c.l.b16 %v267
      %v812 = vunpack.c.l.b16 %v268
      %v813 = vunpack.c.l.b16 %v269
      %v814 = vunpack.c.l.b16 %v270
      %v815 = vunpack.c.l.b16 %v271
      %v816 = vunpack.c.l.b16 %v272
      %v817 = vunpack.c.l.b16 %v273
      %v818 = vunpack.c.l.b16 %v274
      %v819 = vunpack.c.l.b16 %v275
      %v820 = vunpack.c.l.b16 %v276
      %v821 = vunpack.c.l.b16 %v277
      %v822 = vunpack.c.l.b16 %v278
      %v823 = vunpack.c.l.b16 %v279
      %v824 = vunpack.c.l.b16 %v280
      %v825 = vunpack.c.l.b16 %v281
      %v826 = vunpack.c.l.b16 %v282
      %v827 = vunpack.c.l.b16 %v283
      %v828 = vunpack.c.l.b16 %v284
      %v829 = vunpack.c.l.b16 %v285
      %v830 = vunpack.c.l.b16 %v286
      %v831 = vunpack.c.l.b16 %v287
      %v832 = vunpack.c.l.b16 %v288
      %v833 = vunpack.c.l.b16 %v289
      %v834 = vunpack.c.l.b16 %v290
      %v835 = vunpack.c.l.b16 %v291
      %v836 = vunpack.c.l.b16 %v292
      %v837 = vunpack.c.l.b16 %v293
      %v838 = vunpack.c.l.b16 %v294
      %v839 = vunpack.c.l.b16 %v295
      %v840 = vunpack.c.l.b16 %v296
      %v841 = vunpack.c.l.b16 %v297
      %v842 = vunpack.c.l.b16 %v298
      %v843 = vunpack.c.l.b16 %v299
      %v844 = vunpack.c.l.b16 %v300
      %v845 = vunpack.c.l.b16 %v301
      %v846 = vunpack.c.l.b16 %v302
      %v847 = vunpack.c.l.b16 %v303
      %v848 = vunpack.c.l.b16 %v304
      %v849 = vunpack.c.l.b16 %v305
      %v850 = vunpack.c.l.b16 %v306
      %v851 = vunpack.c.l.b16 %v307
      %v852 = vunpack.c.l.b16 %v308
      %v853 = vunpack.c.l.b16 %v309
      %v854 = vunpack.c.l.b16 %v310
      %v855 = vpack.c.b16 %v792, %v791
      %v856 = vpack.c.b16 %v794, %v793
      %v857 = vpack.c.b16 %v796, %v795
      %v858 = vpack.c.b16 %v798, %v797
      %v859 = vpack.c.b16 %v800, %v799
      %v860 = vpack.c.b16 %v802, %v801
      %v861 = vpack.c.b16 %v804, %v803
      %v862 = vpack.c.b16 %v806, %v805
      %v863 = vpack.c.b16 %v808, %v807
      %v864 = vpack.c.b16 %v810, %v809
      %v865 = vpack.c.b16 %v812, %v811
      %v866 = vpack.c.b16 %v814, %v813
      %v867 = vpack.c.b16 %v816, %v815
      %v868 = vpack.c.b16 %v818, %v817
      %v869 = vpack.c.b16 %v820, %v819
      %v870 = vpack.c.b16 %v822, %v821
      %v871 = vpack.c.b16 %v824, %v823
      %v872 = vpack.c.b16 %v826, %v825
      %v873 = vpack.c.b16 %v828, %v827
      %v874 = vpack.c.b16 %v830, %v829
      %v875 = vpack.c.b16 %v832, %v831
      %v876 = vpack.c.b16 %v834, %v833
      %v877 = vpack.c.b16 %v836, %v835
      %v878 = vpack.c.b16 %v838, %v837
      %v879 = vpack.c.b16 %v840, %v839
      %v880 = vpack.c.b16 %v842, %v841
      %v881 = vpack.c.b16 %v844, %v843
      %v882 = vpack.c.b16 %v846, %v845
      %v883 = vpack.c.b16 %v848, %v847
      %v884 = vpack.c.b16 %v850, %v849
      %v885 = vpack.c.b16 %v852, %v851
      %v886 = vpack.c.b16 %v854, %v853
      %919 = vmatprep.subr.bf16.mxu0 0
      %920 = vmatpush1.bf16.msra.mxu0 %v855
      %921 = vmatprep.subr.bf16.mxu0 0
      %922 = vmatpush1.bf16.msra.mxu0 %v856
      %923 = vmatprep.subr.bf16.mxu0 0
      %924 = vmatpush1.bf16.msra.mxu0 %v857
      %925 = vmatprep.subr.bf16.mxu0 0
      %926 = vmatpush1.bf16.msra.mxu0 %v858
      %927 = vmatprep.subr.bf16.mxu0 0
      %928 = vmatpush1.bf16.msra.mxu0 %v859
      %929 = vmatprep.subr.bf16.mxu0 0
      %930 = vmatpush1.bf16.msra.mxu0 %v860
      %931 = vmatprep.subr.bf16.mxu0 0
      %932 = vmatpush1.bf16.msra.mxu0 %v861
      %933 = vmatprep.subr.bf16.mxu0 0
      %934 = vmatpush1.bf16.msra.mxu0 %v862
      %935 = vmatprep.subr.bf16.mxu0 0
      %936 = vmatpush1.bf16.msra.mxu0 %v863
      %937 = vmatprep.subr.bf16.mxu0 0
      %938 = vmatpush1.bf16.msra.mxu0 %v864
      %939 = vmatprep.subr.bf16.mxu0 0
      %940 = vmatpush1.bf16.msra.mxu0 %v865
      %941 = vmatprep.subr.bf16.mxu0 0
      %942 = vmatpush1.bf16.msra.mxu0 %v866
      %943 = vmatprep.subr.bf16.mxu0 0
      %944 = vmatpush1.bf16.msra.mxu0 %v867
      %945 = vmatprep.subr.bf16.mxu0 0
      %946 = vmatpush1.bf16.msra.mxu0 %v868
      %947 = vmatprep.subr.bf16.mxu0 0
      %948 = vmatpush1.bf16.msra.mxu0 %v869
      %949 = vmatprep.subr.bf16.mxu0 0
      %950 = vmatpush1.bf16.msra.mxu0 %v870
      %951 = vmatprep.mubr.bf16.mxu0 %v600
      %952 = vmatmul.mubr.bf16.gmra.mrb[0].mxu0 %v599
      %v953 = vpop.f32.mrb[0].mxu0
      %v954 = vadd.f32 0.0, %v953
      %v955 = vpop.f32.mrb[0].mxu0
      %v956 = vpop.f32.mrb[0].mxu0
      %v957 = vadd.f32 0.0, %v956
      %v958 = vpop.f32.mrb[0].mxu0
      %959 = vmatprep.mubr.bf16.mxu0 %v604
      %960 = vmatmul.mubr.bf16.gmra.mrb[0].mxu0 %v603
      %v961 = vpop.f32.mrb[0].mxu0
      %v962 = vadd.f32 0.0, %v961
      %v963 = vpop.f32.mrb[0].mxu0
      %v964 = vpop.f32.mrb[0].mxu0
      %v965 = vadd.f32 0.0, %v964
      %v966 = vpop.f32.mrb[0].mxu0
      %967 = vmatprep.mubr.bf16.mxu0 %v608
      %968 = vmatmul.mubr.bf16.gmra.mrb[0].mxu0 %v607
      %v969 = vpop.f32.mrb[0].mxu0
      %v970 = vadd.f32 0.0, %v969
      %v971 = vpop.f32.mrb[0].mxu0
      %v972 = vpop.f32.mrb[0].mxu0
      %v973 = vadd.f32 0.0, %v972
      %v974 = vpop.f32.mrb[0].mxu0
      %975 = vmatprep.mubr.bf16.mxu0 %v612
      %976 = vmatmul.mubr.bf16.gmra.mrb[0].mxu0 %v611
      %v977 = vpop.f32.mrb[0].mxu0
      %v978 = vadd.f32 0.0, %v977
      %v979 = vpop.f32.mrb[0].mxu0
      %v980 = vpop.f32.mrb[0].mxu0
      %v981 = vadd.f32 0.0, %v980
      %v982 = vpop.f32.mrb[0].mxu0
      %983 = vmatprep.mubr.bf16.mxu0 %v616
      %984 = vmatmul.mubr.bf16.gmra.mrb[0].mxu0 %v615
      %v985 = vpop.f32.mrb[0].mxu0
      %v986 = vadd.f32 0.0, %v985
      %v987 = vpop.f32.mrb[0].mxu0
      %v988 = vpop.f32.mrb[0].mxu0
      %v989 = vadd.f32 0.0, %v988
      %v990 = vpop.f32.mrb[0].mxu0
      %991 = vmatprep.mubr.bf16.mxu0 %v620
      %992 = vmatmul.mubr.bf16.gmra.mrb[0].mxu0 %v619
      %v993 = vpop.f32.mrb[0].mxu0
      %v994 = vadd.f32 0.0, %v993
      %v995 = vpop.f32.mrb[0].mxu0
      %v996 = vpop.f32.mrb[0].mxu0
      %v997 = vadd.f32 0.0, %v996
      %v998 = vpop.f32.mrb[0].mxu0
      %999 = vmatprep.mubr.bf16.mxu0 %v624
      %1000 = vmatmul.mubr.bf16.gmra.mrb[0].mxu0 %v623
      %v1001 = vpop.f32.mrb[0].mxu0
      %v1002 = vadd.f32 0.0, %v1001
      %v1003 = vpop.f32.mrb[0].mxu0
      %v1004 = vpop.f32.mrb[0].mxu0
      %v1005 = vadd.f32 0.0, %v1004
      %v1006 = vpop.f32.mrb[0].mxu0
      %1007 = vmatprep.mubr.bf16.mxu0 %v628
      %1008 = vmatmul.mubr.bf16.gmra.mrb[0].mxu0 %v627
      %v1009 = vpop.f32.mrb[0].mxu0
      %v1010 = vadd.f32 0.0, %v1009
      %v1011 = vpop.f32.mrb[0].mxu0
      %v1012 = vpop.f32.mrb[0].mxu0
      %v1013 = vadd.f32 0.0, %v1012
      %v1014 = vpop.f32.mrb[0].mxu0
      %1015 = vmatprep.mubr.bf16.mxu0 %v632
      %1016 = vmatmul.mubr.bf16.gmra.mrb[0].mxu0 %v631
      %v1017 = vpop.f32.mrb[0].mxu0
      %v1018 = vadd.f32 0.0, %v1017
      %v1019 = vpop.f32.mrb[0].mxu0
      %v1020 = vpop.f32.mrb[0].mxu0
      %v1021 = vadd.f32 0.0, %v1020
      %v1022 = vpop.f32.mrb[0].mxu0
      %1023 = vmatprep.mubr.bf16.mxu0 %v636
      %1024 = vmatmul.mubr.bf16.gmra.mrb[0].mxu0 %v635
      %v1025 = vpop.f32.mrb[0].mxu0
      %v1026 = vadd.f32 0.0, %v1025
      %v1027 = vpop.f32.mrb[0].mxu0
      %v1028 = vpop.f32.mrb[0].mxu0
      %v1029 = vadd.f32 0.0, %v1028
      %v1030 = vpop.f32.mrb[0].mxu0
      %1031 = vmatprep.mubr.bf16.mxu0 %v640
      %1032 = vmatmul.mubr.bf16.gmra.mrb[0].mxu0 %v639
      %v1033 = vpop.f32.mrb[0].mxu0
      %v1034 = vadd.f32 0.0, %v1033
      %v1035 = vpop.f32.mrb[0].mxu0
      %v1036 = vpop.f32.mrb[0].mxu0
      %v1037 = vadd.f32 0.0, %v1036
      %v1038 = vpop.f32.mrb[0].mxu0
      %1039 = vmatprep.mubr.bf16.mxu0 %v644
      %1040 = vmatmul.mubr.bf16.gmra.mrb[0].mxu0 %v643
      %v1041 = vpop.f32.mrb[0].mxu0
      %v1042 = vadd.f32 0.0, %v1041
      %v1043 = vpop.f32.mrb[0].mxu0
      %v1044 = vpop.f32.mrb[0].mxu0
      %v1045 = vadd.f32 0.0, %v1044
      %v1046 = vpop.f32.mrb[0].mxu0
      %1047 = vmatprep.mubr.bf16.mxu0 %v648
      %1048 = vmatmul.mubr.bf16.gmra.mrb[0].mxu0 %v647
      %v1049 = vpop.f32.mrb[0].mxu0
      %v1050 = vadd.f32 0.0, %v1049
      %v1051 = vpop.f32.mrb[0].mxu0
      %v1052 = vpop.f32.mrb[0].mxu0
      %v1053 = vadd.f32 0.0, %v1052
      %v1054 = vpop.f32.mrb[0].mxu0
      %1055 = vmatprep.mubr.bf16.mxu0 %v652
      %1056 = vmatmul.mubr.bf16.gmra.mrb[0].mxu0 %v651
      %v1057 = vpop.f32.mrb[0].mxu0
      %v1058 = vadd.f32 0.0, %v1057
      %v1059 = vpop.f32.mrb[0].mxu0
      %v1060 = vpop.f32.mrb[0].mxu0
      %v1061 = vadd.f32 0.0, %v1060
      %v1062 = vpop.f32.mrb[0].mxu0
      %1063 = vmatprep.mubr.bf16.mxu0 %v656
      %1064 = vmatmul.mubr.bf16.gmra.mrb[0].mxu0 %v655
      %v1065 = vpop.f32.mrb[0].mxu0
      %v1066 = vadd.f32 0.0, %v1065
      %v1067 = vpop.f32.mrb[0].mxu0
      %v1068 = vpop.f32.mrb[0].mxu0
      %v1069 = vadd.f32 0.0, %v1068
      %v1070 = vpop.f32.mrb[0].mxu0
      %1071 = vmatprep.mubr.bf16.mxu0 %v660
      %1072 = vmatmul.mubr.bf16.gmra.mrb[0].mxu0 %v659
      %v1073 = vpop.f32.mrb[0].mxu0
      %v1074 = vadd.f32 0.0, %v1073
      %v1075 = vpop.f32.mrb[0].mxu0
      %v1076 = vpop.f32.mrb[0].mxu0
      %v1077 = vadd.f32 0.0, %v1076
      %v1078 = vpop.f32.mrb[0].mxu0
      %1079 = vdwg.mxu0
      %1080 = vmatprep.subr.bf16.mxu0 0
      %1081 = vmatpush1.bf16.msra.mxu0 %v871
      %1082 = vmatprep.subr.bf16.mxu0 0
      %1083 = vmatpush1.bf16.msra.mxu0 %v872
      %1084 = vmatprep.subr.bf16.mxu0 0
      %1085 = vmatpush1.bf16.msra.mxu0 %v873
      %1086 = vmatprep.subr.bf16.mxu0 0
      %1087 = vmatpush1.bf16.msra.mxu0 %v874
      %1088 = vmatprep.subr.bf16.mxu0 0
      %1089 = vmatpush1.bf16.msra.mxu0 %v875
      %1090 = vmatprep.subr.bf16.mxu0 0
      %1091 = vmatpush1.bf16.msra.mxu0 %v876
      %1092 = vmatprep.subr.bf16.mxu0 0
      %1093 = vmatpush1.bf16.msra.mxu0 %v877
      %1094 = vmatprep.subr.bf16.mxu0 0
      %1095 = vmatpush1.bf16.msra.mxu0 %v878
      %1096 = vmatprep.subr.bf16.mxu0 0
      %1097 = vmatpush1.bf16.msra.mxu0 %v879
      %1098 = vmatprep.subr.bf16.mxu0 0
      %1099 = vmatpush1.bf16.msra.mxu0 %v880
      %1100 = vmatprep.subr.bf16.mxu0 0
      %1101 = vmatpush1.bf16.msra.mxu0 %v881
      %1102 = vmatprep.subr.bf16.mxu0 0
      %1103 = vmatpush1.bf16.msra.mxu0 %v882
      %1104 = vmatprep.subr.bf16.mxu0 0
      %1105 = vmatpush1.bf16.msra.mxu0 %v883
      %1106 = vmatprep.subr.bf16.mxu0 0
      %1107 = vmatpush1.bf16.msra.mxu0 %v884
      %1108 = vmatprep.subr.bf16.mxu0 0
      %1109 = vmatpush1.bf16.msra.mxu0 %v885
      %1110 = vmatprep.subr.bf16.mxu0 0
      %1111 = vmatpush1.bf16.msra.mxu0 %v886
      %1112 = vmatprep.mubr.bf16.mxu0 %v602
      %1113 = vmatmul.mubr.bf16.gmra.mrb[0].mxu0 %v601
      %v1114 = vpop.f32.mrb[0].mxu0
      %v1115 = vadd.f32 %v954, %v1114
      %v1116 = vpop.f32.mrb[0].mxu0
      %v1117 = vpop.f32.mrb[0].mxu0
      %v1118 = vadd.f32 %v957, %v1117
      %v1119 = vpop.f32.mrb[0].mxu0
      %1120 = vmatprep.mubr.bf16.mxu0 %v606
      %1121 = vmatmul.mubr.bf16.gmra.mrb[0].mxu0 %v605
      %v1122 = vpop.f32.mrb[0].mxu0
      %v1123 = vadd.f32 %v962, %v1122
      %v1124 = vpop.f32.mrb[0].mxu0
      %v1125 = vpop.f32.mrb[0].mxu0
      %v1126 = vadd.f32 %v965, %v1125
      %v1127 = vpop.f32.mrb[0].mxu0
      %1128 = vmatprep.mubr.bf16.mxu0 %v610
      %1129 = vmatmul.mubr.bf16.gmra.mrb[0].mxu0 %v609
      %v1130 = vpop.f32.mrb[0].mxu0
      %v1131 = vadd.f32 %v970, %v1130
      %v1132 = vpop.f32.mrb[0].mxu0
      %v1133 = vpop.f32.mrb[0].mxu0
      %v1134 = vadd.f32 %v973, %v1133
      %v1135 = vpop.f32.mrb[0].mxu0
      %1136 = vmatprep.mubr.bf16.mxu0 %v614
      %1137 = vmatmul.mubr.bf16.gmra.mrb[0].mxu0 %v613
      %v1138 = vpop.f32.mrb[0].mxu0
      %v1139 = vadd.f32 %v978, %v1138
      %v1140 = vpop.f32.mrb[0].mxu0
      %v1141 = vpop.f32.mrb[0].mxu0
      %v1142 = vadd.f32 %v981, %v1141
      %v1143 = vpop.f32.mrb[0].mxu0
      %1144 = vmatprep.mubr.bf16.mxu0 %v618
      %1145 = vmatmul.mubr.bf16.gmra.mrb[0].mxu0 %v617
      %v1146 = vpop.f32.mrb[0].mxu0
      %v1147 = vadd.f32 %v986, %v1146
      %v1148 = vpop.f32.mrb[0].mxu0
      %v1149 = vpop.f32.mrb[0].mxu0
      %v1150 = vadd.f32 %v989, %v1149
      %v1151 = vpop.f32.mrb[0].mxu0
      %1152 = vmatprep.mubr.bf16.mxu0 %v622
      %1153 = vmatmul.mubr.bf16.gmra.mrb[0].mxu0 %v621
      %v1154 = vpop.f32.mrb[0].mxu0
      %v1155 = vadd.f32 %v994, %v1154
      %v1156 = vpop.f32.mrb[0].mxu0
      %v1157 = vpop.f32.mrb[0].mxu0
      %v1158 = vadd.f32 %v997, %v1157
      %v1159 = vpop.f32.mrb[0].mxu0
      %1160 = vmatprep.mubr.bf16.mxu0 %v626
      %1161 = vmatmul.mubr.bf16.gmra.mrb[0].mxu0 %v625
      %v1162 = vpop.f32.mrb[0].mxu0
      %v1163 = vadd.f32 %v1002, %v1162
      %v1164 = vpop.f32.mrb[0].mxu0
      %v1165 = vpop.f32.mrb[0].mxu0
      %v1166 = vadd.f32 %v1005, %v1165
      %v1167 = vpop.f32.mrb[0].mxu0
      %1168 = vmatprep.mubr.bf16.mxu0 %v630
      %1169 = vmatmul.mubr.bf16.gmra.mrb[0].mxu0 %v629
      %v1170 = vpop.f32.mrb[0].mxu0
      %v1171 = vadd.f32 %v1010, %v1170
      %v1172 = vpop.f32.mrb[0].mxu0
      %v1173 = vpop.f32.mrb[0].mxu0
      %v1174 = vadd.f32 %v1013, %v1173
      %v1175 = vpop.f32.mrb[0].mxu0
      %1176 = vmatprep.mubr.bf16.mxu0 %v634
      %1177 = vmatmul.mubr.bf16.gmra.mrb[0].mxu0 %v633
      %v1178 = vpop.f32.mrb[0].mxu0
      %v1179 = vadd.f32 %v1018, %v1178
      %v1180 = vpop.f32.mrb[0].mxu0
      %v1181 = vpop.f32.mrb[0].mxu0
      %v1182 = vadd.f32 %v1021, %v1181
      %v1183 = vpop.f32.mrb[0].mxu0
      %1184 = vmatprep.mubr.bf16.mxu0 %v638
      %1185 = vmatmul.mubr.bf16.gmra.mrb[0].mxu0 %v637
      %v1186 = vpop.f32.mrb[0].mxu0
      %v1187 = vadd.f32 %v1026, %v1186
      %v1188 = vpop.f32.mrb[0].mxu0
      %v1189 = vpop.f32.mrb[0].mxu0
      %v1190 = vadd.f32 %v1029, %v1189
      %v1191 = vpop.f32.mrb[0].mxu0
      %1192 = vmatprep.mubr.bf16.mxu0 %v642
      %1193 = vmatmul.mubr.bf16.gmra.mrb[0].mxu0 %v641
      %v1194 = vpop.f32.mrb[0].mxu0
      %v1195 = vadd.f32 %v1034, %v1194
      %v1196 = vpop.f32.mrb[0].mxu0
      %v1197 = vpop.f32.mrb[0].mxu0
      %v1198 = vadd.f32 %v1037, %v1197
      %v1199 = vpop.f32.mrb[0].mxu0
      %1200 = vmatprep.mubr.bf16.mxu0 %v646
      %1201 = vmatmul.mubr.bf16.gmra.mrb[0].mxu0 %v645
      %v1202 = vpop.f32.mrb[0].mxu0
      %v1203 = vadd.f32 %v1042, %v1202
      %v1204 = vpop.f32.mrb[0].mxu0
      %v1205 = vpop.f32.mrb[0].mxu0
      %v1206 = vadd.f32 %v1045, %v1205
      %v1207 = vpop.f32.mrb[0].mxu0
      %1208 = vmatprep.mubr.bf16.mxu0 %v650
      %1209 = vmatmul.mubr.bf16.gmra.mrb[0].mxu0 %v649
      %v1210 = vpop.f32.mrb[0].mxu0
      %v1211 = vadd.f32 %v1050, %v1210
      %v1212 = vpop.f32.mrb[0].mxu0
      %v1213 = vpop.f32.mrb[0].mxu0
      %v1214 = vadd.f32 %v1053, %v1213
      %v1215 = vpop.f32.mrb[0].mxu0
      %1216 = vmatprep.mubr.bf16.mxu0 %v654
      %1217 = vmatmul.mubr.bf16.gmra.mrb[0].mxu0 %v653
      %v1218 = vpop.f32.mrb[0].mxu0
      %v1219 = vadd.f32 %v1058, %v1218
      %v1220 = vpop.f32.mrb[0].mxu0
      %v1221 = vpop.f32.mrb[0].mxu0
      %v1222 = vadd.f32 %v1061, %v1221
      %v1223 = vpop.f32.mrb[0].mxu0
      %1224 = vmatprep.mubr.bf16.mxu0 %v658
      %1225 = vmatmul.mubr.bf16.gmra.mrb[0].mxu0 %v657
      %v1226 = vpop.f32.mrb[0].mxu0
      %v1227 = vadd.f32 %v1066, %v1226
      %v1228 = vpop.f32.mrb[0].mxu0
      %v1229 = vpop.f32.mrb[0].mxu0
      %v1230 = vadd.f32 %v1069, %v1229
      %v1231 = vpop.f32.mrb[0].mxu0
      %1232 = vmatprep.mubr.bf16.mxu0 %v662
      %1233 = vmatmul.mubr.bf16.gmra.mrb[0].mxu0 %v661
      %v1234 = vpop.f32.mrb[0].mxu0
      %v1235 = vadd.f32 %v1074, %v1234
      %v1236 = vpop.f32.mrb[0].mxu0
      %v1237 = vpop.f32.mrb[0].mxu0
      %v1238 = vadd.f32 %v1077, %v1237
      %v1239 = vpop.f32.mrb[0].mxu0
      %1240 = vdwg.mxu0
      %v1241 = vadd.f32 %v311, %v1115
      %v1242 = vadd.f32 %v312, %v1118
      %v1243 = vadd.f32 %v313, %v1123
      %v1244 = vadd.f32 %v314, %v1126
      %v1245 = vadd.f32 %v315, %v1131
      %v1246 = vadd.f32 %v316, %v1134
      %v1247 = vadd.f32 %v317, %v1139
      %v1248 = vadd.f32 %v318, %v1142
      %v1249 = vadd.f32 %v319, %v1147
      %v1250 = vadd.f32 %v320, %v1150
      %v1251 = vadd.f32 %v321, %v1155
      %v1252 = vadd.f32 %v322, %v1158
      %v1253 = vadd.f32 %v323, %v1163
      %v1254 = vadd.f32 %v324, %v1166
      %v1255 = vadd.f32 %v325, %v1171
      %v1256 = vadd.f32 %v326, %v1174
      %v1257 = vadd.f32 %v327, %v1179
      %v1258 = vadd.f32 %v328, %v1182
      %v1259 = vadd.f32 %v329, %v1187
      %v1260 = vadd.f32 %v330, %v1190
      %v1261 = vadd.f32 %v331, %v1195
      %v1262 = vadd.f32 %v332, %v1198
      %v1263 = vadd.f32 %v333, %v1203
      %v1264 = vadd.f32 %v334, %v1206
      %v1265 = vadd.f32 %v335, %v1211
      %v1266 = vadd.f32 %v336, %v1214
      %v1267 = vadd.f32 %v337, %v1219
      %v1268 = vadd.f32 %v338, %v1222
      %v1269 = vadd.f32 %v339, %v1227
      %v1270 = vadd.f32 %v340, %v1230
      %v1271 = vadd.f32 %v341, %v1235
      %v1272 = vadd.f32 %v342, %v1238
      %1273 = vst [vmem:[#allocation2] sm:$0xff] %v1241
      %1274 = vst [vmem:[#allocation2 + $0x8] sm:$0xff] %v1242
      %1275 = vst [vmem:[#allocation2 + $0x10] sm:$0xff] %v1243
      %1276 = vst [vmem:[#allocation2 + $0x18] sm:$0xff] %v1244
      %1277 = vst [vmem:[#allocation2 + $0x20] sm:$0xff] %v1245
      %1278 = vst [vmem:[#allocation2 + $0x28] sm:$0xff] %v1246
      %1279 = vst [vmem:[#allocation2 + $0x30] sm:$0xff] %v1247
      %1280 = vst [vmem:[#allocation2 + $0x38] sm:$0xff] %v1248
      %1281 = vst [vmem:[#allocation2 + $0x40] sm:$0xff] %v1249
      %1282 = vst [vmem:[#allocation2 + $0x48] sm:$0xff] %v1250
      %1283 = vst [vmem:[#allocation2 + $0x50] sm:$0xff] %v1251
      %1284 = vst [vmem:[#allocation2 + $0x58] sm:$0xff] %v1252
      %1285 = vst [vmem:[#allocation2 + $0x60] sm:$0xff] %v1253
      %1286 = vst [vmem:[#allocation2 + $0x68] sm:$0xff] %v1254
      %1287 = vst [vmem:[#allocation2 + $0x70] sm:$0xff] %v1255
      %1288 = vst [vmem:[#allocation2 + $0x78] sm:$0xff] %v1256
      %1289 = vst [vmem:[#allocation2 + $0x80] sm:$0xff] %v1257
      %1290 = vst [vmem:[#allocation2 + $0x88] sm:$0xff] %v1258
      %1291 = vst [vmem:[#allocation2 + $0x90] sm:$0xff] %v1259
      %1292 = vst [vmem:[#allocation2 + $0x98] sm:$0xff] %v1260
      %1293 = vst [vmem:[#allocation2 + $0xa0] sm:$0xff] %v1261
      %1294 = vst [vmem:[#allocation2 + $0xa8] sm:$0xff] %v1262
      %1295 = vst [vmem:[#allocation2 + $0xb0] sm:$0xff] %v1263
      %1296 = vst [vmem:[#allocation2 + $0xb8] sm:$0xff] %v1264
      %1297 = vst [vmem:[#allocation2 + $0xc0] sm:$0xff] %v1265
      %1298 = vst [vmem:[#allocation2 + $0xc8] sm:$0xff] %v1266
      %1299 = vst [vmem:[#allocation2 + $0xd0] sm:$0xff] %v1267
      %1300 = vst [vmem:[#allocation2 + $0xd8] sm:$0xff] %v1268
      %1301 = vst [vmem:[#allocation2 + $0xe0] sm:$0xff] %v1269
      %1302 = vst [vmem:[#allocation2 + $0xe8] sm:$0xff] %v1270
      %1303 = vst [vmem:[#allocation2 + $0xf0] sm:$0xff] %v1271
      %1304 = vst [vmem:[#allocation2 + $0xf8] sm:$0xff] %v1272
      // Predicated region
      $region37: #{gcn_forward.7} parent=31 // pred_check
        %p1305 = pneg %p206
      $region38: #{gcn_forward.7} parent=31 // pred_check_branch
        %1307 = sbr.rel (%p1305) target = $region40
      $region39: #{gcn_forward.7} parent=31 // pred_region
        %v1308 = vld [vmem:[#allocation2] sm:$0xff]
        %v1309 = vld [vmem:[#allocation2 + $0x8] sm:$0xff]
        %v1310 = vld [vmem:[#allocation2 + $0x10] sm:$0xff]
        %v1311 = vld [vmem:[#allocation2 + $0x18] sm:$0xff]
        %v1312 = vld [vmem:[#allocation2 + $0x20] sm:$0xff]
        %v1313 = vld [vmem:[#allocation2 + $0x28] sm:$0xff]
        %v1314 = vld [vmem:[#allocation2 + $0x30] sm:$0xff]
        %v1315 = vld [vmem:[#allocation2 + $0x38] sm:$0xff]
        %v1316 = vld [vmem:[#allocation2 + $0x40] sm:$0xff]
        %v1317 = vld [vmem:[#allocation2 + $0x48] sm:$0xff]
        %v1318 = vld [vmem:[#allocation2 + $0x50] sm:$0xff]
        %v1319 = vld [vmem:[#allocation2 + $0x58] sm:$0xff]
        %v1320 = vld [vmem:[#allocation2 + $0x60] sm:$0xff]
        %v1321 = vld [vmem:[#allocation2 + $0x68] sm:$0xff]
        %v1322 = vld [vmem:[#allocation2 + $0x70] sm:$0xff]
        %v1323 = vld [vmem:[#allocation2 + $0x78] sm:$0xff]
        %v1324 = vld [vmem:[#allocation2 + $0x80] sm:$0xff]
        %v1325 = vld [vmem:[#allocation2 + $0x88] sm:$0xff]
        %v1326 = vld [vmem:[#allocation2 + $0x90] sm:$0xff]
        %v1327 = vld [vmem:[#allocation2 + $0x98] sm:$0xff]
        %v1328 = vld [vmem:[#allocation2 + $0xa0] sm:$0xff]
        %v1329 = vld [vmem:[#allocation2 + $0xa8] sm:$0xff]
        %v1330 = vld [vmem:[#allocation2 + $0xb0] sm:$0xff]
        %v1331 = vld [vmem:[#allocation2 + $0xb8] sm:$0xff]
        %v1332 = vld [vmem:[#allocation2 + $0xc0] sm:$0xff]
        %v1333 = vld [vmem:[#allocation2 + $0xc8] sm:$0xff]
        %v1334 = vld [vmem:[#allocation2 + $0xd0] sm:$0xff]
        %v1335 = vld [vmem:[#allocation2 + $0xd8] sm:$0xff]
        %v1336 = vld [vmem:[#allocation2 + $0xe0] sm:$0xff]
        %v1337 = vld [vmem:[#allocation2 + $0xe8] sm:$0xff]
        %v1338 = vld [vmem:[#allocation2 + $0xf0] sm:$0xff]
        %v1339 = vld [vmem:[#allocation2 + $0xf8] sm:$0xff]
        %v1340 = vld [vmem:[%s2] sm:$0x1]
        %v1342 = vlaneseq
        %v1343 = vshrl.u32 %v1342, 7
        %v1344 = vsub.s32 0, %v1343
        %v1345 = vrot.slane %v1340, %v1344
        %v1347 = vadd.f32 %v1308, %v1345
        %v1348 = vadd.f32 %v1309, %v1345
        %v1349 = vadd.f32 %v1310, %v1345
        %v1350 = vadd.f32 %v1311, %v1345
        %v1351 = vadd.f32 %v1312, %v1345
        %v1352 = vadd.f32 %v1313, %v1345
        %v1353 = vadd.f32 %v1314, %v1345
        %v1354 = vadd.f32 %v1315, %v1345
        %v1355 = vadd.f32 %v1316, %v1345
        %v1356 = vadd.f32 %v1317, %v1345
        %v1357 = vadd.f32 %v1318, %v1345
        %v1358 = vadd.f32 %v1319, %v1345
        %v1359 = vadd.f32 %v1320, %v1345
        %v1360 = vadd.f32 %v1321, %v1345
        %v1361 = vadd.f32 %v1322, %v1345
        %v1362 = vadd.f32 %v1323, %v1345
        %v1363 = vadd.f32 %v1324, %v1345
        %v1364 = vadd.f32 %v1325, %v1345
        %v1365 = vadd.f32 %v1326, %v1345
        %v1366 = vadd.f32 %v1327, %v1345
        %v1367 = vadd.f32 %v1328, %v1345
        %v1368 = vadd.f32 %v1329, %v1345
        %v1369 = vadd.f32 %v1330, %v1345
        %v1370 = vadd.f32 %v1331, %v1345
        %v1371 = vadd.f32 %v1332, %v1345
        %v1372 = vadd.f32 %v1333, %v1345
        %v1373 = vadd.f32 %v1334, %v1345
        %v1374 = vadd.f32 %v1335, %v1345
        %v1375 = vadd.f32 %v1336, %v1345
        %v1376 = vadd.f32 %v1337, %v1345
        %v1377 = vadd.f32 %v1338, %v1345
        %v1378 = vadd.f32 %v1339, %v1345
        %v1379 = vlaneseq
        %v1380 = vand.u32 %v1379, 127
        %vm1381 = vcmp.lt.s32.totalorder %v1380, 4
        %v1382 = vsel %vm1381, %v1347, -inf
        %v1383 = vsel %vm1381, %v1348, -inf
        %v1384 = vsel %vm1381, %v1349, -inf
        %v1385 = vsel %vm1381, %v1350, -inf
        %v1386 = vsel %vm1381, %v1351, -inf
        %v1387 = vsel %vm1381, %v1352, -inf
        %v1388 = vsel %vm1381, %v1353, -inf
        %v1389 = vsel %vm1381, %v1354, -inf
        %v1390 = vsel %vm1381, %v1355, -inf
        %v1391 = vsel %vm1381, %v1356, -inf
        %v1392 = vsel %vm1381, %v1357, -inf
        %v1393 = vsel %vm1381, %v1358, -inf
        %v1394 = vsel %vm1381, %v1359, -inf
        %v1395 = vsel %vm1381, %v1360, -inf
        %v1396 = vsel %vm1381, %v1361, -inf
        %v1397 = vsel %vm1381, %v1362, -inf
        %v1398 = vsel %vm1381, %v1363, -inf
        %v1399 = vsel %vm1381, %v1364, -inf
        %v1400 = vsel %vm1381, %v1365, -inf
        %v1401 = vsel %vm1381, %v1366, -inf
        %v1402 = vsel %vm1381, %v1367, -inf
        %v1403 = vsel %vm1381, %v1368, -inf
        %v1404 = vsel %vm1381, %v1369, -inf
        %v1405 = vsel %vm1381, %v1370, -inf
        %v1406 = vsel %vm1381, %v1371, -inf
        %v1407 = vsel %vm1381, %v1372, -inf
        %v1408 = vsel %vm1381, %v1373, -inf
        %v1409 = vsel %vm1381, %v1374, -inf
        %v1410 = vsel %vm1381, %v1375, -inf
        %v1411 = vsel %vm1381, %v1376, -inf
        %v1412 = vsel %vm1381, %v1377, -inf
        %v1413 = vsel %vm1381, %v1378, -inf
        %1414 = vmax.xlane.f32.xlu0 %v1382
        %v1415 = vpop.xlane.xlu0 %1414
        %1416 = vmax.xlane.f32.xlu0 %v1383
        %v1417 = vpop.xlane.xlu0 %1416
        %1418 = vmax.xlane.f32.xlu0 %v1384
        %v1419 = vpop.xlane.xlu0 %1418
        %1420 = vmax.xlane.f32.xlu0 %v1385
        %v1421 = vpop.xlane.xlu0 %1420
        %1422 = vmax.xlane.f32.xlu0 %v1386
        %v1423 = vpop.xlane.xlu0 %1422
        %1424 = vmax.xlane.f32.xlu0 %v1387
        %v1425 = vpop.xlane.xlu0 %1424
        %1426 = vmax.xlane.f32.xlu0 %v1388
        %v1427 = vpop.xlane.xlu0 %1426
        %1428 = vmax.xlane.f32.xlu0 %v1389
        %v1429 = vpop.xlane.xlu0 %1428
        %1430 = vmax.xlane.f32.xlu0 %v1390
        %v1431 = vpop.xlane.xlu0 %1430
        %1432 = vmax.xlane.f32.xlu0 %v1391
        %v1433 = vpop.xlane.xlu0 %1432
        %1434 = vmax.xlane.f32.xlu0 %v1392
        %v1435 = vpop.xlane.xlu0 %1434
        %1436 = vmax.xlane.f32.xlu0 %v1393
        %v1437 = vpop.xlane.xlu0 %1436
        %1438 = vmax.xlane.f32.xlu0 %v1394
        %v1439 = vpop.xlane.xlu0 %1438
        %1440 = vmax.xlane.f32.xlu0 %v1395
        %v1441 = vpop.xlane.xlu0 %1440
        %1442 = vmax.xlane.f32.xlu0 %v1396
        %v1443 = vpop.xlane.xlu0 %1442
        %1444 = vmax.xlane.f32.xlu0 %v1397
        %v1445 = vpop.xlane.xlu0 %1444
        %1446 = vmax.xlane.f32.xlu0 %v1398
        %v1447 = vpop.xlane.xlu0 %1446
        %1448 = vmax.xlane.f32.xlu0 %v1399
        %v1449 = vpop.xlane.xlu0 %1448
        %1450 = vmax.xlane.f32.xlu0 %v1400
        %v1451 = vpop.xlane.xlu0 %1450
        %1452 = vmax.xlane.f32.xlu0 %v1401
        %v1453 = vpop.xlane.xlu0 %1452
        %1454 = vmax.xlane.f32.xlu0 %v1402
        %v1455 = vpop.xlane.xlu0 %1454
        %1456 = vmax.xlane.f32.xlu0 %v1403
        %v1457 = vpop.xlane.xlu0 %1456
        %1458 = vmax.xlane.f32.xlu0 %v1404
        %v1459 = vpop.xlane.xlu0 %1458
        %1460 = vmax.xlane.f32.xlu0 %v1405
        %v1461 = vpop.xlane.xlu0 %1460
        %1462 = vmax.xlane.f32.xlu0 %v1406
        %v1463 = vpop.xlane.xlu0 %1462
        %1464 = vmax.xlane.f32.xlu0 %v1407
        %v1465 = vpop.xlane.xlu0 %1464
        %1466 = vmax.xlane.f32.xlu0 %v1408
        %v1467 = vpop.xlane.xlu0 %1466
        %1468 = vmax.xlane.f32.xlu0 %v1409
        %v1469 = vpop.xlane.xlu0 %1468
        %1470 = vmax.xlane.f32.xlu0 %v1410
        %v1471 = vpop.xlane.xlu0 %1470
        %1472 = vmax.xlane.f32.xlu0 %v1411
        %v1473 = vpop.xlane.xlu0 %1472
        %1474 = vmax.xlane.f32.xlu0 %v1412
        %v1475 = vpop.xlane.xlu0 %1474
        %1476 = vmax.xlane.f32.xlu0 %v1413
        %v1477 = vpop.xlane.xlu0 %1476
        %v1478 = vsub.f32 %v1382, %v1415
        %v1479 = vsub.f32 %v1383, %v1417
        %v1480 = vsub.f32 %v1384, %v1419
        %v1481 = vsub.f32 %v1385, %v1421
        %v1482 = vsub.f32 %v1386, %v1423
        %v1483 = vsub.f32 %v1387, %v1425
        %v1484 = vsub.f32 %v1388, %v1427
        %v1485 = vsub.f32 %v1389, %v1429
        %v1486 = vsub.f32 %v1390, %v1431
        %v1487 = vsub.f32 %v1391, %v1433
        %v1488 = vsub.f32 %v1392, %v1435
        %v1489 = vsub.f32 %v1393, %v1437
        %v1490 = vsub.f32 %v1394, %v1439
        %v1491 = vsub.f32 %v1395, %v1441
        %v1492 = vsub.f32 %v1396, %v1443
        %v1493 = vsub.f32 %v1397, %v1445
        %v1494 = vsub.f32 %v1398, %v1447
        %v1495 = vsub.f32 %v1399, %v1449
        %v1496 = vsub.f32 %v1400, %v1451
        %v1497 = vsub.f32 %v1401, %v1453
        %v1498 = vsub.f32 %v1402, %v1455
        %v1499 = vsub.f32 %v1403, %v1457
        %v1500 = vsub.f32 %v1404, %v1459
        %v1501 = vsub.f32 %v1405, %v1461
        %v1502 = vsub.f32 %v1406, %v1463
        %v1503 = vsub.f32 %v1407, %v1465
        %v1504 = vsub.f32 %v1408, %v1467
        %v1505 = vsub.f32 %v1409, %v1469
        %v1506 = vsub.f32 %v1410, %v1471
        %v1507 = vsub.f32 %v1411, %v1473
        %v1508 = vsub.f32 %v1412, %v1475
        %v1509 = vsub.f32 %v1413, %v1477
        %v1510 = vmul.f32 %v1478, 1.442695
        %v1511 = vpow.pop %v1510
        %v1512 = vmul.f32 %v1479, 1.442695
        %v1513 = vpow.pop %v1512
        %v1514 = vmul.f32 %v1480, 1.442695
        %v1515 = vpow.pop %v1514
        %v1516 = vmul.f32 %v1481, 1.442695
        %v1517 = vpow.pop %v1516
        %v1518 = vmul.f32 %v1482, 1.442695
        %v1519 = vpow.pop %v1518
        %v1520 = vmul.f32 %v1483, 1.442695
        %v1521 = vpow.pop %v1520
        %v1522 = vmul.f32 %v1484, 1.442695
        %v1523 = vpow.pop %v1522
        %v1524 = vmul.f32 %v1485, 1.442695
        %v1525 = vpow.pop %v1524
        %v1526 = vmul.f32 %v1486, 1.442695
        %v1527 = vpow.pop %v1526
        %v1528 = vmul.f32 %v1487, 1.442695
        %v1529 = vpow.pop %v1528
        %v1530 = vmul.f32 %v1488, 1.442695
        %v1531 = vpow.pop %v1530
        %v1532 = vmul.f32 %v1489, 1.442695
        %v1533 = vpow.pop %v1532
        %v1534 = vmul.f32 %v1490, 1.442695
        %v1535 = vpow.pop %v1534
        %v1536 = vmul.f32 %v1491, 1.442695
        %v1537 = vpow.pop %v1536
        %v1538 = vmul.f32 %v1492, 1.442695
        %v1539 = vpow.pop %v1538
        %v1540 = vmul.f32 %v1493, 1.442695
        %v1541 = vpow.pop %v1540
        %v1542 = vmul.f32 %v1494, 1.442695
        %v1543 = vpow.pop %v1542
        %v1544 = vmul.f32 %v1495, 1.442695
        %v1545 = vpow.pop %v1544
        %v1546 = vmul.f32 %v1496, 1.442695
        %v1547 = vpow.pop %v1546
        %v1548 = vmul.f32 %v1497, 1.442695
        %v1549 = vpow.pop %v1548
        %v1550 = vmul.f32 %v1498, 1.442695
        %v1551 = vpow.pop %v1550
        %v1552 = vmul.f32 %v1499, 1.442695
        %v1553 = vpow.pop %v1552
        %v1554 = vmul.f32 %v1500, 1.442695
        %v1555 = vpow.pop %v1554
        %v1556 = vmul.f32 %v1501, 1.442695
        %v1557 = vpow.pop %v1556
        %v1558 = vmul.f32 %v1502, 1.442695
        %v1559 = vpow.pop %v1558
        %v1560 = vmul.f32 %v1503, 1.442695
        %v1561 = vpow.pop %v1560
        %v1562 = vmul.f32 %v1504, 1.442695
        %v1563 = vpow.pop %v1562
        %v1564 = vmul.f32 %v1505, 1.442695
        %v1565 = vpow.pop %v1564
        %v1566 = vmul.f32 %v1506, 1.442695
        %v1567 = vpow.pop %v1566
        %v1568 = vmul.f32 %v1507, 1.442695
        %v1569 = vpow.pop %v1568
        %v1570 = vmul.f32 %v1508, 1.442695
        %v1571 = vpow.pop %v1570
        %v1572 = vmul.f32 %v1509, 1.442695
        %v1573 = vpow.pop %v1572
        %1574 = vadd.xlane.f32.xlu0 %v1511
        %v1575 = vpop.xlane.xlu0 %1574
        %1576 = vadd.xlane.f32.xlu0 %v1513
        %v1577 = vpop.xlane.xlu0 %1576
        %1578 = vadd.xlane.f32.xlu0 %v1515
        %v1579 = vpop.xlane.xlu0 %1578
        %1580 = vadd.xlane.f32.xlu0 %v1517
        %v1581 = vpop.xlane.xlu0 %1580
        %1582 = vadd.xlane.f32.xlu0 %v1519
        %v1583 = vpop.xlane.xlu0 %1582
        %1584 = vadd.xlane.f32.xlu0 %v1521
        %v1585 = vpop.xlane.xlu0 %1584
        %1586 = vadd.xlane.f32.xlu0 %v1523
        %v1587 = vpop.xlane.xlu0 %1586
        %1588 = vadd.xlane.f32.xlu0 %v1525
        %v1589 = vpop.xlane.xlu0 %1588
        %1590 = vadd.xlane.f32.xlu0 %v1527
        %v1591 = vpop.xlane.xlu0 %1590
        %1592 = vadd.xlane.f32.xlu0 %v1529
        %v1593 = vpop.xlane.xlu0 %1592
        %1594 = vadd.xlane.f32.xlu0 %v1531
        %v1595 = vpop.xlane.xlu0 %1594
        %1596 = vadd.xlane.f32.xlu0 %v1533
        %v1597 = vpop.xlane.xlu0 %1596
        %1598 = vadd.xlane.f32.xlu0 %v1535
        %v1599 = vpop.xlane.xlu0 %1598
        %1600 = vadd.xlane.f32.xlu0 %v1537
        %v1601 = vpop.xlane.xlu0 %1600
        %1602 = vadd.xlane.f32.xlu0 %v1539
        %v1603 = vpop.xlane.xlu0 %1602
        %1604 = vadd.xlane.f32.xlu0 %v1541
        %v1605 = vpop.xlane.xlu0 %1604
        %1606 = vadd.xlane.f32.xlu0 %v1543
        %v1607 = vpop.xlane.xlu0 %1606
        %1608 = vadd.xlane.f32.xlu0 %v1545
        %v1609 = vpop.xlane.xlu0 %1608
        %1610 = vadd.xlane.f32.xlu0 %v1547
        %v1611 = vpop.xlane.xlu0 %1610
        %1612 = vadd.xlane.f32.xlu0 %v1549
        %v1613 = vpop.xlane.xlu0 %1612
        %1614 = vadd.xlane.f32.xlu0 %v1551
        %v1615 = vpop.xlane.xlu0 %1614
        %1616 = vadd.xlane.f32.xlu0 %v1553
        %v1617 = vpop.xlane.xlu0 %1616
        %1618 = vadd.xlane.f32.xlu0 %v1555
        %v1619 = vpop.xlane.xlu0 %1618
        %1620 = vadd.xlane.f32.xlu0 %v1557
        %v1621 = vpop.xlane.xlu0 %1620
        %1622 = vadd.xlane.f32.xlu0 %v1559
        %v1623 = vpop.xlane.xlu0 %1622
        %1624 = vadd.xlane.f32.xlu0 %v1561
        %v1625 = vpop.xlane.xlu0 %1624
        %1626 = vadd.xlane.f32.xlu0 %v1563
        %v1627 = vpop.xlane.xlu0 %1626
        %1628 = vadd.xlane.f32.xlu0 %v1565
        %v1629 = vpop.xlane.xlu0 %1628
        %1630 = vadd.xlane.f32.xlu0 %v1567
        %v1631 = vpop.xlane.xlu0 %1630
        %1632 = vadd.xlane.f32.xlu0 %v1569
        %v1633 = vpop.xlane.xlu0 %1632
        %1634 = vadd.xlane.f32.xlu0 %v1571
        %v1635 = vpop.xlane.xlu0 %1634
        %1636 = vadd.xlane.f32.xlu0 %v1573
        %v1637 = vpop.xlane.xlu0 %1636
        %v1638 = vlog2.pop %v1575
        %v1639 = vmul.f32 %v1638, 0.6931472
        %v1640 = vlog2.pop %v1577
        %v1641 = vmul.f32 %v1640, 0.6931472
        %v1642 = vlog2.pop %v1579
        %v1643 = vmul.f32 %v1642, 0.6931472
        %v1644 = vlog2.pop %v1581
        %v1645 = vmul.f32 %v1644, 0.6931472
        %v1646 = vlog2.pop %v1583
        %v1647 = vmul.f32 %v1646, 0.6931472
        %v1648 = vlog2.pop %v1585
        %v1649 = vmul.f32 %v1648, 0.6931472
        %v1650 = vlog2.pop %v1587
        %v1651 = vmul.f32 %v1650, 0.6931472
        %v1652 = vlog2.pop %v1589
        %v1653 = vmul.f32 %v1652, 0.6931472
        %v1654 = vlog2.pop %v1591
        %v1655 = vmul.f32 %v1654, 0.6931472
        %v1656 = vlog2.pop %v1593
        %v1657 = vmul.f32 %v1656, 0.6931472
        %v1658 = vlog2.pop %v1595
        %v1659 = vmul.f32 %v1658, 0.6931472
        %v1660 = vlog2.pop %v1597
        %v1661 = vmul.f32 %v1660, 0.6931472
        %v1662 = vlog2.pop %v1599
        %v1663 = vmul.f32 %v1662, 0.6931472
        %v1664 = vlog2.pop %v1601
        %v1665 = vmul.f32 %v1664, 0.6931472
        %v1666 = vlog2.pop %v1603
        %v1667 = vmul.f32 %v1666, 0.6931472
        %v1668 = vlog2.pop %v1605
        %v1669 = vmul.f32 %v1668, 0.6931472
        %v1670 = vlog2.pop %v1607
        %v1671 = vmul.f32 %v1670, 0.6931472
        %v1672 = vlog2.pop %v1609
        %v1673 = vmul.f32 %v1672, 0.6931472
        %v1674 = vlog2.pop %v1611
        %v1675 = vmul.f32 %v1674, 0.6931472
        %v1676 = vlog2.pop %v1613
        %v1677 = vmul.f32 %v1676, 0.6931472
        %v1678 = vlog2.pop %v1615
        %v1679 = vmul.f32 %v1678, 0.6931472
        %v1680 = vlog2.pop %v1617
        %v1681 = vmul.f32 %v1680, 0.6931472
        %v1682 = vlog2.pop %v1619
        %v1683 = vmul.f32 %v1682, 0.6931472
        %v1684 = vlog2.pop %v1621
        %v1685 = vmul.f32 %v1684, 0.6931472
        %v1686 = vlog2.pop %v1623
        %v1687 = vmul.f32 %v1686, 0.6931472
        %v1688 = vlog2.pop %v1625
        %v1689 = vmul.f32 %v1688, 0.6931472
        %v1690 = vlog2.pop %v1627
        %v1691 = vmul.f32 %v1690, 0.6931472
        %v1692 = vlog2.pop %v1629
        %v1693 = vmul.f32 %v1692, 0.6931472
        %v1694 = vlog2.pop %v1631
        %v1695 = vmul.f32 %v1694, 0.6931472
        %v1696 = vlog2.pop %v1633
        %v1697 = vmul.f32 %v1696, 0.6931472
        %v1698 = vlog2.pop %v1635
        %v1699 = vmul.f32 %v1698, 0.6931472
        %v1700 = vlog2.pop %v1637
        %v1701 = vmul.f32 %v1700, 0.6931472
        %v1702 = vadd.f32 %v1415, %v1639
        %v1703 = vadd.f32 %v1417, %v1641
        %v1704 = vadd.f32 %v1419, %v1643
        %v1705 = vadd.f32 %v1421, %v1645
        %v1706 = vadd.f32 %v1423, %v1647
        %v1707 = vadd.f32 %v1425, %v1649
        %v1708 = vadd.f32 %v1427, %v1651
        %v1709 = vadd.f32 %v1429, %v1653
        %v1710 = vadd.f32 %v1431, %v1655
        %v1711 = vadd.f32 %v1433, %v1657
        %v1712 = vadd.f32 %v1435, %v1659
        %v1713 = vadd.f32 %v1437, %v1661
        %v1714 = vadd.f32 %v1439, %v1663
        %v1715 = vadd.f32 %v1441, %v1665
        %v1716 = vadd.f32 %v1443, %v1667
        %v1717 = vadd.f32 %v1445, %v1669
        %v1718 = vadd.f32 %v1447, %v1671
        %v1719 = vadd.f32 %v1449, %v1673
        %v1720 = vadd.f32 %v1451, %v1675
        %v1721 = vadd.f32 %v1453, %v1677
        %v1722 = vadd.f32 %v1455, %v1679
        %v1723 = vadd.f32 %v1457, %v1681
        %v1724 = vadd.f32 %v1459, %v1683
        %v1725 = vadd.f32 %v1461, %v1685
        %v1726 = vadd.f32 %v1463, %v1687
        %v1727 = vadd.f32 %v1465, %v1689
        %v1728 = vadd.f32 %v1467, %v1691
        %v1729 = vadd.f32 %v1469, %v1693
        %v1730 = vadd.f32 %v1471, %v1695
        %v1731 = vadd.f32 %v1473, %v1697
        %v1732 = vadd.f32 %v1475, %v1699
        %v1733 = vadd.f32 %v1477, %v1701
        %v1734 = vsub.f32 %v1347, %v1702
        %v1735 = vsub.f32 %v1348, %v1703
        %v1736 = vsub.f32 %v1349, %v1704
        %v1737 = vsub.f32 %v1350, %v1705
        %v1738 = vsub.f32 %v1351, %v1706
        %v1739 = vsub.f32 %v1352, %v1707
        %v1740 = vsub.f32 %v1353, %v1708
        %v1741 = vsub.f32 %v1354, %v1709
        %v1742 = vsub.f32 %v1355, %v1710
        %v1743 = vsub.f32 %v1356, %v1711
        %v1744 = vsub.f32 %v1357, %v1712
        %v1745 = vsub.f32 %v1358, %v1713
        %v1746 = vsub.f32 %v1359, %v1714
        %v1747 = vsub.f32 %v1360, %v1715
        %v1748 = vsub.f32 %v1361, %v1716
        %v1749 = vsub.f32 %v1362, %v1717
        %v1750 = vsub.f32 %v1363, %v1718
        %v1751 = vsub.f32 %v1364, %v1719
        %v1752 = vsub.f32 %v1365, %v1720
        %v1753 = vsub.f32 %v1366, %v1721
        %v1754 = vsub.f32 %v1367, %v1722
        %v1755 = vsub.f32 %v1368, %v1723
        %v1756 = vsub.f32 %v1369, %v1724
        %v1757 = vsub.f32 %v1370, %v1725
        %v1758 = vsub.f32 %v1371, %v1726
        %v1759 = vsub.f32 %v1372, %v1727
        %v1760 = vsub.f32 %v1373, %v1728
        %v1761 = vsub.f32 %v1374, %v1729
        %v1762 = vsub.f32 %v1375, %v1730
        %v1763 = vsub.f32 %v1376, %v1731
        %v1764 = vsub.f32 %v1377, %v1732
        %v1765 = vsub.f32 %v1378, %v1733
        %v1766 = vsel %vm1381, %v1734, 0.0
        %v1767 = vsel %vm1381, %v1735, 0.0
        %v1768 = vsel %vm1381, %v1736, 0.0
        %v1769 = vsel %vm1381, %v1737, 0.0
        %v1770 = vsel %vm1381, %v1738, 0.0
        %v1771 = vsel %vm1381, %v1739, 0.0
        %v1772 = vsel %vm1381, %v1740, 0.0
        %v1773 = vsel %vm1381, %v1741, 0.0
        %v1774 = vsel %vm1381, %v1742, 0.0
        %v1775 = vsel %vm1381, %v1743, 0.0
        %v1776 = vsel %vm1381, %v1744, 0.0
        %v1777 = vsel %vm1381, %v1745, 0.0
        %v1778 = vsel %vm1381, %v1746, 0.0
        %v1779 = vsel %vm1381, %v1747, 0.0
        %v1780 = vsel %vm1381, %v1748, 0.0
        %v1781 = vsel %vm1381, %v1749, 0.0
        %v1782 = vsel %vm1381, %v1750, 0.0
        %v1783 = vsel %vm1381, %v1751, 0.0
        %v1784 = vsel %vm1381, %v1752, 0.0
        %v1785 = vsel %vm1381, %v1753, 0.0
        %v1786 = vsel %vm1381, %v1754, 0.0
        %v1787 = vsel %vm1381, %v1755, 0.0
        %v1788 = vsel %vm1381, %v1756, 0.0
        %v1789 = vsel %vm1381, %v1757, 0.0
        %v1790 = vsel %vm1381, %v1758, 0.0
        %v1791 = vsel %vm1381, %v1759, 0.0
        %v1792 = vsel %vm1381, %v1760, 0.0
        %v1793 = vsel %vm1381, %v1761, 0.0
        %v1794 = vsel %vm1381, %v1762, 0.0
        %v1795 = vsel %vm1381, %v1763, 0.0
        %v1796 = vsel %vm1381, %v1764, 0.0
        %v1797 = vsel %vm1381, %v1765, 0.0
        %1798 = vst [vmem:[%s203] sm:$0xff] %v1766
        %1799 = vst [vmem:[%s203 + $0x8] sm:$0xff] %v1767
        %1800 = vst [vmem:[%s203 + $0x10] sm:$0xff] %v1768
        %1801 = vst [vmem:[%s203 + $0x18] sm:$0xff] %v1769
        %1802 = vst [vmem:[%s203 + $0x20] sm:$0xff] %v1770
        %1803 = vst [vmem:[%s203 + $0x28] sm:$0xff] %v1771
        %1804 = vst [vmem:[%s203 + $0x30] sm:$0xff] %v1772
        %1805 = vst [vmem:[%s203 + $0x38] sm:$0xff] %v1773
        %1806 = vst [vmem:[%s203 + $0x40] sm:$0xff] %v1774
        %1807 = vst [vmem:[%s203 + $0x48] sm:$0xff] %v1775
        %1808 = vst [vmem:[%s203 + $0x50] sm:$0xff] %v1776
        %1809 = vst [vmem:[%s203 + $0x58] sm:$0xff] %v1777
        %1810 = vst [vmem:[%s203 + $0x60] sm:$0xff] %v1778
        %1811 = vst [vmem:[%s203 + $0x68] sm:$0xff] %v1779
        %1812 = vst [vmem:[%s203 + $0x70] sm:$0xff] %v1780
        %1813 = vst [vmem:[%s203 + $0x78] sm:$0xff] %v1781
        %1814 = vst [vmem:[%s203 + $0x80] sm:$0xff] %v1782
        %1815 = vst [vmem:[%s203 + $0x88] sm:$0xff] %v1783
        %1816 = vst [vmem:[%s203 + $0x90] sm:$0xff] %v1784
        %1817 = vst [vmem:[%s203 + $0x98] sm:$0xff] %v1785
        %1818 = vst [vmem:[%s203 + $0xa0] sm:$0xff] %v1786
        %1819 = vst [vmem:[%s203 + $0xa8] sm:$0xff] %v1787
        %1820 = vst [vmem:[%s203 + $0xb0] sm:$0xff] %v1788
        %1821 = vst [vmem:[%s203 + $0xb8] sm:$0xff] %v1789
        %1822 = vst [vmem:[%s203 + $0xc0] sm:$0xff] %v1790
        %1823 = vst [vmem:[%s203 + $0xc8] sm:$0xff] %v1791
        %1824 = vst [vmem:[%s203 + $0xd0] sm:$0xff] %v1792
        %1825 = vst [vmem:[%s203 + $0xd8] sm:$0xff] %v1793
        %1826 = vst [vmem:[%s203 + $0xe0] sm:$0xff] %v1794
        %1827 = vst [vmem:[%s203 + $0xe8] sm:$0xff] %v1795
        %1828 = vst [vmem:[%s203 + $0xf0] sm:$0xff] %v1796
        %1829 = vst [vmem:[%s203 + $0xf8] sm:$0xff] %v1797
      $region40: #{gcn_forward.7} parent=31 // pred_fallthru
        _
      %s1830 = smul.u32 32, %s18
      %p1831 = scmp.lt.s32.totalorder %s1830, 63
      %s1832 = scalar_select %p1831, %s1830, 63
      %s1833 = smul.addr %s1832, 8
      %s1834 = scalar_lea.vmem %s3, %s1833
      // Predicated region
      $region41: #{gcn_forward.7} parent=31 // pred_check
        %p1835 = pneg %p114
      $region42: #{gcn_forward.7} parent=31 // pred_check_branch
        %1837 = sbr.rel (%p1835) target = $region44
      $region43: #{gcn_forward.7} parent=31 // pred_region
        %s1838 = smul.u32 32, %s18
      $region44: #{gcn_forward.7} parent=31 // pred_fallthru
        _
    $region32: #{gcn_forward.7} parent=5 // pred_fallthru
      _
    %p1839 = scmp.le.s32.totalorder 2, %s9
    // Predicated region
    $region45: #{gcn_forward.7} parent=5 // pred_check
      %p1840 = pneg %p1839
    $region46: #{gcn_forward.7} parent=5 // pred_check_branch
      %1842 = sbr.rel (%p1840) target = $region48
    $region47: #{gcn_forward.7} parent=5 // pred_region
      %s1843 = ssub.s32 %s9, 2
      // Predicated region
      $region49: #{gcn_forward.7} parent=47 // pred_check
        %p1844 = pneg %p120
      $region50: #{gcn_forward.7} parent=47 // pred_check_branch
        %1846 = sbr.rel (%p1844) target = $region52
      $region51: #{gcn_forward.7} parent=47 // pred_region
        %s1847 = smul.u32 32, %s20
        %p1848 = scmp.lt.s32.totalorder %s1847, 63
        %s1849 = scalar_select %p1848, %s1847, 63
        %s1850 = smul.addr %s1849, 8
        %s1851 = scalar_lea.vmem %s3, %s1850
      $region52: #{gcn_forward.7} parent=47 // pred_fallthru
        _
    $region48: #{gcn_forward.7} parent=5 // pred_fallthru
      _
  $region6: #{gcn_forward.7} parent=0 // loop_footer
    %s13 = sadd.s32 1, %s9
  $region7: #{gcn_forward.7} parent=0 // loop_footer_branch
    %8 = sbr.rel target = $region3
  $region8: #{gcn_forward.7} parent=0 // loop_exit
    _

</llo_original>
